<compile_context>
chip_gen: v7x
topology: tpu7x:2x2x1
jax: 0.10.0
libtpu: 0.0.40
codegen_flags: <defaults>
</compile_context>

<pallas_src>
import numpy as np

import jax
import jax.numpy as jnp
from jax import lax
from jax.experimental import pallas as pl
from jax.experimental.pallas import tpu as pltpu


# ------------------------------- fused kernel --------------------------------

def _net1_kernel(lhs1_ref, r1_ref, b1p_ref, r2_ref, b2p_ref,
                 w1q_ref, b1f_ref, w2f_ref, b2f_ref, o_ref, p1_ref):
    """One batch block (bb images) of the whole Net1 forward pass.

    lhs1_ref : (1, 12*bb, 168) bf16  conv1 LHS; row (r*6+t)*bb + b holds input rows
                                     2h..2h+5 (h = 2t+r) of image b, flattened.
    r1_ref   : (168, 512) bf16       lowered conv1 weights; col = corner*128 + pw*10+c
    b1p_ref  : (1, 128)  f32         conv1 bias tiled over the 12 W positions
    r2_ref   : (6, 128, 512) bf16    lowered conv2 weights per window-row offset a
    b2p_ref  : (1, 128)  f32         conv2 bias tiled over the 4 W positions
    w1q_ref  : (4, 128, 128) bf16    fc1 weights (BN folded) split by output row q
    b1f_ref  : (1, 128)  f32         fc1 bias (BN folded), padded 50 -> 128
    w2f_ref  : (128, 128) bf16       fc2 weights, padded (50,10) -> (128,128)
    b2f_ref  : (1, 128)  f32         fc2 bias, padded 10 -> 128
    o_ref    : (1, bb, 128) f32      softmax output (first 10 lanes real)
    p1_ref   : (12*bb, 128) bf16     scratch: |pool(conv1)| rows (r*6+t)*bb + b
    """
    f32 = jnp.float32
    bb = o_ref.shape[1]

    # ---- stage 1: conv1 (1->10, 5x5) + 2x2 maxpool + |.| : one MXU matmul --------
    y1 = jnp.dot(lhs1_ref[0], r1_ref[...], preferred_element_type=f32)   # (12*bb, 512)
    m1 = jnp.maximum(jnp.maximum(y1[:, 0:128], y1[:, 128:256]),
                     jnp.maximum(y1[:, 256:384], y1[:, 384:512]))        # max over corners
    # bias commutes with max; relu(x)+relu(-x) == |x|
    p1_ref[...] = jnp.abs(m1 + b1p_ref[...]).astype(jnp.bfloat16)

    # ---- stage 2: conv2 (10->20, 5x5) + 2x2 maxpool + relu : 6 matmuls -----------
    acc2 = None
    for a in range(6):                                   # pooled1 window-row offset
        base = ((a % 2) * 6 + a // 2) * bb               # contiguous, aligned slice
        lhs = p1_ref[pl.ds(base, 4 * bb), :]             # (4*bb, 128), rows = (q, b)
        y = jnp.dot(lhs, r2_ref[a], preferred_element_type=f32)          # (4*bb, 512)
        acc2 = y if acc2 is None else acc2 + y
    m2 = jnp.maximum(jnp.maximum(acc2[:, 0:128], acc2[:, 128:256]),
                     jnp.maximum(acc2[:, 256:384], acc2[:, 384:512]))
    pooled2 = jnp.maximum(m2 + b2p_ref[...], 0.0)                        # (4*bb, 128)

    # ---- stage 3: fc1 (+BN folded) + relu : 4 accumulating matmuls over q --------
    h = None
    for q in range(4):
        xq = pooled2[q * bb:(q + 1) * bb, :].astype(jnp.bfloat16)        # (bb, 128)
        y = jnp.dot(xq, w1q_ref[q], preferred_element_type=f32)
        h = y if h is None else h + y
    h = jnp.maximum(h + b1f_ref[...], 0.0).astype(jnp.bfloat16)          # (bb, 128)

    # ---- stage 4: fc2 + softmax (exact division) ---------------------------------
    z = jnp.dot(h, w2f_ref[...], preferred_element_type=f32) + b2f_ref[...]
    lane = lax.broadcasted_iota(jnp.int32, z.shape, 1)
    z = jnp.where(lane < 10, z, -1e30)                   # mask pad lanes
    z = z - jnp.max(z, axis=-1, keepdims=True)
    e = jnp.exp(z)
    o_ref[0] = e / jnp.sum(e, axis=-1, keepdims=True)


def _net1_pallas(lhs1, prep, block_b):
    G = lhs1.shape[0]
    return pl.pallas_call(
        _net1_kernel,
        out_shape=jax.ShapeDtypeStruct((G, block_b, 128), jnp.float32),
        grid_spec=pltpu.PrefetchScalarGridSpec(
            num_scalar_prefetch=0,
            grid=(G,),
            in_specs=[
                pl.BlockSpec((1, 12 * block_b, 168), lambda g: (g, 0, 0)),
                pl.BlockSpec((168, 512), lambda g: (0, 0)),
                pl.BlockSpec((1, 128), lambda g: (0, 0)),
                pl.BlockSpec((6, 128, 512), lambda g: (0, 0, 0)),
                pl.BlockSpec((1, 128), lambda g: (0, 0)),
                pl.BlockSpec((4, 128, 128), lambda g: (0, 0, 0)),
                pl.BlockSpec((1, 128), lambda g: (0, 0)),
                pl.BlockSpec((128, 128), lambda g: (0, 0)),
                pl.BlockSpec((1, 128), lambda g: (0, 0)),
            ],
            out_specs=pl.BlockSpec((1, block_b, 128), lambda g: (g, 0, 0)),
            scratch_shapes=[pltpu.VMEM((12 * block_b, 128), jnp.bfloat16)],
        ),
        compiler_params=pltpu.CompilerParams(
            dimension_semantics=("parallel",)),
    )(lhs1, prep["r1"], prep["b1p"], prep["r2"], prep["b2p"],
      prep["w1q"], prep["b1f"], prep["w2f"], prep["b2f"])


# --------------------------------- forward ------------------------------------

def net1_forward(prep, x_nchw, block_b=32):
    """x_nchw: (B, 1, 28, 28). Returns softmax probabilities (B, 10)."""
    B = x_nchw.shape[0]
    G = -(-B // block_b)
    Bp = G * block_b
    x2 = x_nchw[:, 0, :, :].astype(jnp.bfloat16)              # (B, 28, 28)
    if Bp != B:
        x2 = jnp.pad(x2, ((0, Bp - B), (0, 0), (0, 0)))
    # conv1 LHS: for pooled row h = 2t+r the 6 input rows 2h..2h+5 flattened (168
    # lanes); M ordered (r, t, b) so the kernel's conv2 stage slices pooled1 for free.
    wins = []
    for r in range(2):
        for t in range(6):
            h0 = 4 * t + 2 * r
            wins.append(x2[:, h0:h0 + 6, :].reshape(Bp, 168))
    lhs1 = jnp.stack(wins, axis=0)                            # (12, Bp, 168)
    lhs1 = lhs1.reshape(12, G, block_b, 168).transpose(1, 0, 2, 3)
    lhs1 = lhs1.reshape(G, 12 * block_b, 168)

    out = _net1_pallas(lhs1, prep, block_b)                   # (G, block_b, 128)
    return out.reshape(Bp, 128)[:B, :10]


# ------------------------------ parameter prep --------------------------------

def init_params(key):
    ks = jax.random.split(key, 10)

    def u(k, shape, fan_in):
        bound = 1.0 / float(fan_in) ** 0.5
        return jax.random.uniform(k, shape, jnp.float32, -bound, bound)

    return {
        "conv1_w": u(ks[0], (10, 1, 5, 5), 1 * 5 * 5),
        "conv1_b": u(ks[1], (10,), 1 * 5 * 5),
        "conv2_w": u(ks[2], (20, 10, 5, 5), 10 * 5 * 5),
        "conv2_b": u(ks[3], (20,), 10 * 5 * 5),
        "fc1_w": u(ks[4], (50, 320), 320),
        "fc1_b": u(ks[5], (50,), 320),
        "fc2_w": u(ks[6], (10, 50), 50),
        "fc2_b": u(ks[7], (10,), 50),
        "bn_gamma": jnp.ones((20,), jnp.float32),
        "bn_beta": jnp.zeros((20,), jnp.float32),
        "bn_mean": 0.1 * jax.random.normal(ks[8], (20,), jnp.float32),
        "bn_var": 1.0 + 0.1 * jax.random.uniform(ks[9], (20,), jnp.float32),
    }


def prepare_params(params, eps=1e-5):
    """Host-side, one-time: lowered block-Toeplitz conv matrices (taps + pool corners
    folded into K/N, lane-padded to 128 multiples), BN folded exactly into fc1."""
    w1 = np.asarray(params["conv1_w"], np.float32)            # (10, 1, 5, 5)
    b1 = np.asarray(params["conv1_b"], np.float32)
    w2 = np.asarray(params["conv2_w"], np.float32)            # (20, 10, 5, 5)
    b2 = np.asarray(params["conv2_b"], np.float32)

    # conv1: r1[a*28+xw, (di*2+dj)*128 + pw*10 + c] = w1[c, 0, a-di, xw-(2*pw+dj)]
    r1 = np.zeros((168, 512), np.float32)
    for di in range(2):
        for dj in range(2):
            col0 = (di * 2 + dj) * 128
            for i in range(5):
                a = di + i
                for j in range(5):
                    for pw in range(12):
                        xw = 2 * pw + dj + j
                        r1[a * 28 + xw, col0 + pw * 10: col0 + pw * 10 + 10] = w1[:, 0, i, j]
    b1p = np.zeros((1, 128), np.float32)
    for pw in range(12):
        b1p[0, pw * 10:(pw + 1) * 10] = b1

    # conv2: r2[a][pw*10+ci, (di*2+dj)*128 + qw*20 + co] = w2[co, ci, a-di, pw-(2*qw+dj)]
    r2 = np.zeros((6, 128, 512), np.float32)
    for a in range(6):
        for di in range(2):
            i = a - di
            if not 0 <= i <= 4:
                continue
            for dj in range(2):
                col0 = (di * 2 + dj) * 128
                for j in range(5):
                    for qw in range(4):
                        pw = 2 * qw + dj + j
                        r2[a, pw * 10:(pw + 1) * 10,
                           col0 + qw * 20: col0 + qw * 20 + 20] = w2[:, :, i, j].T
    b2p = np.zeros((1, 128), np.float32)
    for qw in range(4):
        b2p[0, qw * 20:(qw + 1) * 20] = b2

    # Inference BatchNorm folded exactly into fc1 (BN follows relu/maxpool).
    gamma = np.asarray(params["bn_gamma"], np.float32)
    beta = np.asarray(params["bn_beta"], np.float32)
    mean = np.asarray(params["bn_mean"], np.float32)
    var = np.asarray(params["bn_var"], np.float32)
    scale = gamma / np.sqrt(var + eps)
    shift = beta - mean * scale

    fc1_w = np.asarray(params["fc1_w"], np.float32)           # (50, 320), k=c*16+h*4+w
    fc1_b = np.asarray(params["fc1_b"], np.float32)
    wc = fc1_w.reshape(50, 20, 4, 4)                          # (n, c, h, w)
    b1f = np.zeros((1, 128), np.float32)
    b1f[0, :50] = fc1_b + np.einsum("nchw,c->n", wc, shift)
    wcs = wc * scale[None, :, None, None]
    w1q = np.zeros((4, 128, 128), np.float32)                 # rows = qw*20+co, cols = n
    for q in range(4):
        for qw in range(4):
            for co in range(20):
                w1q[q, qw * 20 + co, :50] = wcs[:, co, q, qw]

    fc2_w = np.asarray(params["fc2_w"], np.float32)           # (10, 50)
    fc2_b = np.asarray(params["fc2_b"], np.float32)
    w2f = np.zeros((128, 128), np.float32)
    w2f[:50, :10] = fc2_w.T
    b2f = np.zeros((1, 128), np.float32)
    b2f[0, :10] = fc2_b

    return {
        "r1": jnp.asarray(r1, jnp.bfloat16), "b1p": jnp.asarray(b1p),
        "r2": jnp.asarray(r2, jnp.bfloat16), "b2p": jnp.asarray(b2p),
        "w1q": jnp.asarray(w1q, jnp.bfloat16), "b1f": jnp.asarray(b1f),
        "w2f": jnp.asarray(w2f, jnp.bfloat16), "b2f": jnp.asarray(b2f),
    }


# ------------------------- pure-JAX f32 reference ------------------------------

def net1_reference(params, x, eps=1e-5):
    B = x.shape[0]
    dn = ("NCHW", "OIHW", "NCHW")
    y = lax.conv_general_dilated(x, params["conv1_w"], (1, 1), "VALID",
                                 dimension_numbers=dn)
    y = y + params["conv1_b"][None, :, None, None]            # (B,10,24,24)
    y = y.reshape(B, 10, 12, 2, 12, 2).max(axis=(3, 5))       # maxpool 2
    y = jnp.abs(y)                                            # relu(x)+relu(-x)
    y = lax.conv_general_dilated(y, params["conv2_w"], (1, 1), "VALID",
                                 dimension_numbers=dn)
    y = y + params["conv2_b"][None, :, None, None]            # (B,20,8,8)
    y = y.reshape(B, 20, 4, 2, 4, 2).max(axis=(3, 5))
    y = jnp.maximum(y, 0.0)                                   # (B,20,4,4)
    scale = params["bn_gamma"] / jnp.sqrt(params["bn_var"] + eps)
    shift = params["bn_beta"] - params["bn_mean"] * scale
    y = y * scale[None, :, None, None] + shift[None, :, None, None]
    y = y.reshape(B, 320)
    h = jnp.maximum(y @ params["fc1_w"].T + params["fc1_b"], 0.0)
    z = h @ params["fc2_w"].T + params["fc2_b"]
    return jax.nn.softmax(z, axis=1)


# ----------------------------------- main --------------------------------------

if __name__ == "__main__":
    key = jax.random.PRNGKey(0)
    pkey, xkey = jax.random.split(key)
    params = init_params(pkey)
    prep = prepare_params(params)

    # 28x28 input is required by the hard-coded view(-1, 320) (20*4*4 = 320).
    x = jax.random.normal(xkey, (2, 1, 28, 28), jnp.float32)
    out = jax.jit(net1_forward)(prep, x)
    out = jax.block_until_ready(out)

    assert out.shape == (2, 10) and out.dtype == jnp.float32
    row_sums = jnp.sum(out, axis=1)
    assert bool(jnp.all(jnp.abs(row_sums - 1.0) < 1e-3))
    assert bool(jnp.all(out >= 0.0))
    ref = net1_reference(params, x)
    err = float(jnp.max(jnp.abs(out - ref)))
    assert err < 5e-2, f"mismatch vs f32 reference: {err}"

    # exercise a multi-step grid (G=3) with batch padding
    x_big = jax.random.normal(jax.random.PRNGKey(7), (70, 1, 28, 28), jnp.float32)
    out_big = jax.block_until_ready(jax.jit(net1_forward)(prep, x_big))
    err_big = float(jnp.max(jnp.abs(out_big - net1_reference(params, x_big))))
    assert out_big.shape == (70, 10) and err_big < 5e-2, f"mismatch: {err_big}"

    print("KERNEL_OK")
</pallas_src>

<mosaic_0001>
module attributes {stable_mosaic.version = 11 : i64} {
  func.func @_net1_kernel(%arg0: i32, %arg1: memref<1x384x168xbf16, #tpu.memory_space<vmem>>, %arg2: memref<168x512xbf16, #tpu.memory_space<vmem>>, %arg3: memref<1x128xf32, #tpu.memory_space<vmem>>, %arg4: memref<6x128x512xbf16, #tpu.memory_space<vmem>>, %arg5: memref<1x128xf32, #tpu.memory_space<vmem>>, %arg6: memref<4x128x128xbf16, #tpu.memory_space<vmem>>, %arg7: memref<1x128xf32, #tpu.memory_space<vmem>>, %arg8: memref<128x128xbf16, #tpu.memory_space<vmem>>, %arg9: memref<1x128xf32, #tpu.memory_space<vmem>>, %arg10: memref<1x32x128xf32, #tpu.memory_space<vmem>>, %arg11: memref<384x128xbf16, #tpu.memory_space<vmem>>) attributes {dimension_semantics = [#tpu.dimension_semantics<parallel>], iteration_bounds = array<i64: 1>, scalar_prefetch = 0 : i64, scratch_operands = 1 : i64, tpu.core_type = #tpu.core_type<tc>, window_params = [{transform_indices = @transform_0, window_bounds = array<i64: 1, 384, 168>}, {pipeline_mode = #tpu.pipeline_mode<synchronous>, transform_indices = @transform_1, window_bounds = array<i64: 168, 512>}, {pipeline_mode = #tpu.pipeline_mode<synchronous>, transform_indices = @transform_2, window_bounds = array<i64: 1, 128>}, {pipeline_mode = #tpu.pipeline_mode<synchronous>, transform_indices = @transform_3, window_bounds = array<i64: 6, 128, 512>}, {pipeline_mode = #tpu.pipeline_mode<synchronous>, transform_indices = @transform_4, window_bounds = array<i64: 1, 128>}, {pipeline_mode = #tpu.pipeline_mode<synchronous>, transform_indices = @transform_5, window_bounds = array<i64: 4, 128, 128>}, {pipeline_mode = #tpu.pipeline_mode<synchronous>, transform_indices = @transform_6, window_bounds = array<i64: 1, 128>}, {pipeline_mode = #tpu.pipeline_mode<synchronous>, transform_indices = @transform_7, window_bounds = array<i64: 128, 128>}, {pipeline_mode = #tpu.pipeline_mode<synchronous>, transform_indices = @transform_8, window_bounds = array<i64: 1, 128>}, {transform_indices = @transform_9, window_bounds = array<i64: 1, 32, 128>}]} {
    %c0 = arith.constant 0 : index
    %c0_0 = arith.constant 0 : index
    %c0_1 = arith.constant 0 : index
    %0 = vector.load %arg1[%c0, %c0_0, %c0_1] : memref<1x384x168xbf16, #tpu.memory_space<vmem>>, vector<1x384x168xbf16>
    %1 = vector.shape_cast %0 : vector<1x384x168xbf16> to vector<384x168xbf16>
    %c0_2 = arith.constant 0 : index
    %c0_3 = arith.constant 0 : index
    %2 = vector.load %arg2[%c0_2, %c0_3] : memref<168x512xbf16, #tpu.memory_space<vmem>>, vector<168x512xbf16>
    %cst = arith.constant dense<0.000000e+00> : vector<384x512xf32>
    %3 = tpu.matmul %1, %2, %cst {dimension_numbers = #tpu.dot_dimension_numbers<[1], [0], [0], [1], [0, 0, 1, 1], [], []>} : vector<384x168xbf16>, vector<168x512xbf16>, vector<384x512xf32> -> vector<384x512xf32>
    %4 = vector.extract_strided_slice %3 {offsets = [0, 0], sizes = [384, 128], strides = [1, 1]} : vector<384x512xf32> to vector<384x128xf32>
    %5 = vector.extract_strided_slice %3 {offsets = [0, 128], sizes = [384, 128], strides = [1, 1]} : vector<384x512xf32> to vector<384x128xf32>
    %6 = arith.maximumf %4, %5 : vector<384x128xf32>
    %7 = vector.extract_strided_slice %3 {offsets = [0, 256], sizes = [384, 128], strides = [1, 1]} : vector<384x512xf32> to vector<384x128xf32>
    %8 = vector.extract_strided_slice %3 {offsets = [0, 384], sizes = [384, 128], strides = [1, 1]} : vector<384x512xf32> to vector<384x128xf32>
    %9 = arith.maximumf %7, %8 : vector<384x128xf32>
    %10 = arith.maximumf %6, %9 : vector<384x128xf32>
    %c0_4 = arith.constant 0 : index
    %c0_5 = arith.constant 0 : index
    %11 = vector.load %arg3[%c0_4, %c0_5] : memref<1x128xf32, #tpu.memory_space<vmem>>, vector<1x128xf32>
    %12 = vector.broadcast %11 : vector<1x128xf32> to vector<384x128xf32>
    %13 = arith.addf %10, %12 : vector<384x128xf32>
    %14 = math.absf %13 : vector<384x128xf32>
    %15 = arith.truncf %14 : vector<384x128xf32> to vector<384x128xbf16>
    %c0_6 = arith.constant 0 : index
    %c0_7 = arith.constant 0 : index
    %16 = vector.load %arg11[%c0_6, %c0_7] : memref<384x128xbf16, #tpu.memory_space<vmem>>, vector<384x128xbf16>
    tpu.vector_store %arg11[%c0_6, %c0_7], %15 {strides = array<i32>} : memref<384x128xbf16, #tpu.memory_space<vmem>>, vector<384x128xbf16>,
    %c0_8 = arith.constant 0 : index
    %c0_9 = arith.constant 0 : index
    %17 = vector.load %arg11[%c0_8, %c0_9] : memref<384x128xbf16, #tpu.memory_space<vmem>>, vector<128x128xbf16>
    %c0_10 = arith.constant 0 : index
    %c0_11 = arith.constant 0 : index
    %c0_12 = arith.constant 0 : index
    %18 = vector.load %arg4[%c0_10, %c0_11, %c0_12] : memref<6x128x512xbf16, #tpu.memory_space<vmem>>, vector<1x128x512xbf16>
    %19 = vector.shape_cast %18 : vector<1x128x512xbf16> to vector<128x512xbf16>
    %cst_13 = arith.constant dense<0.000000e+00> : vector<128x512xf32>
    %20 = tpu.matmul %17, %19, %cst_13 {dimension_numbers = #tpu.dot_dimension_numbers<[1], [0], [0], [1], [0, 0, 1, 1], [], []>} : vector<128x128xbf16>, vector<128x512xbf16>, vector<128x512xf32> -> vector<128x512xf32>
    %c192 = arith.constant 192 : index
    %c0_14 = arith.constant 0 : index
    %21 = vector.load %arg11[%c192, %c0_14] : memref<384x128xbf16, #tpu.memory_space<vmem>>, vector<128x128xbf16>
    %c1 = arith.constant 1 : index
    %c0_15 = arith.constant 0 : index
    %c0_16 = arith.constant 0 : index
    %22 = vector.load %arg4[%c1, %c0_15, %c0_16] : memref<6x128x512xbf16, #tpu.memory_space<vmem>>, vector<1x128x512xbf16>
    %23 = vector.shape_cast %22 : vector<1x128x512xbf16> to vector<128x512xbf16>
    %cst_17 = arith.constant dense<0.000000e+00> : vector<128x512xf32>
    %24 = tpu.matmul %21, %23, %cst_17 {dimension_numbers = #tpu.dot_dimension_numbers<[1], [0], [0], [1], [0, 0, 1, 1], [], []>} : vector<128x128xbf16>, vector<128x512xbf16>, vector<128x512xf32> -> vector<128x512xf32>
    %25 = arith.addf %20, %24 : vector<128x512xf32>
    %c32 = arith.constant 32 : index
    %c0_18 = arith.constant 0 : index
    %26 = vector.load %arg11[%c32, %c0_18] : memref<384x128xbf16, #tpu.memory_space<vmem>>, vector<128x128xbf16>
    %c2 = arith.constant 2 : index
    %c0_19 = arith.constant 0 : index
    %c0_20 = arith.constant 0 : index
    %27 = vector.load %arg4[%c2, %c0_19, %c0_20] : memref<6x128x512xbf16, #tpu.memory_space<vmem>>, vector<1x128x512xbf16>
    %28 = vector.shape_cast %27 : vector<1x128x512xbf16> to vector<128x512xbf16>
    %cst_21 = arith.constant dense<0.000000e+00> : vector<128x512xf32>
    %29 = tpu.matmul %26, %28, %cst_21 {dimension_numbers = #tpu.dot_dimension_numbers<[1], [0], [0], [1], [0, 0, 1, 1], [], []>} : vector<128x128xbf16>, vector<128x512xbf16>, vector<128x512xf32> -> vector<128x512xf32>
    %30 = arith.addf %25, %29 : vector<128x512xf32>
    %c224 = arith.constant 224 : index
    %c0_22 = arith.constant 0 : index
    %31 = vector.load %arg11[%c224, %c0_22] : memref<384x128xbf16, #tpu.memory_space<vmem>>, vector<128x128xbf16>
    %c3 = arith.constant 3 : index
    %c0_23 = arith.constant 0 : index
    %c0_24 = arith.constant 0 : index
    %32 = vector.load %arg4[%c3, %c0_23, %c0_24] : memref<6x128x512xbf16, #tpu.memory_space<vmem>>, vector<1x128x512xbf16>
    %33 = vector.shape_cast %32 : vector<1x128x512xbf16> to vector<128x512xbf16>
    %cst_25 = arith.constant dense<0.000000e+00> : vector<128x512xf32>
    %34 = tpu.matmul %31, %33, %cst_25 {dimension_numbers = #tpu.dot_dimension_numbers<[1], [0], [0], [1], [0, 0, 1, 1], [], []>} : vector<128x128xbf16>, vector<128x512xbf16>, vector<128x512xf32> -> vector<128x512xf32>
    %35 = arith.addf %30, %34 : vector<128x512xf32>
    %c64 = arith.constant 64 : index
    %c0_26 = arith.constant 0 : index
    %36 = vector.load %arg11[%c64, %c0_26] : memref<384x128xbf16, #tpu.memory_space<vmem>>, vector<128x128xbf16>
    %c4 = arith.constant 4 : index
    %c0_27 = arith.constant 0 : index
    %c0_28 = arith.constant 0 : index
    %37 = vector.load %arg4[%c4, %c0_27, %c0_28] : memref<6x128x512xbf16, #tpu.memory_space<vmem>>, vector<1x128x512xbf16>
    %38 = vector.shape_cast %37 : vector<1x128x512xbf16> to vector<128x512xbf16>
    %cst_29 = arith.constant dense<0.000000e+00> : vector<128x512xf32>
    %39 = tpu.matmul %36, %38, %cst_29 {dimension_numbers = #tpu.dot_dimension_numbers<[1], [0], [0], [1], [0, 0, 1, 1], [], []>} : vector<128x128xbf16>, vector<128x512xbf16>, vector<128x512xf32> -> vector<128x512xf32>
    %40 = arith.addf %35, %39 : vector<128x512xf32>
    %c256 = arith.constant 256 : index
    %c0_30 = arith.constant 0 : index
    %41 = vector.load %arg11[%c256, %c0_30] : memref<384x128xbf16, #tpu.memory_space<vmem>>, vector<128x128xbf16>
    %c5 = arith.constant 5 : index
    %c0_31 = arith.constant 0 : index
    %c0_32 = arith.constant 0 : index
    %42 = vector.load %arg4[%c5, %c0_31, %c0_32] : memref<6x128x512xbf16, #tpu.memory_space<vmem>>, vector<1x128x512xbf16>
    %43 = vector.shape_cast %42 : vector<1x128x512xbf16> to vector<128x512xbf16>
    %cst_33 = arith.constant dense<0.000000e+00> : vector<128x512xf32>
    %44 = tpu.matmul %41, %43, %cst_33 {dimension_numbers = #tpu.dot_dimension_numbers<[1], [0], [0], [1], [0, 0, 1, 1], [], []>} : vector<128x128xbf16>, vector<128x512xbf16>, vector<128x512xf32> -> vector<128x512xf32>
    %45 = arith.addf %40, %44 : vector<128x512xf32>
    %46 = vector.extract_strided_slice %45 {offsets = [0, 0], sizes = [128, 128], strides = [1, 1]} : vector<128x512xf32> to vector<128x128xf32>
    %47 = vector.extract_strided_slice %45 {offsets = [0, 128], sizes = [128, 128], strides = [1, 1]} : vector<128x512xf32> to vector<128x128xf32>
    %48 = arith.maximumf %46, %47 : vector<128x128xf32>
    %49 = vector.extract_strided_slice %45 {offsets = [0, 256], sizes = [128, 128], strides = [1, 1]} : vector<128x512xf32> to vector<128x128xf32>
    %50 = vector.extract_strided_slice %45 {offsets = [0, 384], sizes = [128, 128], strides = [1, 1]} : vector<128x512xf32> to vector<128x128xf32>
    %51 = arith.maximumf %49, %50 : vector<128x128xf32>
    %52 = arith.maximumf %48, %51 : vector<128x128xf32>
    %c0_34 = arith.constant 0 : index
    %c0_35 = arith.constant 0 : index
    %53 = vector.load %arg5[%c0_34, %c0_35] : memref<1x128xf32, #tpu.memory_space<vmem>>, vector<1x128xf32>
    %54 = vector.broadcast %53 : vector<1x128xf32> to vector<128x128xf32>
    %55 = arith.addf %52, %54 : vector<128x128xf32>
    %cst_36 = arith.constant 0.000000e+00 : f32
    %56 = vector.broadcast %cst_36 : f32 to vector<128x128xf32>
    %57 = arith.maximumf %55, %56 : vector<128x128xf32>
    %58 = vector.extract_strided_slice %57 {offsets = [0, 0], sizes = [32, 128], strides = [1, 1]} : vector<128x128xf32> to vector<32x128xf32>
    %59 = arith.truncf %58 : vector<32x128xf32> to vector<32x128xbf16>
    %c0_37 = arith.constant 0 : index
    %c0_38 = arith.constant 0 : index
    %c0_39 = arith.constant 0 : index
    %60 = vector.load %arg6[%c0_37, %c0_38, %c0_39] : memref<4x128x128xbf16, #tpu.memory_space<vmem>>, vector<1x128x128xbf16>
    %61 = vector.shape_cast %60 : vector<1x128x128xbf16> to vector<128x128xbf16>
    %cst_40 = arith.constant dense<0.000000e+00> : vector<32x128xf32>
    %62 = tpu.matmul %59, %61, %cst_40 {dimension_numbers = #tpu.dot_dimension_numbers<[1], [0], [0], [1], [0, 0, 1, 1], [], []>} : vector<32x128xbf16>, vector<128x128xbf16>, vector<32x128xf32> -> vector<32x128xf32>
    %63 = vector.extract_strided_slice %57 {offsets = [32, 0], sizes = [32, 128], strides = [1, 1]} : vector<128x128xf32> to vector<32x128xf32>
    %64 = arith.truncf %63 : vector<32x128xf32> to vector<32x128xbf16>
    %c1_41 = arith.constant 1 : index
    %c0_42 = arith.constant 0 : index
    %c0_43 = arith.constant 0 : index
    %65 = vector.load %arg6[%c1_41, %c0_42, %c0_43] : memref<4x128x128xbf16, #tpu.memory_space<vmem>>, vector<1x128x128xbf16>
    %66 = vector.shape_cast %65 : vector<1x128x128xbf16> to vector<128x128xbf16>
    %cst_44 = arith.constant dense<0.000000e+00> : vector<32x128xf32>
    %67 = tpu.matmul %64, %66, %cst_44 {dimension_numbers = #tpu.dot_dimension_numbers<[1], [0], [0], [1], [0, 0, 1, 1], [], []>} : vector<32x128xbf16>, vector<128x128xbf16>, vector<32x128xf32> -> vector<32x128xf32>
    %68 = arith.addf %62, %67 : vector<32x128xf32>
    %69 = vector.extract_strided_slice %57 {offsets = [64, 0], sizes = [32, 128], strides = [1, 1]} : vector<128x128xf32> to vector<32x128xf32>
    %70 = arith.truncf %69 : vector<32x128xf32> to vector<32x128xbf16>
    %c2_45 = arith.constant 2 : index
    %c0_46 = arith.constant 0 : index
    %c0_47 = arith.constant 0 : index
    %71 = vector.load %arg6[%c2_45, %c0_46, %c0_47] : memref<4x128x128xbf16, #tpu.memory_space<vmem>>, vector<1x128x128xbf16>
    %72 = vector.shape_cast %71 : vector<1x128x128xbf16> to vector<128x128xbf16>
    %cst_48 = arith.constant dense<0.000000e+00> : vector<32x128xf32>
    %73 = tpu.matmul %70, %72, %cst_48 {dimension_numbers = #tpu.dot_dimension_numbers<[1], [0], [0], [1], [0, 0, 1, 1], [], []>} : vector<32x128xbf16>, vector<128x128xbf16>, vector<32x128xf32> -> vector<32x128xf32>
    %74 = arith.addf %68, %73 : vector<32x128xf32>
    %75 = vector.extract_strided_slice %57 {offsets = [96, 0], sizes = [32, 128], strides = [1, 1]} : vector<128x128xf32> to vector<32x128xf32>
    %76 = arith.truncf %75 : vector<32x128xf32> to vector<32x128xbf16>
    %c3_49 = arith.constant 3 : index
    %c0_50 = arith.constant 0 : index
    %c0_51 = arith.constant 0 : index
    %77 = vector.load %arg6[%c3_49, %c0_50, %c0_51] : memref<4x128x128xbf16, #tpu.memory_space<vmem>>, vector<1x128x128xbf16>
    %78 = vector.shape_cast %77 : vector<1x128x128xbf16> to vector<128x128xbf16>
    %cst_52 = arith.constant dense<0.000000e+00> : vector<32x128xf32>
    %79 = tpu.matmul %76, %78, %cst_52 {dimension_numbers = #tpu.dot_dimension_numbers<[1], [0], [0], [1], [0, 0, 1, 1], [], []>} : vector<32x128xbf16>, vector<128x128xbf16>, vector<32x128xf32> -> vector<32x128xf32>
    %80 = arith.addf %74, %79 : vector<32x128xf32>
    %c0_53 = arith.constant 0 : index
    %c0_54 = arith.constant 0 : index
    %81 = vector.load %arg7[%c0_53, %c0_54] : memref<1x128xf32, #tpu.memory_space<vmem>>, vector<1x128xf32>
    %82 = vector.broadcast %81 : vector<1x128xf32> to vector<32x128xf32>
    %83 = arith.addf %80, %82 : vector<32x128xf32>
    %cst_55 = arith.constant 0.000000e+00 : f32
    %84 = vector.broadcast %cst_55 : f32 to vector<32x128xf32>
    %85 = arith.maximumf %83, %84 : vector<32x128xf32>
    %86 = arith.truncf %85 : vector<32x128xf32> to vector<32x128xbf16>
    %c0_56 = arith.constant 0 : index
    %c0_57 = arith.constant 0 : index
    %87 = vector.load %arg8[%c0_56, %c0_57] : memref<128x128xbf16, #tpu.memory_space<vmem>>, vector<128x128xbf16>
    %cst_58 = arith.constant dense<0.000000e+00> : vector<32x128xf32>
    %88 = tpu.matmul %86, %87, %cst_58 {dimension_numbers = #tpu.dot_dimension_numbers<[1], [0], [0], [1], [0, 0, 1, 1], [], []>} : vector<32x128xbf16>, vector<128x128xbf16>, vector<32x128xf32> -> vector<32x128xf32>
    %c0_59 = arith.constant 0 : index
    %c0_60 = arith.constant 0 : index
    %89 = vector.load %arg9[%c0_59, %c0_60] : memref<1x128xf32, #tpu.memory_space<vmem>>, vector<1x128xf32>
    %90 = vector.broadcast %89 : vector<1x128xf32> to vector<32x128xf32>
    %91 = arith.addf %88, %90 : vector<32x128xf32>
    %92 = tpu.iota {dimensions = array<i32: 1>} : vector<32x128xi32>
    %c10_i32 = arith.constant 10 : i32
    %93 = vector.broadcast %c10_i32 : i32 to vector<32x128xi32>
    %94 = arith.cmpi slt, %92, %93 : vector<32x128xi32>
    %cst_61 = arith.constant -1.000000e+30 : f32
    %95 = vector.broadcast %cst_61 : f32 to vector<32x128xf32>
    %96 = arith.select %94, %91, %95 : vector<32x128xi1>, vector<32x128xf32>
    %cst_62 = arith.constant dense<0xFF800000> : vector<32xf32>
    %97 = vector.multi_reduction <maximumf>, %96, %cst_62 [1] : vector<32x128xf32> to vector<32xf32>
    %98 = vector.shape_cast %97 : vector<32xf32> to vector<32x1xf32>
    %99 = vector.broadcast %98 : vector<32x1xf32> to vector<32x128xf32>
    %100 = arith.subf %96, %99 : vector<32x128xf32>
    %101 = math.exp %100 : vector<32x128xf32>
    %cst_63 = arith.constant dense<0.000000e+00> : vector<32xf32>
    %102 = vector.multi_reduction <add>, %101, %cst_63 [1] : vector<32x128xf32> to vector<32xf32>
    %103 = vector.shape_cast %102 : vector<32xf32> to vector<32x1xf32>
    %104 = vector.broadcast %103 : vector<32x1xf32> to vector<32x128xf32>
    %105 = arith.divf %101, %104 : vector<32x128xf32>
    %c0_64 = arith.constant 0 : index
    %c0_65 = arith.constant 0 : index
    %c0_66 = arith.constant 0 : index
    %106 = vector.load %arg10[%c0_64, %c0_65, %c0_66] : memref<1x32x128xf32, #tpu.memory_space<vmem>>, vector<1x32x128xf32>
    %107 = vector.shape_cast %106 : vector<1x32x128xf32> to vector<32x128xf32>
    %108 = vector.shape_cast %105 : vector<32x128xf32> to vector<1x32x128xf32>
    tpu.vector_store %arg10[%c0_64, %c0_65, %c0_66], %108 {strides = array<i32>} : memref<1x32x128xf32, #tpu.memory_space<vmem>>, vector<1x32x128xf32>,
    return
  }
  func.func @transform_0(%arg0: i32) -> (i32, i32, i32) {
    %c0_i32 = arith.constant 0 : i32
    %c0_i32_0 = arith.constant 0 : i32
    %c0_i32_1 = arith.constant 0 : i32
    return %arg0, %c0_i32, %c0_i32_0 : i32, i32, i32
  }
  func.func @transform_1(%arg0: i32) -> (i32, i32) {
    %c0_i32 = arith.constant 0 : i32
    %c0_i32_0 = arith.constant 0 : i32
    %c0_i32_1 = arith.constant 0 : i32
    return %c0_i32, %c0_i32_0 : i32, i32
  }
  func.func @transform_2(%arg0: i32) -> (i32, i32) {
    %c0_i32 = arith.constant 0 : i32
    %c0_i32_0 = arith.constant 0 : i32
    %c0_i32_1 = arith.constant 0 : i32
    return %c0_i32, %c0_i32_0 : i32, i32
  }
  func.func @transform_3(%arg0: i32) -> (i32, i32, i32) {
    %c0_i32 = arith.constant 0 : i32
    %c0_i32_0 = arith.constant 0 : i32
    %c0_i32_1 = arith.constant 0 : i32
    %c0_i32_2 = arith.constant 0 : i32
    return %c0_i32, %c0_i32_0, %c0_i32_1 : i32, i32, i32
  }
  func.func @transform_4(%arg0: i32) -> (i32, i32) {
    %c0_i32 = arith.constant 0 : i32
    %c0_i32_0 = arith.constant 0 : i32
    %c0_i32_1 = arith.constant 0 : i32
    return %c0_i32, %c0_i32_0 : i32, i32
  }
  func.func @transform_5(%arg0: i32) -> (i32, i32, i32) {
    %c0_i32 = arith.constant 0 : i32
    %c0_i32_0 = arith.constant 0 : i32
    %c0_i32_1 = arith.constant 0 : i32
    %c0_i32_2 = arith.constant 0 : i32
    return %c0_i32, %c0_i32_0, %c0_i32_1 : i32, i32, i32
  }
  func.func @transform_6(%arg0: i32) -> (i32, i32) {
    %c0_i32 = arith.constant 0 : i32
    %c0_i32_0 = arith.constant 0 : i32
    %c0_i32_1 = arith.constant 0 : i32
    return %c0_i32, %c0_i32_0 : i32, i32
  }
  func.func @transform_7(%arg0: i32) -> (i32, i32) {
    %c0_i32 = arith.constant 0 : i32
    %c0_i32_0 = arith.constant 0 : i32
    %c0_i32_1 = arith.constant 0 : i32
    return %c0_i32, %c0_i32_0 : i32, i32
  }
  func.func @transform_8(%arg0: i32) -> (i32, i32) {
    %c0_i32 = arith.constant 0 : i32
    %c0_i32_0 = arith.constant 0 : i32
    %c0_i32_1 = arith.constant 0 : i32
    return %c0_i32, %c0_i32_0 : i32, i32
  }
  func.func @transform_9(%arg0: i32) -> (i32, i32, i32) {
    %c0_i32 = arith.constant 0 : i32
    %c0_i32_0 = arith.constant 0 : i32
    %c0_i32_1 = arith.constant 0 : i32
    return %arg0, %c0_i32, %c0_i32_0 : i32, i32, i32
  }
}

</mosaic_0001>

<llo_original>
// kernel: net1_forward.1
$region0: #{net1_forward.1}
  #allocation0 [shape = 'u32[]', space=smem, size = 0x4, offset = 0x4, fixed_abs, tag = 'smem constant byte address 0x4 - core index']
  #allocation1 [shape = 'u32[144,128]{1,0:T(1,128)}', space=vmem, size = 0x12000, scoped, tag = 'internal scratch']
  #allocation2 [shape = 'bf16[384,128]{1,0:T(16,128)(2,1)}', space=vmem, size = 0x18000, scoped, tag = 'scratch operand']
  %s0 = inlined_call_operand.vmem [shape: bf16[1,384,168], index: 0, kind: input, shape index: {}]
  %s1 = inlined_call_operand.vmem [shape: bf16[168,512], index: 1, kind: input, shape index: {}]
  %s2 = inlined_call_operand.vmem [shape: f32[1,128], index: 2, kind: input, shape index: {}]
  %s3 = inlined_call_operand.vmem [shape: bf16[6,128,512], index: 3, kind: input, shape index: {}]
  %s4 = inlined_call_operand.vmem [shape: f32[1,128], index: 4, kind: input, shape index: {}]
  %s5 = inlined_call_operand.vmem [shape: bf16[4,128,128], index: 5, kind: input, shape index: {}]
  %s6 = inlined_call_operand.vmem [shape: f32[1,128], index: 6, kind: input, shape index: {}]
  %s7 = inlined_call_operand.vmem [shape: bf16[128,128], index: 7, kind: input, shape index: {}]
  %s8 = inlined_call_operand.vmem [shape: f32[1,128], index: 8, kind: input, shape index: {}]
  %s9 = inlined_call_operand.vmem [shape: f32[1,32,128], index: 9, kind: output, shape index: {}]
  %s10 = sld [smem:[#allocation0]]
  $region46: #{net1_forward.1} parent=0
    _
  %s12 = ssub.s32 1, %s10
  %s13 = scalar_select 0, %s12, %s10
  // Predicated region
  $region2: #{net1_forward.1} parent=0 // pred_check
    _
  $region3: #{net1_forward.1} parent=0 // pred_check_branch
    %15 = sbr.rel (0) target = $region5
  $region4: #{net1_forward.1} parent=0 // pred_region
    _
  $region5: #{net1_forward.1} parent=0 // pred_fallthru
    _
  // Predicated region
  $region6: #{net1_forward.1} parent=0 // pred_check
    _
  $region7: #{net1_forward.1} parent=0 // pred_check_branch
    %17 = sbr.rel (0) target = $region9
  $region8: #{net1_forward.1} parent=0 // pred_region
    _
  $region9: #{net1_forward.1} parent=0 // pred_fallthru
    _
  // Predicated region
  $region10: #{net1_forward.1} parent=0 // pred_check
    _
  $region11: #{net1_forward.1} parent=0 // pred_check_branch
    %19 = sbr.rel (0) target = $region13
  $region12: #{net1_forward.1} parent=0 // pred_region
    _
  $region13: #{net1_forward.1} parent=0 // pred_fallthru
    _
  // Predicated region
  $region14: #{net1_forward.1} parent=0 // pred_check
    _
  $region15: #{net1_forward.1} parent=0 // pred_check_branch
    %21 = sbr.rel (0) target = $region17
  $region16: #{net1_forward.1} parent=0 // pred_region
    _
  $region17: #{net1_forward.1} parent=0 // pred_fallthru
    _
  // Predicated region
  $region18: #{net1_forward.1} parent=0 // pred_check
    _
  $region19: #{net1_forward.1} parent=0 // pred_check_branch
    %23 = sbr.rel (0) target = $region21
  $region20: #{net1_forward.1} parent=0 // pred_region
    _
  $region21: #{net1_forward.1} parent=0 // pred_fallthru
    _
  // Predicated region
  $region22: #{net1_forward.1} parent=0 // pred_check
    _
  $region23: #{net1_forward.1} parent=0 // pred_check_branch
    %25 = sbr.rel (0) target = $region25
  $region24: #{net1_forward.1} parent=0 // pred_region
    _
  $region25: #{net1_forward.1} parent=0 // pred_fallthru
    _
  // Predicated region
  $region26: #{net1_forward.1} parent=0 // pred_check
    _
  $region27: #{net1_forward.1} parent=0 // pred_check_branch
    %27 = sbr.rel (0) target = $region29
  $region28: #{net1_forward.1} parent=0 // pred_region
    _
  $region29: #{net1_forward.1} parent=0 // pred_fallthru
    _
  // Predicated region
  $region30: #{net1_forward.1} parent=0 // pred_check
    _
  $region31: #{net1_forward.1} parent=0 // pred_check_branch
    %29 = sbr.rel (0) target = $region33
  $region32: #{net1_forward.1} parent=0 // pred_region
    _
  $region33: #{net1_forward.1} parent=0 // pred_fallthru
    _
  // Predicated region
  $region34: #{net1_forward.1} parent=0 // pred_check
    _
  $region35: #{net1_forward.1} parent=0 // pred_check_branch
    %31 = sbr.rel (0) target = $region37
  $region36: #{net1_forward.1} parent=0 // pred_region
    _
  $region37: #{net1_forward.1} parent=0 // pred_fallthru
    _
  %v33 = vld [vmem:[%s0] sm:$0xff]
  %v34 = vld [vmem:[%s0 + $0x8] sm:$0xff]
  %v35 = vld [vmem:[%s0 + $0x10] sm:$0xff]
  %v36 = vld [vmem:[%s0 + $0x18] sm:$0xff]
  %v37 = vld [vmem:[%s0 + $0x20] sm:$0xff]
  %v38 = vld [vmem:[%s0 + $0x28] sm:$0xff]
  %v39 = vld [vmem:[%s0 + $0x30] sm:$0xff]
  %v40 = vld [vmem:[%s0 + $0x38] sm:$0xff]
  %v41 = vld [vmem:[%s0 + $0x40] sm:$0xff]
  %v42 = vld [vmem:[%s0 + $0x48] sm:$0xff]
  %v43 = vld [vmem:[%s0 + $0x50] sm:$0xff]
  %v44 = vld [vmem:[%s0 + $0x58] sm:$0xff]
  %v45 = vld [vmem:[%s0 + $0x60] sm:$0xff]
  %v46 = vld [vmem:[%s0 + $0x68] sm:$0xff]
  %v47 = vld [vmem:[%s0 + $0x70] sm:$0xff]
  %v48 = vld [vmem:[%s0 + $0x78] sm:$0xff]
  %v49 = vld [vmem:[%s0 + $0x80] sm:$0xff]
  %v50 = vld [vmem:[%s0 + $0x88] sm:$0xff]
  %v51 = vld [vmem:[%s0 + $0x90] sm:$0xff]
  %v52 = vld [vmem:[%s0 + $0x98] sm:$0xff]
  %v53 = vld [vmem:[%s0 + $0xa0] sm:$0xff]
  %v54 = vld [vmem:[%s0 + $0xa8] sm:$0xff]
  %v55 = vld [vmem:[%s0 + $0xb0] sm:$0xff]
  %v56 = vld [vmem:[%s0 + $0xb8] sm:$0xff]
  %v57 = vld [vmem:[%s0 + $0xc0] sm:$0xff]
  %v58 = vld [vmem:[%s0 + $0xc8] sm:$0xff]
  %v59 = vld [vmem:[%s0 + $0xd0] sm:$0xff]
  %v60 = vld [vmem:[%s0 + $0xd8] sm:$0xff]
  %v61 = vld [vmem:[%s0 + $0xe0] sm:$0xff]
  %v62 = vld [vmem:[%s0 + $0xe8] sm:$0xff]
  %v63 = vld [vmem:[%s0 + $0xf0] sm:$0xff]
  %v64 = vld [vmem:[%s0 + $0xf8] sm:$0xff]
  %v65 = vld [vmem:[%s0 + $0x100] sm:$0xff]
  %v66 = vld [vmem:[%s0 + $0x108] sm:$0xff]
  %v67 = vld [vmem:[%s0 + $0x110] sm:$0xff]
  %v68 = vld [vmem:[%s0 + $0x118] sm:$0xff]
  %v69 = vld [vmem:[%s0 + $0x120] sm:$0xff]
  %v70 = vld [vmem:[%s0 + $0x128] sm:$0xff]
  %v71 = vld [vmem:[%s0 + $0x130] sm:$0xff]
  %v72 = vld [vmem:[%s0 + $0x138] sm:$0xff]
  %v73 = vld [vmem:[%s0 + $0x140] sm:$0xff]
  %v74 = vld [vmem:[%s0 + $0x148] sm:$0xff]
  %v75 = vld [vmem:[%s0 + $0x150] sm:$0xff]
  %v76 = vld [vmem:[%s0 + $0x158] sm:$0xff]
  %v77 = vld [vmem:[%s0 + $0x160] sm:$0xff]
  %v78 = vld [vmem:[%s0 + $0x168] sm:$0xff]
  %v79 = vld [vmem:[%s0 + $0x170] sm:$0xff]
  %v80 = vld [vmem:[%s0 + $0x178] sm:$0xff]
  %v81 = vld [vmem:[%s1] sm:$0xff]
  %v82 = vld [vmem:[%s1 + $0x8] sm:$0xff]
  %v83 = vld [vmem:[%s1 + $0x10] sm:$0xff]
  %v84 = vld [vmem:[%s1 + $0x18] sm:$0xff]
  %v85 = vld [vmem:[%s1 + $0x20] sm:$0xff]
  %v86 = vld [vmem:[%s1 + $0x28] sm:$0xff]
  %v87 = vld [vmem:[%s1 + $0x30] sm:$0xff]
  %v88 = vld [vmem:[%s1 + $0x38] sm:$0xff]
  %v89 = vld [vmem:[%s1 + $0x40] sm:$0xff]
  %v90 = vld [vmem:[%s1 + $0x48] sm:$0xff]
  %v91 = vld [vmem:[%s1 + $0x50] sm:$0xff]
  %v92 = vld [vmem:[%s1 + $0x58] sm:$0xff]
  %v93 = vld [vmem:[%s1 + $0x60] sm:$0xff]
  %v94 = vld [vmem:[%s1 + $0x68] sm:$0xff]
  %v95 = vld [vmem:[%s1 + $0x70] sm:$0xff]
  %v96 = vld [vmem:[%s1 + $0x78] sm:$0xff]
  %v97 = vld [vmem:[%s1 + $0x80] sm:$0xff]
  %v98 = vld [vmem:[%s1 + $0x88] sm:$0xff]
  %v99 = vld [vmem:[%s1 + $0x90] sm:$0xff]
  %v100 = vld [vmem:[%s1 + $0x98] sm:$0xff]
  %v101 = vld [vmem:[%s1 + $0xa0] sm:$0xff]
  %v102 = vld [vmem:[%s1 + $0xa8] sm:$0xff]
  %v103 = vld [vmem:[%s1 + $0xb0] sm:$0xff]
  %v104 = vld [vmem:[%s1 + $0xb8] sm:$0xff]
  %v105 = vld [vmem:[%s1 + $0xc0] sm:$0xff]
  %v106 = vld [vmem:[%s1 + $0xc8] sm:$0xff]
  %v107 = vld [vmem:[%s1 + $0xd0] sm:$0xff]
  %v108 = vld [vmem:[%s1 + $0xd8] sm:$0xff]
  %v109 = vld [vmem:[%s1 + $0xe0] sm:$0xff]
  %v110 = vld [vmem:[%s1 + $0xe8] sm:$0xff]
  %v111 = vld [vmem:[%s1 + $0xf0] sm:$0xff]
  %v112 = vld [vmem:[%s1 + $0xf8] sm:$0xff]
  %v113 = vld [vmem:[%s1 + $0x100] sm:$0xff]
  %v114 = vld [vmem:[%s1 + $0x108] sm:$0xff]
  %v115 = vld [vmem:[%s1 + $0x110] sm:$0xff]
  %v116 = vld [vmem:[%s1 + $0x118] sm:$0xff]
  %v117 = vld [vmem:[%s1 + $0x120] sm:$0xff]
  %v118 = vld [vmem:[%s1 + $0x128] sm:$0xff]
  %v119 = vld [vmem:[%s1 + $0x130] sm:$0xff]
  %v120 = vld [vmem:[%s1 + $0x138] sm:$0xff]
  %v121 = vld [vmem:[%s1 + $0x140] sm:$0xff]
  %v122 = vld [vmem:[%s1 + $0x148] sm:$0xff]
  %v171 = vunpack.c.l.b16 %v33
  %v172 = vunpack.c.h.b16 %v33
  %v173 = vunpack.c.l.b16 %v34
  %v174 = vunpack.c.h.b16 %v34
  %v175 = vunpack.c.l.b16 %v35
  %v176 = vunpack.c.h.b16 %v35
  %v177 = vunpack.c.l.b16 %v36
  %v178 = vunpack.c.h.b16 %v36
  %v179 = vunpack.c.l.b16 %v37
  %v180 = vunpack.c.h.b16 %v37
  %v181 = vunpack.c.l.b16 %v38
  %v182 = vunpack.c.h.b16 %v38
  %v183 = vunpack.c.l.b16 %v39
  %v184 = vunpack.c.h.b16 %v39
  %v185 = vunpack.c.l.b16 %v40
  %v186 = vunpack.c.h.b16 %v40
  %v187 = vunpack.c.l.b16 %v41
  %v188 = vunpack.c.h.b16 %v41
  %v189 = vunpack.c.l.b16 %v42
  %v190 = vunpack.c.h.b16 %v42
  %v191 = vunpack.c.l.b16 %v43
  %v192 = vunpack.c.h.b16 %v43
  %v193 = vunpack.c.l.b16 %v44
  %v194 = vunpack.c.h.b16 %v44
  %v195 = vunpack.c.l.b16 %v45
  %v196 = vunpack.c.h.b16 %v45
  %v197 = vunpack.c.l.b16 %v46
  %v198 = vunpack.c.h.b16 %v46
  %v199 = vunpack.c.l.b16 %v47
  %v200 = vunpack.c.h.b16 %v47
  %v201 = vunpack.c.l.b16 %v48
  %v202 = vunpack.c.h.b16 %v48
  %v203 = vunpack.c.l.b16 %v49
  %v204 = vunpack.c.h.b16 %v49
  %v205 = vunpack.c.l.b16 %v50
  %v206 = vunpack.c.h.b16 %v50
  %v207 = vunpack.c.l.b16 %v51
  %v208 = vunpack.c.h.b16 %v51
  %v209 = vunpack.c.l.b16 %v52
  %v210 = vunpack.c.h.b16 %v52
  %v211 = vunpack.c.l.b16 %v53
  %v212 = vunpack.c.h.b16 %v53
  %v213 = vunpack.c.l.b16 %v54
  %v214 = vunpack.c.h.b16 %v54
  %v215 = vunpack.c.l.b16 %v55
  %v216 = vunpack.c.h.b16 %v55
  %v217 = vunpack.c.l.b16 %v56
  %v218 = vunpack.c.h.b16 %v56
  %v219 = vunpack.c.l.b16 %v57
  %v220 = vunpack.c.h.b16 %v57
  %v221 = vunpack.c.l.b16 %v58
  %v222 = vunpack.c.h.b16 %v58
  %v223 = vunpack.c.l.b16 %v59
  %v224 = vunpack.c.h.b16 %v59
  %v225 = vunpack.c.l.b16 %v60
  %v226 = vunpack.c.h.b16 %v60
  %v227 = vunpack.c.l.b16 %v61
  %v228 = vunpack.c.h.b16 %v61
  %v229 = vunpack.c.l.b16 %v62
  %v230 = vunpack.c.h.b16 %v62
  %v231 = vunpack.c.l.b16 %v63
  %v232 = vunpack.c.h.b16 %v63
  %v233 = vunpack.c.l.b16 %v64
  %v234 = vunpack.c.h.b16 %v64
  %v235 = vunpack.c.l.b16 %v65
  %v236 = vunpack.c.h.b16 %v65
  %v237 = vunpack.c.l.b16 %v66
  %v238 = vunpack.c.h.b16 %v66
  %v239 = vunpack.c.l.b16 %v67
  %v240 = vunpack.c.h.b16 %v67
  %v241 = vunpack.c.l.b16 %v68
  %v242 = vunpack.c.h.b16 %v68
  %v243 = vunpack.c.l.b16 %v69
  %v244 = vunpack.c.h.b16 %v69
  %v245 = vunpack.c.l.b16 %v70
  %v246 = vunpack.c.h.b16 %v70
  %v247 = vunpack.c.l.b16 %v71
  %v248 = vunpack.c.h.b16 %v71
  %v249 = vunpack.c.l.b16 %v72
  %v250 = vunpack.c.h.b16 %v72
  %v251 = vunpack.c.l.b16 %v73
  %v252 = vunpack.c.h.b16 %v73
  %v253 = vunpack.c.l.b16 %v74
  %v254 = vunpack.c.h.b16 %v74
  %v255 = vunpack.c.l.b16 %v75
  %v256 = vunpack.c.h.b16 %v75
  %v257 = vunpack.c.l.b16 %v76
  %v258 = vunpack.c.h.b16 %v76
  %v259 = vunpack.c.l.b16 %v77
  %v260 = vunpack.c.h.b16 %v77
  %v261 = vunpack.c.l.b16 %v78
  %v262 = vunpack.c.h.b16 %v78
  %v263 = vunpack.c.l.b16 %v79
  %v264 = vunpack.c.h.b16 %v79
  %v265 = vunpack.c.l.b16 %v80
  %v266 = vunpack.c.h.b16 %v80
  %v267 = vpack.c.b16 %v173, %v171
  %v268 = vpack.c.b16 %v174, %v172
  %v269 = vpack.c.b16 %v177, %v175
  %v270 = vpack.c.b16 %v178, %v176
  %v271 = vpack.c.b16 %v181, %v179
  %v272 = vpack.c.b16 %v182, %v180
  %v273 = vpack.c.b16 %v185, %v183
  %v274 = vpack.c.b16 %v186, %v184
  %v275 = vpack.c.b16 %v189, %v187
  %v276 = vpack.c.b16 %v190, %v188
  %v277 = vpack.c.b16 %v193, %v191
  %v278 = vpack.c.b16 %v194, %v192
  %v279 = vpack.c.b16 %v197, %v195
  %v280 = vpack.c.b16 %v198, %v196
  %v281 = vpack.c.b16 %v201, %v199
  %v282 = vpack.c.b16 %v202, %v200
  %v283 = vpack.c.b16 %v205, %v203
  %v284 = vpack.c.b16 %v206, %v204
  %v285 = vpack.c.b16 %v209, %v207
  %v286 = vpack.c.b16 %v210, %v208
  %v287 = vpack.c.b16 %v213, %v211
  %v288 = vpack.c.b16 %v214, %v212
  %v289 = vpack.c.b16 %v217, %v215
  %v290 = vpack.c.b16 %v218, %v216
  %v291 = vpack.c.b16 %v221, %v219
  %v292 = vpack.c.b16 %v222, %v220
  %v293 = vpack.c.b16 %v225, %v223
  %v294 = vpack.c.b16 %v226, %v224
  %v295 = vpack.c.b16 %v229, %v227
  %v296 = vpack.c.b16 %v230, %v228
  %v297 = vpack.c.b16 %v233, %v231
  %v298 = vpack.c.b16 %v234, %v232
  %v299 = vpack.c.b16 %v237, %v235
  %v300 = vpack.c.b16 %v238, %v236
  %v301 = vpack.c.b16 %v241, %v239
  %v302 = vpack.c.b16 %v242, %v240
  %v303 = vpack.c.b16 %v245, %v243
  %v304 = vpack.c.b16 %v246, %v244
  %v305 = vpack.c.b16 %v249, %v247
  %v306 = vpack.c.b16 %v250, %v248
  %v307 = vpack.c.b16 %v253, %v251
  %v308 = vpack.c.b16 %v254, %v252
  %v309 = vpack.c.b16 %v257, %v255
  %v310 = vpack.c.b16 %v258, %v256
  %v311 = vpack.c.b16 %v261, %v259
  %v312 = vpack.c.b16 %v262, %v260
  %v313 = vpack.c.b16 %v265, %v263
  %v314 = vpack.c.b16 %v266, %v264
  %v381 = vunpack.c.l.b16 %v81
  %v382 = vunpack.c.h.b16 %v81
  %v383 = vunpack.c.l.b16 %v82
  %v384 = vunpack.c.h.b16 %v82
  %v385 = vunpack.c.l.b16 %v83
  %v386 = vunpack.c.h.b16 %v83
  %v387 = vunpack.c.l.b16 %v84
  %v388 = vunpack.c.h.b16 %v84
  %v389 = vunpack.c.l.b16 %v85
  %v390 = vunpack.c.h.b16 %v85
  %v391 = vunpack.c.l.b16 %v86
  %v392 = vunpack.c.h.b16 %v86
  %v393 = vunpack.c.l.b16 %v87
  %v394 = vunpack.c.h.b16 %v87
  %v395 = vunpack.c.l.b16 %v88
  %v396 = vunpack.c.h.b16 %v88
  %v397 = vunpack.c.l.b16 %v89
  %v398 = vunpack.c.h.b16 %v89
  %v399 = vunpack.c.l.b16 %v90
  %v400 = vunpack.c.h.b16 %v90
  %v401 = vunpack.c.l.b16 %v91
  %v402 = vunpack.c.h.b16 %v91
  %v403 = vunpack.c.l.b16 %v92
  %v404 = vunpack.c.h.b16 %v92
  %v405 = vunpack.c.l.b16 %v93
  %v406 = vunpack.c.h.b16 %v93
  %v407 = vunpack.c.l.b16 %v94
  %v408 = vunpack.c.h.b16 %v94
  %v409 = vunpack.c.l.b16 %v95
  %v410 = vunpack.c.h.b16 %v95
  %v411 = vunpack.c.l.b16 %v96
  %v412 = vunpack.c.h.b16 %v96
  %v413 = vunpack.c.l.b16 %v97
  %v414 = vunpack.c.h.b16 %v97
  %v415 = vunpack.c.l.b16 %v98
  %v416 = vunpack.c.h.b16 %v98
  %v417 = vunpack.c.l.b16 %v99
  %v418 = vunpack.c.h.b16 %v99
  %v419 = vunpack.c.l.b16 %v100
  %v420 = vunpack.c.h.b16 %v100
  %v421 = vunpack.c.l.b16 %v101
  %v422 = vunpack.c.h.b16 %v101
  %v423 = vunpack.c.l.b16 %v102
  %v424 = vunpack.c.h.b16 %v102
  %v425 = vunpack.c.l.b16 %v103
  %v426 = vunpack.c.h.b16 %v103
  %v427 = vunpack.c.l.b16 %v104
  %v428 = vunpack.c.h.b16 %v104
  %v429 = vunpack.c.l.b16 %v105
  %v430 = vunpack.c.h.b16 %v105
  %v431 = vunpack.c.l.b16 %v106
  %v432 = vunpack.c.h.b16 %v106
  %v433 = vunpack.c.l.b16 %v107
  %v434 = vunpack.c.h.b16 %v107
  %v435 = vunpack.c.l.b16 %v108
  %v436 = vunpack.c.h.b16 %v108
  %v437 = vunpack.c.l.b16 %v109
  %v438 = vunpack.c.h.b16 %v109
  %v439 = vunpack.c.l.b16 %v110
  %v440 = vunpack.c.h.b16 %v110
  %v441 = vunpack.c.l.b16 %v111
  %v442 = vunpack.c.h.b16 %v111
  %v443 = vunpack.c.l.b16 %v112
  %v444 = vunpack.c.h.b16 %v112
  %v445 = vunpack.c.l.b16 %v113
  %v446 = vunpack.c.h.b16 %v113
  %v447 = vunpack.c.l.b16 %v114
  %v448 = vunpack.c.h.b16 %v114
  %v449 = vunpack.c.l.b16 %v115
  %v450 = vunpack.c.h.b16 %v115
  %v451 = vunpack.c.l.b16 %v116
  %v452 = vunpack.c.h.b16 %v116
  %v453 = vunpack.c.l.b16 %v117
  %v454 = vunpack.c.h.b16 %v117
  %v455 = vunpack.c.l.b16 %v118
  %v456 = vunpack.c.h.b16 %v118
  %v457 = vunpack.c.l.b16 %v119
  %v458 = vunpack.c.h.b16 %v119
  %v459 = vunpack.c.l.b16 %v120
  %v460 = vunpack.c.h.b16 %v120
  %v461 = vunpack.c.l.b16 %v121
  %v462 = vunpack.c.h.b16 %v121
  %v463 = vunpack.c.l.b16 %v122
  %v464 = vunpack.c.h.b16 %v122
  %v465 = vpack.c.b16 %v385, %v381
  %v466 = vpack.c.b16 %v386, %v382
  %v467 = vpack.c.b16 %v387, %v383
  %v468 = vpack.c.b16 %v388, %v384
  %v469 = vpack.c.b16 %v393, %v389
  %v470 = vpack.c.b16 %v394, %v390
  %v471 = vpack.c.b16 %v395, %v391
  %v472 = vpack.c.b16 %v396, %v392
  %v473 = vpack.c.b16 %v401, %v397
  %v474 = vpack.c.b16 %v402, %v398
  %v475 = vpack.c.b16 %v403, %v399
  %v476 = vpack.c.b16 %v404, %v400
  %v477 = vpack.c.b16 %v409, %v405
  %v478 = vpack.c.b16 %v410, %v406
  %v479 = vpack.c.b16 %v411, %v407
  %v480 = vpack.c.b16 %v412, %v408
  %v481 = vpack.c.b16 %v417, %v413
  %v482 = vpack.c.b16 %v418, %v414
  %v483 = vpack.c.b16 %v419, %v415
  %v484 = vpack.c.b16 %v420, %v416
  %v485 = vpack.c.b16 %v425, %v421
  %v486 = vpack.c.b16 %v426, %v422
  %v487 = vpack.c.b16 %v427, %v423
  %v488 = vpack.c.b16 %v428, %v424
  %v489 = vpack.c.b16 %v433, %v429
  %v490 = vpack.c.b16 %v434, %v430
  %v491 = vpack.c.b16 %v435, %v431
  %v492 = vpack.c.b16 %v436, %v432
  %v493 = vpack.c.b16 %v441, %v437
  %v494 = vpack.c.b16 %v442, %v438
  %v495 = vpack.c.b16 %v443, %v439
  %v496 = vpack.c.b16 %v444, %v440
  %v497 = vpack.c.b16 %v449, %v445
  %v498 = vpack.c.b16 %v450, %v446
  %v499 = vpack.c.b16 %v451, %v447
  %v500 = vpack.c.b16 %v452, %v448
  %v501 = vpack.c.b16 %v457, %v453
  %v502 = vpack.c.b16 %v458, %v454
  %v503 = vpack.c.b16 %v459, %v455
  %v504 = vpack.c.b16 %v460, %v456
  %v505 = vpack.c.b16 %v461, %v461
  %v506 = vpack.c.b16 %v462, %v462
  %v507 = vpack.c.b16 %v463, %v463
  %v508 = vpack.c.b16 %v464, %v464
  %vm549 = vcmask 326656
  %v551 = vsel %vm549, %v268, 0
  %v554 = vsel %vm549, %v270, 0
  %v557 = vsel %vm549, %v272, 0
  %v560 = vsel %vm549, %v274, 0
  %v563 = vsel %vm549, %v276, 0
  %v566 = vsel %vm549, %v278, 0
  %v569 = vsel %vm549, %v280, 0
  %v572 = vsel %vm549, %v282, 0
  %v575 = vsel %vm549, %v284, 0
  %v578 = vsel %vm549, %v286, 0
  %v581 = vsel %vm549, %v288, 0
  %v584 = vsel %vm549, %v290, 0
  %v587 = vsel %vm549, %v292, 0
  %v590 = vsel %vm549, %v294, 0
  %v593 = vsel %vm549, %v296, 0
  %v596 = vsel %vm549, %v298, 0
  %v599 = vsel %vm549, %v300, 0
  %v602 = vsel %vm549, %v302, 0
  %v605 = vsel %vm549, %v304, 0
  %v608 = vsel %vm549, %v306, 0
  %v611 = vsel %vm549, %v308, 0
  %v614 = vsel %vm549, %v310, 0
  %v617 = vsel %vm549, %v312, 0
  %v620 = vsel %vm549, %v314, 0
  %vm622 = vcmask 1043456
  %v624 = vsel %vm622, %v505, 0
  %v627 = vsel %vm622, %v506, 0
  %v630 = vsel %vm622, %v507, 0
  %v633 = vsel %vm622, %v508, 0
  %635 = vmatprep.subr.bf16.mxu0 %v466
  %636 = vmatpush1.bf16.msra.mxu0 %v465
  %637 = vmatprep.subr.bf16.mxu0 %v470
  %638 = vmatpush1.bf16.msra.mxu0 %v469
  %639 = vmatprep.subr.bf16.mxu0 %v474
  %640 = vmatpush1.bf16.msra.mxu0 %v473
  %641 = vmatprep.subr.bf16.mxu0 %v478
  %642 = vmatpush1.bf16.msra.mxu0 %v477
  %643 = vmatprep.subr.bf16.mxu0 %v482
  %644 = vmatpush1.bf16.msra.mxu0 %v481
  %645 = vmatprep.subr.bf16.mxu0 %v486
  %646 = vmatpush1.bf16.msra.mxu0 %v485
  %647 = vmatprep.subr.bf16.mxu0 %v490
  %648 = vmatpush1.bf16.msra.mxu0 %v489
  %649 = vmatprep.subr.bf16.mxu0 %v494
  %650 = vmatpush1.bf16.msra.mxu0 %v493
  %651 = vmatprep.subr.bf16.mxu0 %v498
  %652 = vmatpush1.bf16.msra.mxu0 %v497
  %653 = vmatprep.subr.bf16.mxu0 %v502
  %654 = vmatpush1.bf16.msra.mxu0 %v501
  %655 = vmatprep.subr.bf16.mxu0 %v627
  %656 = vmatpush1.bf16.msra.mxu0 %v624
  %657 = vmatprep.subr.bf16.mxu0 0
  %658 = vmatpush1.bf16.msra.mxu0 0
  %659 = vmatprep.subr.bf16.mxu0 0
  %660 = vmatpush1.bf16.msra.mxu0 0
  %661 = vmatprep.subr.bf16.mxu0 0
  %662 = vmatpush1.bf16.msra.mxu0 0
  %663 = vmatprep.subr.bf16.mxu0 0
  %664 = vmatpush1.bf16.msra.mxu0 0
  %665 = vmatprep.subr.bf16.mxu0 0
  %666 = vmatpush1.bf16.msra.mxu0 0
  %667 = vmatprep.mubr.bf16.mxu0 %v551
  %668 = vmatmul.mubr.bf16.gmra.mrb[0].mxu0 %v267
  %v669 = vpop.f32.mrb[0].mxu0
  %v670 = vadd.f32 0.0, %v669
  %v671 = vpop.f32.mrb[0].mxu0
  %v672 = vadd.f32 0.0, %v671
  %v673 = vpop.f32.mrb[0].mxu0
  %v674 = vadd.f32 0.0, %v673
  %v675 = vpop.f32.mrb[0].mxu0
  %v676 = vadd.f32 0.0, %v675
  %677 = vmatprep.mubr.bf16.mxu0 %v554
  %678 = vmatmul.mubr.bf16.gmra.mrb[0].mxu0 %v269
  %v679 = vpop.f32.mrb[0].mxu0
  %v680 = vadd.f32 0.0, %v679
  %v681 = vpop.f32.mrb[0].mxu0
  %v682 = vadd.f32 0.0, %v681
  %v683 = vpop.f32.mrb[0].mxu0
  %v684 = vadd.f32 0.0, %v683
  %v685 = vpop.f32.mrb[0].mxu0
  %v686 = vadd.f32 0.0, %v685
  %687 = vmatprep.mubr.bf16.mxu0 %v557
  %688 = vmatmul.mubr.bf16.gmra.mrb[0].mxu0 %v271
  %v689 = vpop.f32.mrb[0].mxu0
  %v690 = vadd.f32 0.0, %v689
  %v691 = vpop.f32.mrb[0].mxu0
  %v692 = vadd.f32 0.0, %v691
  %v693 = vpop.f32.mrb[0].mxu0
  %v694 = vadd.f32 0.0, %v693
  %v695 = vpop.f32.mrb[0].mxu0
  %v696 = vadd.f32 0.0, %v695
  %697 = vmatprep.mubr.bf16.mxu0 %v560
  %698 = vmatmul.mubr.bf16.gmra.mrb[0].mxu0 %v273
  %v699 = vpop.f32.mrb[0].mxu0
  %v700 = vadd.f32 0.0, %v699
  %v701 = vpop.f32.mrb[0].mxu0
  %v702 = vadd.f32 0.0, %v701
  %v703 = vpop.f32.mrb[0].mxu0
  %v704 = vadd.f32 0.0, %v703
  %v705 = vpop.f32.mrb[0].mxu0
  %v706 = vadd.f32 0.0, %v705
  %707 = vmatprep.mubr.bf16.mxu0 %v563
  %708 = vmatmul.mubr.bf16.gmra.mrb[0].mxu0 %v275
  %v709 = vpop.f32.mrb[0].mxu0
  %v710 = vadd.f32 0.0, %v709
  %v711 = vpop.f32.mrb[0].mxu0
  %v712 = vadd.f32 0.0, %v711
  %v713 = vpop.f32.mrb[0].mxu0
  %v714 = vadd.f32 0.0, %v713
  %v715 = vpop.f32.mrb[0].mxu0
  %v716 = vadd.f32 0.0, %v715
  %717 = vmatprep.mubr.bf16.mxu0 %v566
  %718 = vmatmul.mubr.bf16.gmra.mrb[0].mxu0 %v277
  %v719 = vpop.f32.mrb[0].mxu0
  %v720 = vadd.f32 0.0, %v719
  %v721 = vpop.f32.mrb[0].mxu0
  %v722 = vadd.f32 0.0, %v721
  %v723 = vpop.f32.mrb[0].mxu0
  %v724 = vadd.f32 0.0, %v723
  %v725 = vpop.f32.mrb[0].mxu0
  %v726 = vadd.f32 0.0, %v725
  %727 = vmatprep.mubr.bf16.mxu0 %v569
  %728 = vmatmul.mubr.bf16.gmra.mrb[0].mxu0 %v279
  %v729 = vpop.f32.mrb[0].mxu0
  %v730 = vadd.f32 0.0, %v729
  %v731 = vpop.f32.mrb[0].mxu0
  %v732 = vadd.f32 0.0, %v731
  %v733 = vpop.f32.mrb[0].mxu0
  %v734 = vadd.f32 0.0, %v733
  %v735 = vpop.f32.mrb[0].mxu0
  %v736 = vadd.f32 0.0, %v735
  %737 = vmatprep.mubr.bf16.mxu0 %v572
  %738 = vmatmul.mubr.bf16.gmra.mrb[0].mxu0 %v281
  %v739 = vpop.f32.mrb[0].mxu0
  %v740 = vadd.f32 0.0, %v739
  %v741 = vpop.f32.mrb[0].mxu0
  %v742 = vadd.f32 0.0, %v741
  %v743 = vpop.f32.mrb[0].mxu0
  %v744 = vadd.f32 0.0, %v743
  %v745 = vpop.f32.mrb[0].mxu0
  %v746 = vadd.f32 0.0, %v745
  %747 = vmatprep.mubr.bf16.mxu0 %v575
  %748 = vmatmul.mubr.bf16.gmra.mrb[0].mxu0 %v283
  %v749 = vpop.f32.mrb[0].mxu0
  %v750 = vadd.f32 0.0, %v749
  %v751 = vpop.f32.mrb[0].mxu0
  %v752 = vadd.f32 0.0, %v751
  %v753 = vpop.f32.mrb[0].mxu0
  %v754 = vadd.f32 0.0, %v753
  %v755 = vpop.f32.mrb[0].mxu0
  %v756 = vadd.f32 0.0, %v755
  %757 = vmatprep.mubr.bf16.mxu0 %v578
  %758 = vmatmul.mubr.bf16.gmra.mrb[0].mxu0 %v285
  %v759 = vpop.f32.mrb[0].mxu0
  %v760 = vadd.f32 0.0, %v759
  %v761 = vpop.f32.mrb[0].mxu0
  %v762 = vadd.f32 0.0, %v761
  %v763 = vpop.f32.mrb[0].mxu0
  %v764 = vadd.f32 0.0, %v763
  %v765 = vpop.f32.mrb[0].mxu0
  %v766 = vadd.f32 0.0, %v765
  %767 = vmatprep.mubr.bf16.mxu0 %v581
  %768 = vmatmul.mubr.bf16.gmra.mrb[0].mxu0 %v287
  %v769 = vpop.f32.mrb[0].mxu0
  %v770 = vadd.f32 0.0, %v769
  %v771 = vpop.f32.mrb[0].mxu0
  %v772 = vadd.f32 0.0, %v771
  %v773 = vpop.f32.mrb[0].mxu0
  %v774 = vadd.f32 0.0, %v773
  %v775 = vpop.f32.mrb[0].mxu0
  %v776 = vadd.f32 0.0, %v775
  %777 = vmatprep.mubr.bf16.mxu0 %v584
  %778 = vmatmul.mubr.bf16.gmra.mrb[0].mxu0 %v289
  %v779 = vpop.f32.mrb[0].mxu0
  %v780 = vadd.f32 0.0, %v779
  %v781 = vpop.f32.mrb[0].mxu0
  %v782 = vadd.f32 0.0, %v781
  %v783 = vpop.f32.mrb[0].mxu0
  %v784 = vadd.f32 0.0, %v783
  %v785 = vpop.f32.mrb[0].mxu0
  %v786 = vadd.f32 0.0, %v785
  %787 = vmatprep.mubr.bf16.mxu0 %v587
  %788 = vmatmul.mubr.bf16.gmra.mrb[0].mxu0 %v291
  %v789 = vpop.f32.mrb[0].mxu0
  %v790 = vadd.f32 0.0, %v789
  %v791 = vpop.f32.mrb[0].mxu0
  %v792 = vadd.f32 0.0, %v791
  %v793 = vpop.f32.mrb[0].mxu0
  %v794 = vadd.f32 0.0, %v793
  %v795 = vpop.f32.mrb[0].mxu0
  %v796 = vadd.f32 0.0, %v795
  %797 = vmatprep.mubr.bf16.mxu0 %v590
  %798 = vmatmul.mubr.bf16.gmra.mrb[0].mxu0 %v293
  %v799 = vpop.f32.mrb[0].mxu0
  %v800 = vadd.f32 0.0, %v799
  %v801 = vpop.f32.mrb[0].mxu0
  %v802 = vadd.f32 0.0, %v801
  %v803 = vpop.f32.mrb[0].mxu0
  %v804 = vadd.f32 0.0, %v803
  %v805 = vpop.f32.mrb[0].mxu0
  %v806 = vadd.f32 0.0, %v805
  %807 = vmatprep.mubr.bf16.mxu0 %v593
  %808 = vmatmul.mubr.bf16.gmra.mrb[0].mxu0 %v295
  %v809 = vpop.f32.mrb[0].mxu0
  %v810 = vadd.f32 0.0, %v809
  %v811 = vpop.f32.mrb[0].mxu0
  %v812 = vadd.f32 0.0, %v811
  %v813 = vpop.f32.mrb[0].mxu0
  %v814 = vadd.f32 0.0, %v813
  %v815 = vpop.f32.mrb[0].mxu0
  %v816 = vadd.f32 0.0, %v815
  %817 = vmatprep.mubr.bf16.mxu0 %v596
  %818 = vmatmul.mubr.bf16.gmra.mrb[0].mxu0 %v297
  %v819 = vpop.f32.mrb[0].mxu0
  %v820 = vadd.f32 0.0, %v819
  %v821 = vpop.f32.mrb[0].mxu0
  %v822 = vadd.f32 0.0, %v821
  %v823 = vpop.f32.mrb[0].mxu0
  %v824 = vadd.f32 0.0, %v823
  %v825 = vpop.f32.mrb[0].mxu0
  %v826 = vadd.f32 0.0, %v825
  %827 = vmatprep.mubr.bf16.mxu0 %v599
  %828 = vmatmul.mubr.bf16.gmra.mrb[0].mxu0 %v299
  %v829 = vpop.f32.mrb[0].mxu0
  %v830 = vadd.f32 0.0, %v829
  %v831 = vpop.f32.mrb[0].mxu0
  %v832 = vadd.f32 0.0, %v831
  %v833 = vpop.f32.mrb[0].mxu0
  %v834 = vadd.f32 0.0, %v833
  %v835 = vpop.f32.mrb[0].mxu0
  %v836 = vadd.f32 0.0, %v835
  %837 = vmatprep.mubr.bf16.mxu0 %v602
  %838 = vmatmul.mubr.bf16.gmra.mrb[0].mxu0 %v301
  %v839 = vpop.f32.mrb[0].mxu0
  %v840 = vadd.f32 0.0, %v839
  %v841 = vpop.f32.mrb[0].mxu0
  %v842 = vadd.f32 0.0, %v841
  %v843 = vpop.f32.mrb[0].mxu0
  %v844 = vadd.f32 0.0, %v843
  %v845 = vpop.f32.mrb[0].mxu0
  %v846 = vadd.f32 0.0, %v845
  %847 = vmatprep.mubr.bf16.mxu0 %v605
  %848 = vmatmul.mubr.bf16.gmra.mrb[0].mxu0 %v303
  %v849 = vpop.f32.mrb[0].mxu0
  %v850 = vadd.f32 0.0, %v849
  %v851 = vpop.f32.mrb[0].mxu0
  %v852 = vadd.f32 0.0, %v851
  %v853 = vpop.f32.mrb[0].mxu0
  %v854 = vadd.f32 0.0, %v853
  %v855 = vpop.f32.mrb[0].mxu0
  %v856 = vadd.f32 0.0, %v855
  %857 = vmatprep.mubr.bf16.mxu0 %v608
  %858 = vmatmul.mubr.bf16.gmra.mrb[0].mxu0 %v305
  %v859 = vpop.f32.mrb[0].mxu0
  %v860 = vadd.f32 0.0, %v859
  %v861 = vpop.f32.mrb[0].mxu0
  %v862 = vadd.f32 0.0, %v861
  %v863 = vpop.f32.mrb[0].mxu0
  %v864 = vadd.f32 0.0, %v863
  %v865 = vpop.f32.mrb[0].mxu0
  %v866 = vadd.f32 0.0, %v865
  %867 = vmatprep.mubr.bf16.mxu0 %v611
  %868 = vmatmul.mubr.bf16.gmra.mrb[0].mxu0 %v307
  %v869 = vpop.f32.mrb[0].mxu0
  %v870 = vadd.f32 0.0, %v869
  %v871 = vpop.f32.mrb[0].mxu0
  %v872 = vadd.f32 0.0, %v871
  %v873 = vpop.f32.mrb[0].mxu0
  %v874 = vadd.f32 0.0, %v873
  %v875 = vpop.f32.mrb[0].mxu0
  %v876 = vadd.f32 0.0, %v875
  %877 = vmatprep.mubr.bf16.mxu0 %v614
  %878 = vmatmul.mubr.bf16.gmra.mrb[0].mxu0 %v309
  %v879 = vpop.f32.mrb[0].mxu0
  %v880 = vadd.f32 0.0, %v879
  %v881 = vpop.f32.mrb[0].mxu0
  %v882 = vadd.f32 0.0, %v881
  %v883 = vpop.f32.mrb[0].mxu0
  %v884 = vadd.f32 0.0, %v883
  %v885 = vpop.f32.mrb[0].mxu0
  %v886 = vadd.f32 0.0, %v885
  %887 = vmatprep.mubr.bf16.mxu0 %v617
  %888 = vmatmul.mubr.bf16.gmra.mrb[0].mxu0 %v311
  %v889 = vpop.f32.mrb[0].mxu0
  %v890 = vadd.f32 0.0, %v889
  %v891 = vpop.f32.mrb[0].mxu0
  %v892 = vadd.f32 0.0, %v891
  %v893 = vpop.f32.mrb[0].mxu0
  %v894 = vadd.f32 0.0, %v893
  %v895 = vpop.f32.mrb[0].mxu0
  %v896 = vadd.f32 0.0, %v895
  %897 = vmatprep.mubr.bf16.mxu0 %v620
  %898 = vmatmul.mubr.bf16.gmra.mrb[0].mxu0 %v313
  %v899 = vpop.f32.mrb[0].mxu0
  %v900 = vadd.f32 0.0, %v899
  %v901 = vpop.f32.mrb[0].mxu0
  %v902 = vadd.f32 0.0, %v901
  %v903 = vpop.f32.mrb[0].mxu0
  %v904 = vadd.f32 0.0, %v903
  %v905 = vpop.f32.mrb[0].mxu0
  %v906 = vadd.f32 0.0, %v905
  %907 = vdwg.mxu0
  %908 = vmatprep.subr.bf16.mxu0 %v468
  %909 = vmatpush1.bf16.msra.mxu0 %v467
  %910 = vmatprep.subr.bf16.mxu0 %v472
  %911 = vmatpush1.bf16.msra.mxu0 %v471
  %912 = vmatprep.subr.bf16.mxu0 %v476
  %913 = vmatpush1.bf16.msra.mxu0 %v475
  %914 = vmatprep.subr.bf16.mxu0 %v480
  %915 = vmatpush1.bf16.msra.mxu0 %v479
  %916 = vmatprep.subr.bf16.mxu0 %v484
  %917 = vmatpush1.bf16.msra.mxu0 %v483
  %918 = vmatprep.subr.bf16.mxu0 %v488
  %919 = vmatpush1.bf16.msra.mxu0 %v487
  %920 = vmatprep.subr.bf16.mxu0 %v492
  %921 = vmatpush1.bf16.msra.mxu0 %v491
  %922 = vmatprep.subr.bf16.mxu0 %v496
  %923 = vmatpush1.bf16.msra.mxu0 %v495
  %924 = vmatprep.subr.bf16.mxu0 %v500
  %925 = vmatpush1.bf16.msra.mxu0 %v499
  %926 = vmatprep.subr.bf16.mxu0 %v504
  %927 = vmatpush1.bf16.msra.mxu0 %v503
  %928 = vmatprep.subr.bf16.mxu0 %v633
  %929 = vmatpush1.bf16.msra.mxu0 %v630
  %930 = vmatprep.subr.bf16.mxu0 0
  %931 = vmatpush1.bf16.msra.mxu0 0
  %932 = vmatprep.subr.bf16.mxu0 0
  %933 = vmatpush1.bf16.msra.mxu0 0
  %934 = vmatprep.subr.bf16.mxu0 0
  %935 = vmatpush1.bf16.msra.mxu0 0
  %936 = vmatprep.subr.bf16.mxu0 0
  %937 = vmatpush1.bf16.msra.mxu0 0
  %938 = vmatprep.subr.bf16.mxu0 0
  %939 = vmatpush1.bf16.msra.mxu0 0
  %940 = vmatprep.mubr.bf16.mxu0 %v551
  %941 = vmatmul.mubr.bf16.gmra.mrb[0].mxu0 %v267
  %v942 = vpop.f32.mrb[0].mxu0
  %v943 = vadd.f32 0.0, %v942
  %v944 = vpop.f32.mrb[0].mxu0
  %v945 = vadd.f32 0.0, %v944
  %v946 = vpop.f32.mrb[0].mxu0
  %v947 = vadd.f32 0.0, %v946
  %v948 = vpop.f32.mrb[0].mxu0
  %v949 = vadd.f32 0.0, %v948
  %950 = vmatprep.mubr.bf16.mxu0 %v554
  %951 = vmatmul.mubr.bf16.gmra.mrb[0].mxu0 %v269
  %v952 = vpop.f32.mrb[0].mxu0
  %v953 = vadd.f32 0.0, %v952
  %v954 = vpop.f32.mrb[0].mxu0
  %v955 = vadd.f32 0.0, %v954
  %v956 = vpop.f32.mrb[0].mxu0
  %v957 = vadd.f32 0.0, %v956
  %v958 = vpop.f32.mrb[0].mxu0
  %v959 = vadd.f32 0.0, %v958
  %960 = vmatprep.mubr.bf16.mxu0 %v557
  %961 = vmatmul.mubr.bf16.gmra.mrb[0].mxu0 %v271
  %v962 = vpop.f32.mrb[0].mxu0
  %v963 = vadd.f32 0.0, %v962
  %v964 = vpop.f32.mrb[0].mxu0
  %v965 = vadd.f32 0.0, %v964
  %v966 = vpop.f32.mrb[0].mxu0
  %v967 = vadd.f32 0.0, %v966
  %v968 = vpop.f32.mrb[0].mxu0
  %v969 = vadd.f32 0.0, %v968
  %970 = vmatprep.mubr.bf16.mxu0 %v560
  %971 = vmatmul.mubr.bf16.gmra.mrb[0].mxu0 %v273
  %v972 = vpop.f32.mrb[0].mxu0
  %v973 = vadd.f32 0.0, %v972
  %v974 = vpop.f32.mrb[0].mxu0
  %v975 = vadd.f32 0.0, %v974
  %v976 = vpop.f32.mrb[0].mxu0
  %v977 = vadd.f32 0.0, %v976
  %v978 = vpop.f32.mrb[0].mxu0
  %v979 = vadd.f32 0.0, %v978
  %980 = vmatprep.mubr.bf16.mxu0 %v563
  %981 = vmatmul.mubr.bf16.gmra.mrb[0].mxu0 %v275
  %v982 = vpop.f32.mrb[0].mxu0
  %v983 = vadd.f32 0.0, %v982
  %v984 = vpop.f32.mrb[0].mxu0
  %v985 = vadd.f32 0.0, %v984
  %v986 = vpop.f32.mrb[0].mxu0
  %v987 = vadd.f32 0.0, %v986
  %v988 = vpop.f32.mrb[0].mxu0
  %v989 = vadd.f32 0.0, %v988
  %990 = vmatprep.mubr.bf16.mxu0 %v566
  %991 = vmatmul.mubr.bf16.gmra.mrb[0].mxu0 %v277
  %v992 = vpop.f32.mrb[0].mxu0
  %v993 = vadd.f32 0.0, %v992
  %v994 = vpop.f32.mrb[0].mxu0
  %v995 = vadd.f32 0.0, %v994
  %v996 = vpop.f32.mrb[0].mxu0
  %v997 = vadd.f32 0.0, %v996
  %v998 = vpop.f32.mrb[0].mxu0
  %v999 = vadd.f32 0.0, %v998
  %1000 = vmatprep.mubr.bf16.mxu0 %v569
  %1001 = vmatmul.mubr.bf16.gmra.mrb[0].mxu0 %v279
  %v1002 = vpop.f32.mrb[0].mxu0
  %v1003 = vadd.f32 0.0, %v1002
  %v1004 = vpop.f32.mrb[0].mxu0
  %v1005 = vadd.f32 0.0, %v1004
  %v1006 = vpop.f32.mrb[0].mxu0
  %v1007 = vadd.f32 0.0, %v1006
  %v1008 = vpop.f32.mrb[0].mxu0
  %v1009 = vadd.f32 0.0, %v1008
  %1010 = vmatprep.mubr.bf16.mxu0 %v572
  %1011 = vmatmul.mubr.bf16.gmra.mrb[0].mxu0 %v281
  %v1012 = vpop.f32.mrb[0].mxu0
  %v1013 = vadd.f32 0.0, %v1012
  %v1014 = vpop.f32.mrb[0].mxu0
  %v1015 = vadd.f32 0.0, %v1014
  %v1016 = vpop.f32.mrb[0].mxu0
  %v1017 = vadd.f32 0.0, %v1016
  %v1018 = vpop.f32.mrb[0].mxu0
  %v1019 = vadd.f32 0.0, %v1018
  %1020 = vmatprep.mubr.bf16.mxu0 %v575
  %1021 = vmatmul.mubr.bf16.gmra.mrb[0].mxu0 %v283
  %v1022 = vpop.f32.mrb[0].mxu0
  %v1023 = vadd.f32 0.0, %v1022
  %v1024 = vpop.f32.mrb[0].mxu0
  %v1025 = vadd.f32 0.0, %v1024
  %v1026 = vpop.f32.mrb[0].mxu0
  %v1027 = vadd.f32 0.0, %v1026
  %v1028 = vpop.f32.mrb[0].mxu0
  %v1029 = vadd.f32 0.0, %v1028
  %1030 = vmatprep.mubr.bf16.mxu0 %v578
  %1031 = vmatmul.mubr.bf16.gmra.mrb[0].mxu0 %v285
  %v1032 = vpop.f32.mrb[0].mxu0
  %v1033 = vadd.f32 0.0, %v1032
  %v1034 = vpop.f32.mrb[0].mxu0
  %v1035 = vadd.f32 0.0, %v1034
  %v1036 = vpop.f32.mrb[0].mxu0
  %v1037 = vadd.f32 0.0, %v1036
  %v1038 = vpop.f32.mrb[0].mxu0
  %v1039 = vadd.f32 0.0, %v1038
  %1040 = vmatprep.mubr.bf16.mxu0 %v581
  %1041 = vmatmul.mubr.bf16.gmra.mrb[0].mxu0 %v287
  %v1042 = vpop.f32.mrb[0].mxu0
  %v1043 = vadd.f32 0.0, %v1042
  %v1044 = vpop.f32.mrb[0].mxu0
  %v1045 = vadd.f32 0.0, %v1044
  %v1046 = vpop.f32.mrb[0].mxu0
  %v1047 = vadd.f32 0.0, %v1046
  %v1048 = vpop.f32.mrb[0].mxu0
  %v1049 = vadd.f32 0.0, %v1048
  %1050 = vmatprep.mubr.bf16.mxu0 %v584
  %1051 = vmatmul.mubr.bf16.gmra.mrb[0].mxu0 %v289
  %v1052 = vpop.f32.mrb[0].mxu0
  %v1053 = vadd.f32 0.0, %v1052
  %v1054 = vpop.f32.mrb[0].mxu0
  %v1055 = vadd.f32 0.0, %v1054
  %v1056 = vpop.f32.mrb[0].mxu0
  %v1057 = vadd.f32 0.0, %v1056
  %v1058 = vpop.f32.mrb[0].mxu0
  %v1059 = vadd.f32 0.0, %v1058
  %1060 = vmatprep.mubr.bf16.mxu0 %v587
  %1061 = vmatmul.mubr.bf16.gmra.mrb[0].mxu0 %v291
  %v1062 = vpop.f32.mrb[0].mxu0
  %v1063 = vadd.f32 0.0, %v1062
  %v1064 = vpop.f32.mrb[0].mxu0
  %v1065 = vadd.f32 0.0, %v1064
  %v1066 = vpop.f32.mrb[0].mxu0
  %v1067 = vadd.f32 0.0, %v1066
  %v1068 = vpop.f32.mrb[0].mxu0
  %v1069 = vadd.f32 0.0, %v1068
  %1070 = vmatprep.mubr.bf16.mxu0 %v590
  %1071 = vmatmul.mubr.bf16.gmra.mrb[0].mxu0 %v293
  %v1072 = vpop.f32.mrb[0].mxu0
  %v1073 = vadd.f32 0.0, %v1072
  %v1074 = vpop.f32.mrb[0].mxu0
  %v1075 = vadd.f32 0.0, %v1074
  %v1076 = vpop.f32.mrb[0].mxu0
  %v1077 = vadd.f32 0.0, %v1076
  %v1078 = vpop.f32.mrb[0].mxu0
  %v1079 = vadd.f32 0.0, %v1078
  %1080 = vmatprep.mubr.bf16.mxu0 %v593
  %1081 = vmatmul.mubr.bf16.gmra.mrb[0].mxu0 %v295
  %v1082 = vpop.f32.mrb[0].mxu0
  %v1083 = vadd.f32 0.0, %v1082
  %v1084 = vpop.f32.mrb[0].mxu0
  %v1085 = vadd.f32 0.0, %v1084
  %v1086 = vpop.f32.mrb[0].mxu0
  %v1087 = vadd.f32 0.0, %v1086
  %v1088 = vpop.f32.mrb[0].mxu0
  %v1089 = vadd.f32 0.0, %v1088
  %1090 = vmatprep.mubr.bf16.mxu0 %v596
  %1091 = vmatmul.mubr.bf16.gmra.mrb[0].mxu0 %v297
  %v1092 = vpop.f32.mrb[0].mxu0
  %v1093 = vadd.f32 0.0, %v1092
  %v1094 = vpop.f32.mrb[0].mxu0
  %v1095 = vadd.f32 0.0, %v1094
  %v1096 = vpop.f32.mrb[0].mxu0
  %v1097 = vadd.f32 0.0, %v1096
  %v1098 = vpop.f32.mrb[0].mxu0
  %v1099 = vadd.f32 0.0, %v1098
  %1100 = vmatprep.mubr.bf16.mxu0 %v599
  %1101 = vmatmul.mubr.bf16.gmra.mrb[0].mxu0 %v299
  %v1102 = vpop.f32.mrb[0].mxu0
  %v1103 = vadd.f32 0.0, %v1102
  %v1104 = vpop.f32.mrb[0].mxu0
  %v1105 = vadd.f32 0.0, %v1104
  %v1106 = vpop.f32.mrb[0].mxu0
  %v1107 = vadd.f32 0.0, %v1106
  %v1108 = vpop.f32.mrb[0].mxu0
  %v1109 = vadd.f32 0.0, %v1108
  %1110 = vmatprep.mubr.bf16.mxu0 %v602
  %1111 = vmatmul.mubr.bf16.gmra.mrb[0].mxu0 %v301
  %v1112 = vpop.f32.mrb[0].mxu0
  %v1113 = vadd.f32 0.0, %v1112
  %v1114 = vpop.f32.mrb[0].mxu0
  %v1115 = vadd.f32 0.0, %v1114
  %v1116 = vpop.f32.mrb[0].mxu0
  %v1117 = vadd.f32 0.0, %v1116
  %v1118 = vpop.f32.mrb[0].mxu0
  %v1119 = vadd.f32 0.0, %v1118
  %1120 = vmatprep.mubr.bf16.mxu0 %v605
  %1121 = vmatmul.mubr.bf16.gmra.mrb[0].mxu0 %v303
  %v1122 = vpop.f32.mrb[0].mxu0
  %v1123 = vadd.f32 0.0, %v1122
  %v1124 = vpop.f32.mrb[0].mxu0
  %v1125 = vadd.f32 0.0, %v1124
  %v1126 = vpop.f32.mrb[0].mxu0
  %v1127 = vadd.f32 0.0, %v1126
  %v1128 = vpop.f32.mrb[0].mxu0
  %v1129 = vadd.f32 0.0, %v1128
  %1130 = vmatprep.mubr.bf16.mxu0 %v608
  %1131 = vmatmul.mubr.bf16.gmra.mrb[0].mxu0 %v305
  %v1132 = vpop.f32.mrb[0].mxu0
  %v1133 = vadd.f32 0.0, %v1132
  %v1134 = vpop.f32.mrb[0].mxu0
  %v1135 = vadd.f32 0.0, %v1134
  %v1136 = vpop.f32.mrb[0].mxu0
  %v1137 = vadd.f32 0.0, %v1136
  %v1138 = vpop.f32.mrb[0].mxu0
  %v1139 = vadd.f32 0.0, %v1138
  %1140 = vmatprep.mubr.bf16.mxu0 %v611
  %1141 = vmatmul.mubr.bf16.gmra.mrb[0].mxu0 %v307
  %v1142 = vpop.f32.mrb[0].mxu0
  %v1143 = vadd.f32 0.0, %v1142
  %v1144 = vpop.f32.mrb[0].mxu0
  %v1145 = vadd.f32 0.0, %v1144
  %v1146 = vpop.f32.mrb[0].mxu0
  %v1147 = vadd.f32 0.0, %v1146
  %v1148 = vpop.f32.mrb[0].mxu0
  %v1149 = vadd.f32 0.0, %v1148
  %1150 = vmatprep.mubr.bf16.mxu0 %v614
  %1151 = vmatmul.mubr.bf16.gmra.mrb[0].mxu0 %v309
  %v1152 = vpop.f32.mrb[0].mxu0
  %v1153 = vadd.f32 0.0, %v1152
  %v1154 = vpop.f32.mrb[0].mxu0
  %v1155 = vadd.f32 0.0, %v1154
  %v1156 = vpop.f32.mrb[0].mxu0
  %v1157 = vadd.f32 0.0, %v1156
  %v1158 = vpop.f32.mrb[0].mxu0
  %v1159 = vadd.f32 0.0, %v1158
  %1160 = vmatprep.mubr.bf16.mxu0 %v617
  %1161 = vmatmul.mubr.bf16.gmra.mrb[0].mxu0 %v311
  %v1162 = vpop.f32.mrb[0].mxu0
  %v1163 = vadd.f32 0.0, %v1162
  %v1164 = vpop.f32.mrb[0].mxu0
  %v1165 = vadd.f32 0.0, %v1164
  %v1166 = vpop.f32.mrb[0].mxu0
  %v1167 = vadd.f32 0.0, %v1166
  %v1168 = vpop.f32.mrb[0].mxu0
  %v1169 = vadd.f32 0.0, %v1168
  %1170 = vmatprep.mubr.bf16.mxu0 %v620
  %1171 = vmatmul.mubr.bf16.gmra.mrb[0].mxu0 %v313
  %v1172 = vpop.f32.mrb[0].mxu0
  %v1173 = vadd.f32 0.0, %v1172
  %v1174 = vpop.f32.mrb[0].mxu0
  %v1175 = vadd.f32 0.0, %v1174
  %v1176 = vpop.f32.mrb[0].mxu0
  %v1177 = vadd.f32 0.0, %v1176
  %v1178 = vpop.f32.mrb[0].mxu0
  %v1179 = vadd.f32 0.0, %v1178
  %1180 = vdwg.mxu0
  %v1181 = vmax.f32 %v670, %v672
  %v1182 = vmax.f32 %v674, %v676
  %v1183 = vmax.f32 %v680, %v682
  %v1184 = vmax.f32 %v684, %v686
  %v1185 = vmax.f32 %v690, %v692
  %v1186 = vmax.f32 %v694, %v696
  %v1187 = vmax.f32 %v700, %v702
  %v1188 = vmax.f32 %v704, %v706
  %v1189 = vmax.f32 %v710, %v712
  %v1190 = vmax.f32 %v714, %v716
  %v1191 = vmax.f32 %v720, %v722
  %v1192 = vmax.f32 %v724, %v726
  %v1193 = vmax.f32 %v730, %v732
  %v1194 = vmax.f32 %v734, %v736
  %v1195 = vmax.f32 %v740, %v742
  %v1196 = vmax.f32 %v744, %v746
  %v1197 = vmax.f32 %v750, %v752
  %v1198 = vmax.f32 %v754, %v756
  %v1199 = vmax.f32 %v760, %v762
  %v1200 = vmax.f32 %v764, %v766
  %v1201 = vmax.f32 %v770, %v772
  %v1202 = vmax.f32 %v774, %v776
  %v1203 = vmax.f32 %v780, %v782
  %v1204 = vmax.f32 %v784, %v786
  %v1205 = vmax.f32 %v790, %v792
  %v1206 = vmax.f32 %v794, %v796
  %v1207 = vmax.f32 %v800, %v802
  %v1208 = vmax.f32 %v804, %v806
  %v1209 = vmax.f32 %v810, %v812
  %v1210 = vmax.f32 %v814, %v816
  %v1211 = vmax.f32 %v820, %v822
  %v1212 = vmax.f32 %v824, %v826
  %v1213 = vmax.f32 %v830, %v832
  %v1214 = vmax.f32 %v834, %v836
  %v1215 = vmax.f32 %v840, %v842
  %v1216 = vmax.f32 %v844, %v846
  %v1217 = vmax.f32 %v850, %v852
  %v1218 = vmax.f32 %v854, %v856
  %v1219 = vmax.f32 %v860, %v862
  %v1220 = vmax.f32 %v864, %v866
  %v1221 = vmax.f32 %v870, %v872
  %v1222 = vmax.f32 %v874, %v876
  %v1223 = vmax.f32 %v880, %v882
  %v1224 = vmax.f32 %v884, %v886
  %v1225 = vmax.f32 %v890, %v892
  %v1226 = vmax.f32 %v894, %v896
  %v1227 = vmax.f32 %v900, %v902
  %v1228 = vmax.f32 %v904, %v906
  %v1229 = vmax.f32 %v943, %v945
  %v1230 = vmax.f32 %v947, %v949
  %v1231 = vmax.f32 %v953, %v955
  %v1232 = vmax.f32 %v957, %v959
  %v1233 = vmax.f32 %v963, %v965
  %v1234 = vmax.f32 %v967, %v969
  %v1235 = vmax.f32 %v973, %v975
  %v1236 = vmax.f32 %v977, %v979
  %v1237 = vmax.f32 %v983, %v985
  %v1238 = vmax.f32 %v987, %v989
  %v1239 = vmax.f32 %v993, %v995
  %v1240 = vmax.f32 %v997, %v999
  %v1241 = vmax.f32 %v1003, %v1005
  %v1242 = vmax.f32 %v1007, %v1009
  %v1243 = vmax.f32 %v1013, %v1015
  %v1244 = vmax.f32 %v1017, %v1019
  %v1245 = vmax.f32 %v1023, %v1025
  %v1246 = vmax.f32 %v1027, %v1029
  %v1247 = vmax.f32 %v1033, %v1035
  %v1248 = vmax.f32 %v1037, %v1039
  %v1249 = vmax.f32 %v1043, %v1045
  %v1250 = vmax.f32 %v1047, %v1049
  %v1251 = vmax.f32 %v1053, %v1055
  %v1252 = vmax.f32 %v1057, %v1059
  %v1253 = vmax.f32 %v1063, %v1065
  %v1254 = vmax.f32 %v1067, %v1069
  %v1255 = vmax.f32 %v1073, %v1075
  %v1256 = vmax.f32 %v1077, %v1079
  %v1257 = vmax.f32 %v1083, %v1085
  %v1258 = vmax.f32 %v1087, %v1089
  %v1259 = vmax.f32 %v1093, %v1095
  %v1260 = vmax.f32 %v1097, %v1099
  %v1261 = vmax.f32 %v1103, %v1105
  %v1262 = vmax.f32 %v1107, %v1109
  %v1263 = vmax.f32 %v1113, %v1115
  %v1264 = vmax.f32 %v1117, %v1119
  %v1265 = vmax.f32 %v1123, %v1125
  %v1266 = vmax.f32 %v1127, %v1129
  %v1267 = vmax.f32 %v1133, %v1135
  %v1268 = vmax.f32 %v1137, %v1139
  %v1269 = vmax.f32 %v1143, %v1145
  %v1270 = vmax.f32 %v1147, %v1149
  %v1271 = vmax.f32 %v1153, %v1155
  %v1272 = vmax.f32 %v1157, %v1159
  %v1273 = vmax.f32 %v1163, %v1165
  %v1274 = vmax.f32 %v1167, %v1169
  %v1275 = vmax.f32 %v1173, %v1175
  %v1276 = vmax.f32 %v1177, %v1179
  %v1277 = vmax.f32 %v1181, %v1229
  %v1278 = vmax.f32 %v1182, %v1230
  %v1279 = vmax.f32 %v1183, %v1231
  %v1280 = vmax.f32 %v1184, %v1232
  %v1281 = vmax.f32 %v1185, %v1233
  %v1282 = vmax.f32 %v1186, %v1234
  %v1283 = vmax.f32 %v1187, %v1235
  %v1284 = vmax.f32 %v1188, %v1236
  %v1285 = vmax.f32 %v1189, %v1237
  %v1286 = vmax.f32 %v1190, %v1238
  %v1287 = vmax.f32 %v1191, %v1239
  %v1288 = vmax.f32 %v1192, %v1240
  %v1289 = vmax.f32 %v1193, %v1241
  %v1290 = vmax.f32 %v1194, %v1242
  %v1291 = vmax.f32 %v1195, %v1243
  %v1292 = vmax.f32 %v1196, %v1244
  %v1293 = vmax.f32 %v1197, %v1245
  %v1294 = vmax.f32 %v1198, %v1246
  %v1295 = vmax.f32 %v1199, %v1247
  %v1296 = vmax.f32 %v1200, %v1248
  %v1297 = vmax.f32 %v1201, %v1249
  %v1298 = vmax.f32 %v1202, %v1250
  %v1299 = vmax.f32 %v1203, %v1251
  %v1300 = vmax.f32 %v1204, %v1252
  %v1301 = vmax.f32 %v1205, %v1253
  %v1302 = vmax.f32 %v1206, %v1254
  %v1303 = vmax.f32 %v1207, %v1255
  %v1304 = vmax.f32 %v1208, %v1256
  %v1305 = vmax.f32 %v1209, %v1257
  %v1306 = vmax.f32 %v1210, %v1258
  %v1307 = vmax.f32 %v1211, %v1259
  %v1308 = vmax.f32 %v1212, %v1260
  %v1309 = vmax.f32 %v1213, %v1261
  %v1310 = vmax.f32 %v1214, %v1262
  %v1311 = vmax.f32 %v1215, %v1263
  %v1312 = vmax.f32 %v1216, %v1264
  %v1313 = vmax.f32 %v1217, %v1265
  %v1314 = vmax.f32 %v1218, %v1266
  %v1315 = vmax.f32 %v1219, %v1267
  %v1316 = vmax.f32 %v1220, %v1268
  %v1317 = vmax.f32 %v1221, %v1269
  %v1318 = vmax.f32 %v1222, %v1270
  %v1319 = vmax.f32 %v1223, %v1271
  %v1320 = vmax.f32 %v1224, %v1272
  %v1321 = vmax.f32 %v1225, %v1273
  %v1322 = vmax.f32 %v1226, %v1274
  %v1323 = vmax.f32 %v1227, %v1275
  %v1324 = vmax.f32 %v1228, %v1276
  %v1325 = vld [vmem:[%s2] sm:$0x1]
  %v1327 = vlaneseq
  %v1328 = vshrl.u32 %v1327, 7
  %v1329 = vsub.s32 0, %v1328
  %v1330 = vrot.slane %v1325, %v1329
  %v1332 = vadd.f32 %v1277, %v1330
  %v1333 = vadd.f32 %v1278, %v1330
  %v1334 = vadd.f32 %v1279, %v1330
  %v1335 = vadd.f32 %v1280, %v1330
  %v1336 = vadd.f32 %v1281, %v1330
  %v1337 = vadd.f32 %v1282, %v1330
  %v1338 = vadd.f32 %v1283, %v1330
  %v1339 = vadd.f32 %v1284, %v1330
  %v1340 = vadd.f32 %v1285, %v1330
  %v1341 = vadd.f32 %v1286, %v1330
  %v1342 = vadd.f32 %v1287, %v1330
  %v1343 = vadd.f32 %v1288, %v1330
  %v1344 = vadd.f32 %v1289, %v1330
  %v1345 = vadd.f32 %v1290, %v1330
  %v1346 = vadd.f32 %v1291, %v1330
  %v1347 = vadd.f32 %v1292, %v1330
  %v1348 = vadd.f32 %v1293, %v1330
  %v1349 = vadd.f32 %v1294, %v1330
  %v1350 = vadd.f32 %v1295, %v1330
  %v1351 = vadd.f32 %v1296, %v1330
  %v1352 = vadd.f32 %v1297, %v1330
  %v1353 = vadd.f32 %v1298, %v1330
  %v1354 = vadd.f32 %v1299, %v1330
  %v1355 = vadd.f32 %v1300, %v1330
  %v1356 = vadd.f32 %v1301, %v1330
  %v1357 = vadd.f32 %v1302, %v1330
  %v1358 = vadd.f32 %v1303, %v1330
  %v1359 = vadd.f32 %v1304, %v1330
  %v1360 = vadd.f32 %v1305, %v1330
  %v1361 = vadd.f32 %v1306, %v1330
  %v1362 = vadd.f32 %v1307, %v1330
  %v1363 = vadd.f32 %v1308, %v1330
  %v1364 = vadd.f32 %v1309, %v1330
  %v1365 = vadd.f32 %v1310, %v1330
  %v1366 = vadd.f32 %v1311, %v1330
  %v1367 = vadd.f32 %v1312, %v1330
  %v1368 = vadd.f32 %v1313, %v1330
  %v1369 = vadd.f32 %v1314, %v1330
  %v1370 = vadd.f32 %v1315, %v1330
  %v1371 = vadd.f32 %v1316, %v1330
  %v1372 = vadd.f32 %v1317, %v1330
  %v1373 = vadd.f32 %v1318, %v1330
  %v1374 = vadd.f32 %v1319, %v1330
  %v1375 = vadd.f32 %v1320, %v1330
  %v1376 = vadd.f32 %v1321, %v1330
  %v1377 = vadd.f32 %v1322, %v1330
  %v1378 = vadd.f32 %v1323, %v1330
  %v1379 = vadd.f32 %v1324, %v1330
  %v1380 = vand.u32 2147483647, %v1332
  %v1381 = vand.u32 2147483647, %v1333
  %v1382 = vand.u32 2147483647, %v1334
  %v1383 = vand.u32 2147483647, %v1335
  %v1384 = vand.u32 2147483647, %v1336
  %v1385 = vand.u32 2147483647, %v1337
  %v1386 = vand.u32 2147483647, %v1338
  %v1387 = vand.u32 2147483647, %v1339
  %v1388 = vand.u32 2147483647, %v1340
  %v1389 = vand.u32 2147483647, %v1341
  %v1390 = vand.u32 2147483647, %v1342
  %v1391 = vand.u32 2147483647, %v1343
  %v1392 = vand.u32 2147483647, %v1344
  %v1393 = vand.u32 2147483647, %v1345
  %v1394 = vand.u32 2147483647, %v1346
  %v1395 = vand.u32 2147483647, %v1347
  %v1396 = vand.u32 2147483647, %v1348
  %v1397 = vand.u32 2147483647, %v1349
  %v1398 = vand.u32 2147483647, %v1350
  %v1399 = vand.u32 2147483647, %v1351
  %v1400 = vand.u32 2147483647, %v1352
  %v1401 = vand.u32 2147483647, %v1353
  %v1402 = vand.u32 2147483647, %v1354
  %v1403 = vand.u32 2147483647, %v1355
  %v1404 = vand.u32 2147483647, %v1356
  %v1405 = vand.u32 2147483647, %v1357
  %v1406 = vand.u32 2147483647, %v1358
  %v1407 = vand.u32 2147483647, %v1359
  %v1408 = vand.u32 2147483647, %v1360
  %v1409 = vand.u32 2147483647, %v1361
  %v1410 = vand.u32 2147483647, %v1362
  %v1411 = vand.u32 2147483647, %v1363
  %v1412 = vand.u32 2147483647, %v1364
  %v1413 = vand.u32 2147483647, %v1365
  %v1414 = vand.u32 2147483647, %v1366
  %v1415 = vand.u32 2147483647, %v1367
  %v1416 = vand.u32 2147483647, %v1368
  %v1417 = vand.u32 2147483647, %v1369
  %v1418 = vand.u32 2147483647, %v1370
  %v1419 = vand.u32 2147483647, %v1371
  %v1420 = vand.u32 2147483647, %v1372
  %v1421 = vand.u32 2147483647, %v1373
  %v1422 = vand.u32 2147483647, %v1374
  %v1423 = vand.u32 2147483647, %v1375
  %v1424 = vand.u32 2147483647, %v1376
  %v1425 = vand.u32 2147483647, %v1377
  %v1426 = vand.u32 2147483647, %v1378
  %v1427 = vand.u32 2147483647, %v1379
  %v1428 = vpack.c.bf16 %v1381, %v1380
  %v1429 = vpack.c.bf16 %v1383, %v1382
  %v1430 = vpack.c.bf16 %v1385, %v1384
  %v1431 = vpack.c.bf16 %v1387, %v1386
  %v1432 = vpack.c.bf16 %v1389, %v1388
  %v1433 = vpack.c.bf16 %v1391, %v1390
  %v1434 = vpack.c.bf16 %v1393, %v1392
  %v1435 = vpack.c.bf16 %v1395, %v1394
  %v1436 = vpack.c.bf16 %v1397, %v1396
  %v1437 = vpack.c.bf16 %v1399, %v1398
  %v1438 = vpack.c.bf16 %v1401, %v1400
  %v1439 = vpack.c.bf16 %v1403, %v1402
  %v1440 = vpack.c.bf16 %v1405, %v1404
  %v1441 = vpack.c.bf16 %v1407, %v1406
  %v1442 = vpack.c.bf16 %v1409, %v1408
  %v1443 = vpack.c.bf16 %v1411, %v1410
  %v1444 = vpack.c.bf16 %v1413, %v1412
  %v1445 = vpack.c.bf16 %v1415, %v1414
  %v1446 = vpack.c.bf16 %v1417, %v1416
  %v1447 = vpack.c.bf16 %v1419, %v1418
  %v1448 = vpack.c.bf16 %v1421, %v1420
  %v1449 = vpack.c.bf16 %v1423, %v1422
  %v1450 = vpack.c.bf16 %v1425, %v1424
  %v1451 = vpack.c.bf16 %v1427, %v1426
  %1452 = vst [vmem:[#allocation2] sm:$0xff] %v1428
  %1453 = vst [vmem:[#allocation2 + $0x8] sm:$0xff] %v1429
  %1454 = vst [vmem:[#allocation2 + $0x10] sm:$0xff] %v1430
  %1455 = vst [vmem:[#allocation2 + $0x18] sm:$0xff] %v1431
  %1456 = vst [vmem:[#allocation2 + $0x20] sm:$0xff] %v1432
  %1457 = vst [vmem:[#allocation2 + $0x28] sm:$0xff] %v1433
  %1458 = vst [vmem:[#allocation2 + $0x30] sm:$0xff] %v1434
  %1459 = vst [vmem:[#allocation2 + $0x38] sm:$0xff] %v1435
  %1460 = vst [vmem:[#allocation2 + $0x40] sm:$0xff] %v1436
  %1461 = vst [vmem:[#allocation2 + $0x48] sm:$0xff] %v1437
  %1462 = vst [vmem:[#allocation2 + $0x50] sm:$0xff] %v1438
  %1463 = vst [vmem:[#allocation2 + $0x58] sm:$0xff] %v1439
  %1464 = vst [vmem:[#allocation2 + $0x60] sm:$0xff] %v1440
  %1465 = vst [vmem:[#allocation2 + $0x68] sm:$0xff] %v1441
  %1466 = vst [vmem:[#allocation2 + $0x70] sm:$0xff] %v1442
  %1467 = vst [vmem:[#allocation2 + $0x78] sm:$0xff] %v1443
  %1468 = vst [vmem:[#allocation2 + $0x80] sm:$0xff] %v1444
  %1469 = vst [vmem:[#allocation2 + $0x88] sm:$0xff] %v1445
  %1470 = vst [vmem:[#allocation2 + $0x90] sm:$0xff] %v1446
  %1471 = vst [vmem:[#allocation2 + $0x98] sm:$0xff] %v1447
  %1472 = vst [vmem:[#allocation2 + $0xa0] sm:$0xff] %v1448
  %1473 = vst [vmem:[#allocation2 + $0xa8] sm:$0xff] %v1449
  %1474 = vst [vmem:[#allocation2 + $0xb0] sm:$0xff] %v1450
  %1475 = vst [vmem:[#allocation2 + $0xb8] sm:$0xff] %v1451
  %v1476 = vld [vmem:[#allocation2] sm:$0xff]
  %v1477 = vld [vmem:[#allocation2 + $0x8] sm:$0xff]
  %v1478 = vld [vmem:[#allocation2 + $0x10] sm:$0xff]
  %v1479 = vld [vmem:[#allocation2 + $0x18] sm:$0xff]
  %v1480 = vld [vmem:[#allocation2 + $0x20] sm:$0xff]
  %v1481 = vld [vmem:[#allocation2 + $0x28] sm:$0xff]
  %v1482 = vld [vmem:[#allocation2 + $0x30] sm:$0xff]
  %v1483 = vld [vmem:[#allocation2 + $0x38] sm:$0xff]
  %v1484 = vld [vmem:[%s3] sm:$0xff]
  %v1485 = vld [vmem:[%s3 + $0x8] sm:$0xff]
  %v1486 = vld [vmem:[%s3 + $0x10] sm:$0xff]
  %v1487 = vld [vmem:[%s3 + $0x18] sm:$0xff]
  %v1488 = vld [vmem:[%s3 + $0x20] sm:$0xff]
  %v1489 = vld [vmem:[%s3 + $0x28] sm:$0xff]
  %v1490 = vld [vmem:[%s3 + $0x30] sm:$0xff]
  %v1491 = vld [vmem:[%s3 + $0x38] sm:$0xff]
  %v1492 = vld [vmem:[%s3 + $0x40] sm:$0xff]
  %v1493 = vld [vmem:[%s3 + $0x48] sm:$0xff]
  %v1494 = vld [vmem:[%s3 + $0x50] sm:$0xff]
  %v1495 = vld [vmem:[%s3 + $0x58] sm:$0xff]
  %v1496 = vld [vmem:[%s3 + $0x60] sm:$0xff]
  %v1497 = vld [vmem:[%s3 + $0x68] sm:$0xff]
  %v1498 = vld [vmem:[%s3 + $0x70] sm:$0xff]
  %v1499 = vld [vmem:[%s3 + $0x78] sm:$0xff]
  %v1500 = vld [vmem:[%s3 + $0x80] sm:$0xff]
  %v1501 = vld [vmem:[%s3 + $0x88] sm:$0xff]
  %v1502 = vld [vmem:[%s3 + $0x90] sm:$0xff]
  %v1503 = vld [vmem:[%s3 + $0x98] sm:$0xff]
  %v1504 = vld [vmem:[%s3 + $0xa0] sm:$0xff]
  %v1505 = vld [vmem:[%s3 + $0xa8] sm:$0xff]
  %v1506 = vld [vmem:[%s3 + $0xb0] sm:$0xff]
  %v1507 = vld [vmem:[%s3 + $0xb8] sm:$0xff]
  %v1508 = vld [vmem:[%s3 + $0xc0] sm:$0xff]
  %v1509 = vld [vmem:[%s3 + $0xc8] sm:$0xff]
  %v1510 = vld [vmem:[%s3 + $0xd0] sm:$0xff]
  %v1511 = vld [vmem:[%s3 + $0xd8] sm:$0xff]
  %v1512 = vld [vmem:[%s3 + $0xe0] sm:$0xff]
  %v1513 = vld [vmem:[%s3 + $0xe8] sm:$0xff]
  %v1514 = vld [vmem:[%s3 + $0xf0] sm:$0xff]
  %v1515 = vld [vmem:[%s3 + $0xf8] sm:$0xff]
  %v1516 = vld [vmem:[#allocation2 + $0x60] sm:$0xff]
  %v1517 = vld [vmem:[#allocation2 + $0x68] sm:$0xff]
  %v1518 = vld [vmem:[#allocation2 + $0x70] sm:$0xff]
  %v1519 = vld [vmem:[#allocation2 + $0x78] sm:$0xff]
  %v1520 = vld [vmem:[#allocation2 + $0x80] sm:$0xff]
  %v1521 = vld [vmem:[#allocation2 + $0x88] sm:$0xff]
  %v1522 = vld [vmem:[#allocation2 + $0x90] sm:$0xff]
  %v1523 = vld [vmem:[#allocation2 + $0x98] sm:$0xff]
  %s1524 = scalar_lea.vmem %s3, 256
  %v1525 = vld [vmem:[%s1524] sm:$0xff]
  %v1526 = vld [vmem:[%s1524 + $0x8] sm:$0xff]
  %v1527 = vld [vmem:[%s1524 + $0x10] sm:$0xff]
  %v1528 = vld [vmem:[%s1524 + $0x18] sm:$0xff]
  %v1529 = vld [vmem:[%s1524 + $0x20] sm:$0xff]
  %v1530 = vld [vmem:[%s1524 + $0x28] sm:$0xff]
  %v1531 = vld [vmem:[%s1524 + $0x30] sm:$0xff]
  %v1532 = vld [vmem:[%s1524 + $0x38] sm:$0xff]
  %v1533 = vld [vmem:[%s1524 + $0x40] sm:$0xff]
  %v1534 = vld [vmem:[%s1524 + $0x48] sm:$0xff]
  %v1535 = vld [vmem:[%s1524 + $0x50] sm:$0xff]
  %v1536 = vld [vmem:[%s1524 + $0x58] sm:$0xff]
  %v1537 = vld [vmem:[%s1524 + $0x60] sm:$0xff]
  %v1538 = vld [vmem:[%s1524 + $0x68] sm:$0xff]
  %v1539 = vld [vmem:[%s1524 + $0x70] sm:$0xff]
  %v1540 = vld [vmem:[%s1524 + $0x78] sm:$0xff]
  %v1541 = vld [vmem:[%s1524 + $0x80] sm:$0xff]
  %v1542 = vld [vmem:[%s1524 + $0x88] sm:$0xff]
  %v1543 = vld [vmem:[%s1524 + $0x90] sm:$0xff]
  %v1544 = vld [vmem:[%s1524 + $0x98] sm:$0xff]
  %v1545 = vld [vmem:[%s1524 + $0xa0] sm:$0xff]
  %v1546 = vld [vmem:[%s1524 + $0xa8] sm:$0xff]
  %v1547 = vld [vmem:[%s1524 + $0xb0] sm:$0xff]
  %v1548 = vld [vmem:[%s1524 + $0xb8] sm:$0xff]
  %v1549 = vld [vmem:[%s1524 + $0xc0] sm:$0xff]
  %v1550 = vld [vmem:[%s1524 + $0xc8] sm:$0xff]
  %v1551 = vld [vmem:[%s1524 + $0xd0] sm:$0xff]
  %v1552 = vld [vmem:[%s1524 + $0xd8] sm:$0xff]
  %v1553 = vld [vmem:[%s1524 + $0xe0] sm:$0xff]
  %v1554 = vld [vmem:[%s1524 + $0xe8] sm:$0xff]
  %v1555 = vld [vmem:[%s1524 + $0xf0] sm:$0xff]
  %v1556 = vld [vmem:[%s1524 + $0xf8] sm:$0xff]
  %v1589 = vunpack.c.l.b16 %v1525
  %v1590 = vunpack.c.h.b16 %v1525
  %v1591 = vunpack.c.l.b16 %v1526
  %v1592 = vunpack.c.h.b16 %v1526
  %v1593 = vunpack.c.l.b16 %v1527
  %v1594 = vunpack.c.h.b16 %v1527
  %v1595 = vunpack.c.l.b16 %v1528
  %v1596 = vunpack.c.h.b16 %v1528
  %v1597 = vunpack.c.l.b16 %v1529
  %v1598 = vunpack.c.h.b16 %v1529
  %v1599 = vunpack.c.l.b16 %v1530
  %v1600 = vunpack.c.h.b16 %v1530
  %v1601 = vunpack.c.l.b16 %v1531
  %v1602 = vunpack.c.h.b16 %v1531
  %v1603 = vunpack.c.l.b16 %v1532
  %v1604 = vunpack.c.h.b16 %v1532
  %v1605 = vunpack.c.l.b16 %v1533
  %v1606 = vunpack.c.h.b16 %v1533
  %v1607 = vunpack.c.l.b16 %v1534
  %v1608 = vunpack.c.h.b16 %v1534
  %v1609 = vunpack.c.l.b16 %v1535
  %v1610 = vunpack.c.h.b16 %v1535
  %v1611 = vunpack.c.l.b16 %v1536
  %v1612 = vunpack.c.h.b16 %v1536
  %v1613 = vunpack.c.l.b16 %v1537
  %v1614 = vunpack.c.h.b16 %v1537
  %v1615 = vunpack.c.l.b16 %v1538
  %v1616 = vunpack.c.h.b16 %v1538
  %v1617 = vunpack.c.l.b16 %v1539
  %v1618 = vunpack.c.h.b16 %v1539
  %v1619 = vunpack.c.l.b16 %v1540
  %v1620 = vunpack.c.h.b16 %v1540
  %v1621 = vunpack.c.l.b16 %v1541
  %v1622 = vunpack.c.h.b16 %v1541
  %v1623 = vunpack.c.l.b16 %v1542
  %v1624 = vunpack.c.h.b16 %v1542
  %v1625 = vunpack.c.l.b16 %v1543
  %v1626 = vunpack.c.h.b16 %v1543
  %v1627 = vunpack.c.l.b16 %v1544
  %v1628 = vunpack.c.h.b16 %v1544
  %v1629 = vunpack.c.l.b16 %v1545
  %v1630 = vunpack.c.h.b16 %v1545
  %v1631 = vunpack.c.l.b16 %v1546
  %v1632 = vunpack.c.h.b16 %v1546
  %v1633 = vunpack.c.l.b16 %v1547
  %v1634 = vunpack.c.h.b16 %v1547
  %v1635 = vunpack.c.l.b16 %v1548
  %v1636 = vunpack.c.h.b16 %v1548
  %v1637 = vunpack.c.l.b16 %v1549
  %v1638 = vunpack.c.h.b16 %v1549
  %v1639 = vunpack.c.l.b16 %v1550
  %v1640 = vunpack.c.h.b16 %v1550
  %v1641 = vunpack.c.l.b16 %v1551
  %v1642 = vunpack.c.h.b16 %v1551
  %v1643 = vunpack.c.l.b16 %v1552
  %v1644 = vunpack.c.h.b16 %v1552
  %v1645 = vunpack.c.l.b16 %v1553
  %v1646 = vunpack.c.h.b16 %v1553
  %v1647 = vunpack.c.l.b16 %v1554
  %v1648 = vunpack.c.h.b16 %v1554
  %v1649 = vunpack.c.l.b16 %v1555
  %v1650 = vunpack.c.h.b16 %v1555
  %v1651 = vunpack.c.l.b16 %v1556
  %v1652 = vunpack.c.h.b16 %v1556
  %v1653 = vpack.c.b16 %v1593, %v1589
  %v1654 = vpack.c.b16 %v1594, %v1590
  %v1655 = vpack.c.b16 %v1595, %v1591
  %v1656 = vpack.c.b16 %v1596, %v1592
  %v1657 = vpack.c.b16 %v1601, %v1597
  %v1658 = vpack.c.b16 %v1602, %v1598
  %v1659 = vpack.c.b16 %v1603, %v1599
  %v1660 = vpack.c.b16 %v1604, %v1600
  %v1661 = vpack.c.b16 %v1609, %v1605
  %v1662 = vpack.c.b16 %v1610, %v1606
  %v1663 = vpack.c.b16 %v1611, %v1607
  %v1664 = vpack.c.b16 %v1612, %v1608
  %v1665 = vpack.c.b16 %v1617, %v1613
  %v1666 = vpack.c.b16 %v1618, %v1614
  %v1667 = vpack.c.b16 %v1619, %v1615
  %v1668 = vpack.c.b16 %v1620, %v1616
  %v1669 = vpack.c.b16 %v1625, %v1621
  %v1670 = vpack.c.b16 %v1626, %v1622
  %v1671 = vpack.c.b16 %v1627, %v1623
  %v1672 = vpack.c.b16 %v1628, %v1624
  %v1673 = vpack.c.b16 %v1633, %v1629
  %v1674 = vpack.c.b16 %v1634, %v1630
  %v1675 = vpack.c.b16 %v1635, %v1631
  %v1676 = vpack.c.b16 %v1636, %v1632
  %v1677 = vpack.c.b16 %v1641, %v1637
  %v1678 = vpack.c.b16 %v1642, %v1638
  %v1679 = vpack.c.b16 %v1643, %v1639
  %v1680 = vpack.c.b16 %v1644, %v1640
  %v1681 = vpack.c.b16 %v1649, %v1645
  %v1682 = vpack.c.b16 %v1650, %v1646
  %v1683 = vpack.c.b16 %v1651, %v1647
  %v1684 = vpack.c.b16 %v1652, %v1648
  %1717 = vmatprep.subr.bf16.mxu0 %v1654
  %1718 = vmatpush1.bf16.msra.mxu0 %v1653
  %1719 = vmatprep.subr.bf16.mxu0 %v1658
  %1720 = vmatpush1.bf16.msra.mxu0 %v1657
  %1721 = vmatprep.subr.bf16.mxu0 %v1662
  %1722 = vmatpush1.bf16.msra.mxu0 %v1661
  %1723 = vmatprep.subr.bf16.mxu0 %v1666
  %1724 = vmatpush1.bf16.msra.mxu0 %v1665
  %1725 = vmatprep.subr.bf16.mxu0 %v1670
  %1726 = vmatpush1.bf16.msra.mxu0 %v1669
  %1727 = vmatprep.subr.bf16.mxu0 %v1674
  %1728 = vmatpush1.bf16.msra.mxu0 %v1673
  %1729 = vmatprep.subr.bf16.mxu0 %v1678
  %1730 = vmatpush1.bf16.msra.mxu0 %v1677
  %1731 = vmatprep.subr.bf16.mxu0 %v1682
  %1732 = vmatpush1.bf16.msra.mxu0 %v1681
  %1733 = vmatprep.subr.bf16.mxu0 0
  %1734 = vmatpush1.bf16.msra.mxu0 0
  %1735 = vmatprep.subr.bf16.mxu0 0
  %1736 = vmatpush1.bf16.msra.mxu0 0
  %1737 = vmatprep.subr.bf16.mxu0 0
  %1738 = vmatpush1.bf16.msra.mxu0 0
  %1739 = vmatprep.subr.bf16.mxu0 0
  %1740 = vmatpush1.bf16.msra.mxu0 0
  %1741 = vmatprep.subr.bf16.mxu0 0
  %1742 = vmatpush1.bf16.msra.mxu0 0
  %1743 = vmatprep.subr.bf16.mxu0 0
  %1744 = vmatpush1.bf16.msra.mxu0 0
  %1745 = vmatprep.subr.bf16.mxu0 0
  %1746 = vmatpush1.bf16.msra.mxu0 0
  %1747 = vmatprep.subr.bf16.mxu0 0
  %1748 = vmatpush1.bf16.msra.mxu0 0
  %1749 = vmatprep.mubr.bf16.mxu0 0
  %1750 = vmatmul.mubr.bf16.gmra.mrb[0].mxu0 %v1516
  %v1751 = vpop.f32.mrb[0].mxu0
  %v1752 = vadd.f32 0.0, %v1751
  %v1753 = vpop.f32.mrb[0].mxu0
  %v1754 = vadd.f32 0.0, %v1753
  %v1755 = vpop.f32.mrb[0].mxu0
  %v1756 = vadd.f32 0.0, %v1755
  %v1757 = vpop.f32.mrb[0].mxu0
  %v1758 = vadd.f32 0.0, %v1757
  %1759 = vmatprep.mubr.bf16.mxu0 0
  %1760 = vmatmul.mubr.bf16.gmra.mrb[0].mxu0 %v1517
  %v1761 = vpop.f32.mrb[0].mxu0
  %v1762 = vadd.f32 0.0, %v1761
  %v1763 = vpop.f32.mrb[0].mxu0
  %v1764 = vadd.f32 0.0, %v1763
  %v1765 = vpop.f32.mrb[0].mxu0
  %v1766 = vadd.f32 0.0, %v1765
  %v1767 = vpop.f32.mrb[0].mxu0
  %v1768 = vadd.f32 0.0, %v1767
  %1769 = vmatprep.mubr.bf16.mxu0 0
  %1770 = vmatmul.mubr.bf16.gmra.mrb[0].mxu0 %v1518
  %v1771 = vpop.f32.mrb[0].mxu0
  %v1772 = vadd.f32 0.0, %v1771
  %v1773 = vpop.f32.mrb[0].mxu0
  %v1774 = vadd.f32 0.0, %v1773
  %v1775 = vpop.f32.mrb[0].mxu0
  %v1776 = vadd.f32 0.0, %v1775
  %v1777 = vpop.f32.mrb[0].mxu0
  %v1778 = vadd.f32 0.0, %v1777
  %1779 = vmatprep.mubr.bf16.mxu0 0
  %1780 = vmatmul.mubr.bf16.gmra.mrb[0].mxu0 %v1519
  %v1781 = vpop.f32.mrb[0].mxu0
  %v1782 = vadd.f32 0.0, %v1781
  %v1783 = vpop.f32.mrb[0].mxu0
  %v1784 = vadd.f32 0.0, %v1783
  %v1785 = vpop.f32.mrb[0].mxu0
  %v1786 = vadd.f32 0.0, %v1785
  %v1787 = vpop.f32.mrb[0].mxu0
  %v1788 = vadd.f32 0.0, %v1787
  %1789 = vmatprep.mubr.bf16.mxu0 0
  %1790 = vmatmul.mubr.bf16.gmra.mrb[0].mxu0 %v1520
  %v1791 = vpop.f32.mrb[0].mxu0
  %v1792 = vadd.f32 0.0, %v1791
  %v1793 = vpop.f32.mrb[0].mxu0
  %v1794 = vadd.f32 0.0, %v1793
  %v1795 = vpop.f32.mrb[0].mxu0
  %v1796 = vadd.f32 0.0, %v1795
  %v1797 = vpop.f32.mrb[0].mxu0
  %v1798 = vadd.f32 0.0, %v1797
  %1799 = vmatprep.mubr.bf16.mxu0 0
  %1800 = vmatmul.mubr.bf16.gmra.mrb[0].mxu0 %v1521
  %v1801 = vpop.f32.mrb[0].mxu0
  %v1802 = vadd.f32 0.0, %v1801
  %v1803 = vpop.f32.mrb[0].mxu0
  %v1804 = vadd.f32 0.0, %v1803
  %v1805 = vpop.f32.mrb[0].mxu0
  %v1806 = vadd.f32 0.0, %v1805
  %v1807 = vpop.f32.mrb[0].mxu0
  %v1808 = vadd.f32 0.0, %v1807
  %1809 = vmatprep.mubr.bf16.mxu0 0
  %1810 = vmatmul.mubr.bf16.gmra.mrb[0].mxu0 %v1522
  %v1811 = vpop.f32.mrb[0].mxu0
  %v1812 = vadd.f32 0.0, %v1811
  %v1813 = vpop.f32.mrb[0].mxu0
  %v1814 = vadd.f32 0.0, %v1813
  %v1815 = vpop.f32.mrb[0].mxu0
  %v1816 = vadd.f32 0.0, %v1815
  %v1817 = vpop.f32.mrb[0].mxu0
  %v1818 = vadd.f32 0.0, %v1817
  %1819 = vmatprep.mubr.bf16.mxu0 0
  %1820 = vmatmul.mubr.bf16.gmra.mrb[0].mxu0 %v1523
  %v1821 = vpop.f32.mrb[0].mxu0
  %v1822 = vadd.f32 0.0, %v1821
  %v1823 = vpop.f32.mrb[0].mxu0
  %v1824 = vadd.f32 0.0, %v1823
  %v1825 = vpop.f32.mrb[0].mxu0
  %v1826 = vadd.f32 0.0, %v1825
  %v1827 = vpop.f32.mrb[0].mxu0
  %v1828 = vadd.f32 0.0, %v1827
  %1829 = vdwg.mxu0
  %1830 = vmatprep.subr.bf16.mxu0 %v1656
  %1831 = vmatpush1.bf16.msra.mxu0 %v1655
  %1832 = vmatprep.subr.bf16.mxu0 %v1660
  %1833 = vmatpush1.bf16.msra.mxu0 %v1659
  %1834 = vmatprep.subr.bf16.mxu0 %v1664
  %1835 = vmatpush1.bf16.msra.mxu0 %v1663
  %1836 = vmatprep.subr.bf16.mxu0 %v1668
  %1837 = vmatpush1.bf16.msra.mxu0 %v1667
  %1838 = vmatprep.subr.bf16.mxu0 %v1672
  %1839 = vmatpush1.bf16.msra.mxu0 %v1671
  %1840 = vmatprep.subr.bf16.mxu0 %v1676
  %1841 = vmatpush1.bf16.msra.mxu0 %v1675
  %1842 = vmatprep.subr.bf16.mxu0 %v1680
  %1843 = vmatpush1.bf16.msra.mxu0 %v1679
  %1844 = vmatprep.subr.bf16.mxu0 %v1684
  %1845 = vmatpush1.bf16.msra.mxu0 %v1683
  %1846 = vmatprep.subr.bf16.mxu0 0
  %1847 = vmatpush1.bf16.msra.mxu0 0
  %1848 = vmatprep.subr.bf16.mxu0 0
  %1849 = vmatpush1.bf16.msra.mxu0 0
  %1850 = vmatprep.subr.bf16.mxu0 0
  %1851 = vmatpush1.bf16.msra.mxu0 0
  %1852 = vmatprep.subr.bf16.mxu0 0
  %1853 = vmatpush1.bf16.msra.mxu0 0
  %1854 = vmatprep.subr.bf16.mxu0 0
  %1855 = vmatpush1.bf16.msra.mxu0 0
  %1856 = vmatprep.subr.bf16.mxu0 0
  %1857 = vmatpush1.bf16.msra.mxu0 0
  %1858 = vmatprep.subr.bf16.mxu0 0
  %1859 = vmatpush1.bf16.msra.mxu0 0
  %1860 = vmatprep.subr.bf16.mxu0 0
  %1861 = vmatpush1.bf16.msra.mxu0 0
  %1862 = vmatprep.mubr.bf16.mxu0 0
  %1863 = vmatmul.mubr.bf16.gmra.mrb[0].mxu0 %v1516
  %v1864 = vpop.f32.mrb[0].mxu0
  %v1865 = vadd.f32 0.0, %v1864
  %v1866 = vpop.f32.mrb[0].mxu0
  %v1867 = vadd.f32 0.0, %v1866
  %v1868 = vpop.f32.mrb[0].mxu0
  %v1869 = vadd.f32 0.0, %v1868
  %v1870 = vpop.f32.mrb[0].mxu0
  %v1871 = vadd.f32 0.0, %v1870
  %1872 = vmatprep.mubr.bf16.mxu0 0
  %1873 = vmatmul.mubr.bf16.gmra.mrb[0].mxu0 %v1517
  %v1874 = vpop.f32.mrb[0].mxu0
  %v1875 = vadd.f32 0.0, %v1874
  %v1876 = vpop.f32.mrb[0].mxu0
  %v1877 = vadd.f32 0.0, %v1876
  %v1878 = vpop.f32.mrb[0].mxu0
  %v1879 = vadd.f32 0.0, %v1878
  %v1880 = vpop.f32.mrb[0].mxu0
  %v1881 = vadd.f32 0.0, %v1880
  %1882 = vmatprep.mubr.bf16.mxu0 0
  %1883 = vmatmul.mubr.bf16.gmra.mrb[0].mxu0 %v1518
  %v1884 = vpop.f32.mrb[0].mxu0
  %v1885 = vadd.f32 0.0, %v1884
  %v1886 = vpop.f32.mrb[0].mxu0
  %v1887 = vadd.f32 0.0, %v1886
  %v1888 = vpop.f32.mrb[0].mxu0
  %v1889 = vadd.f32 0.0, %v1888
  %v1890 = vpop.f32.mrb[0].mxu0
  %v1891 = vadd.f32 0.0, %v1890
  %1892 = vmatprep.mubr.bf16.mxu0 0
  %1893 = vmatmul.mubr.bf16.gmra.mrb[0].mxu0 %v1519
  %v1894 = vpop.f32.mrb[0].mxu0
  %v1895 = vadd.f32 0.0, %v1894
  %v1896 = vpop.f32.mrb[0].mxu0
  %v1897 = vadd.f32 0.0, %v1896
  %v1898 = vpop.f32.mrb[0].mxu0
  %v1899 = vadd.f32 0.0, %v1898
  %v1900 = vpop.f32.mrb[0].mxu0
  %v1901 = vadd.f32 0.0, %v1900
  %1902 = vmatprep.mubr.bf16.mxu0 0
  %1903 = vmatmul.mubr.bf16.gmra.mrb[0].mxu0 %v1520
  %v1904 = vpop.f32.mrb[0].mxu0
  %v1905 = vadd.f32 0.0, %v1904
  %v1906 = vpop.f32.mrb[0].mxu0
  %v1907 = vadd.f32 0.0, %v1906
  %v1908 = vpop.f32.mrb[0].mxu0
  %v1909 = vadd.f32 0.0, %v1908
  %v1910 = vpop.f32.mrb[0].mxu0
  %v1911 = vadd.f32 0.0, %v1910
  %1912 = vmatprep.mubr.bf16.mxu0 0
  %1913 = vmatmul.mubr.bf16.gmra.mrb[0].mxu0 %v1521
  %v1914 = vpop.f32.mrb[0].mxu0
  %v1915 = vadd.f32 0.0, %v1914
  %v1916 = vpop.f32.mrb[0].mxu0
  %v1917 = vadd.f32 0.0, %v1916
  %v1918 = vpop.f32.mrb[0].mxu0
  %v1919 = vadd.f32 0.0, %v1918
  %v1920 = vpop.f32.mrb[0].mxu0
  %v1921 = vadd.f32 0.0, %v1920
  %1922 = vmatprep.mubr.bf16.mxu0 0
  %1923 = vmatmul.mubr.bf16.gmra.mrb[0].mxu0 %v1522
  %v1924 = vpop.f32.mrb[0].mxu0
  %v1925 = vadd.f32 0.0, %v1924
  %v1926 = vpop.f32.mrb[0].mxu0
  %v1927 = vadd.f32 0.0, %v1926
  %v1928 = vpop.f32.mrb[0].mxu0
  %v1929 = vadd.f32 0.0, %v1928
  %v1930 = vpop.f32.mrb[0].mxu0
  %v1931 = vadd.f32 0.0, %v1930
  %1932 = vmatprep.mubr.bf16.mxu0 0
  %1933 = vmatmul.mubr.bf16.gmra.mrb[0].mxu0 %v1523
  %v1934 = vpop.f32.mrb[0].mxu0
  %v1935 = vadd.f32 0.0, %v1934
  %v1936 = vpop.f32.mrb[0].mxu0
  %v1937 = vadd.f32 0.0, %v1936
  %v1938 = vpop.f32.mrb[0].mxu0
  %v1939 = vadd.f32 0.0, %v1938
  %v1940 = vpop.f32.mrb[0].mxu0
  %v1941 = vadd.f32 0.0, %v1940
  %1942 = vdwg.mxu0
  %v1975 = vunpack.c.l.b16 %v1484
  %v1976 = vunpack.c.h.b16 %v1484
  %v1977 = vunpack.c.l.b16 %v1485
  %v1978 = vunpack.c.h.b16 %v1485
  %v1979 = vunpack.c.l.b16 %v1486
  %v1980 = vunpack.c.h.b16 %v1486
  %v1981 = vunpack.c.l.b16 %v1487
  %v1982 = vunpack.c.h.b16 %v1487
  %v1983 = vunpack.c.l.b16 %v1488
  %v1984 = vunpack.c.h.b16 %v1488
  %v1985 = vunpack.c.l.b16 %v1489
  %v1986 = vunpack.c.h.b16 %v1489
  %v1987 = vunpack.c.l.b16 %v1490
  %v1988 = vunpack.c.h.b16 %v1490
  %v1989 = vunpack.c.l.b16 %v1491
  %v1990 = vunpack.c.h.b16 %v1491
  %v1991 = vunpack.c.l.b16 %v1492
  %v1992 = vunpack.c.h.b16 %v1492
  %v1993 = vunpack.c.l.b16 %v1493
  %v1994 = vunpack.c.h.b16 %v1493
  %v1995 = vunpack.c.l.b16 %v1494
  %v1996 = vunpack.c.h.b16 %v1494
  %v1997 = vunpack.c.l.b16 %v1495
  %v1998 = vunpack.c.h.b16 %v1495
  %v1999 = vunpack.c.l.b16 %v1496
  %v2000 = vunpack.c.h.b16 %v1496
  %v2001 = vunpack.c.l.b16 %v1497
  %v2002 = vunpack.c.h.b16 %v1497
  %v2003 = vunpack.c.l.b16 %v1498
  %v2004 = vunpack.c.h.b16 %v1498
  %v2005 = vunpack.c.l.b16 %v1499
  %v2006 = vunpack.c.h.b16 %v1499
  %v2007 = vunpack.c.l.b16 %v1500
  %v2008 = vunpack.c.h.b16 %v1500
  %v2009 = vunpack.c.l.b16 %v1501
  %v2010 = vunpack.c.h.b16 %v1501
  %v2011 = vunpack.c.l.b16 %v1502
  %v2012 = vunpack.c.h.b16 %v1502
  %v2013 = vunpack.c.l.b16 %v1503
  %v2014 = vunpack.c.h.b16 %v1503
  %v2015 = vunpack.c.l.b16 %v1504
  %v2016 = vunpack.c.h.b16 %v1504
  %v2017 = vunpack.c.l.b16 %v1505
  %v2018 = vunpack.c.h.b16 %v1505
  %v2019 = vunpack.c.l.b16 %v1506
  %v2020 = vunpack.c.h.b16 %v1506
  %v2021 = vunpack.c.l.b16 %v1507
  %v2022 = vunpack.c.h.b16 %v1507
  %v2023 = vunpack.c.l.b16 %v1508
  %v2024 = vunpack.c.h.b16 %v1508
  %v2025 = vunpack.c.l.b16 %v1509
  %v2026 = vunpack.c.h.b16 %v1509
  %v2027 = vunpack.c.l.b16 %v1510
  %v2028 = vunpack.c.h.b16 %v1510
  %v2029 = vunpack.c.l.b16 %v1511
  %v2030 = vunpack.c.h.b16 %v1511
  %v2031 = vunpack.c.l.b16 %v1512
  %v2032 = vunpack.c.h.b16 %v1512
  %v2033 = vunpack.c.l.b16 %v1513
  %v2034 = vunpack.c.h.b16 %v1513
  %v2035 = vunpack.c.l.b16 %v1514
  %v2036 = vunpack.c.h.b16 %v1514
  %v2037 = vunpack.c.l.b16 %v1515
  %v2038 = vunpack.c.h.b16 %v1515
  %v2039 = vpack.c.b16 %v1979, %v1975
  %v2040 = vpack.c.b16 %v1980, %v1976
  %v2041 = vpack.c.b16 %v1981, %v1977
  %v2042 = vpack.c.b16 %v1982, %v1978
  %v2043 = vpack.c.b16 %v1987, %v1983
  %v2044 = vpack.c.b16 %v1988, %v1984
  %v2045 = vpack.c.b16 %v1989, %v1985
  %v2046 = vpack.c.b16 %v1990, %v1986
  %v2047 = vpack.c.b16 %v1995, %v1991
  %v2048 = vpack.c.b16 %v1996, %v1992
  %v2049 = vpack.c.b16 %v1997, %v1993
  %v2050 = vpack.c.b16 %v1998, %v1994
  %v2051 = vpack.c.b16 %v2003, %v1999
  %v2052 = vpack.c.b16 %v2004, %v2000
  %v2053 = vpack.c.b16 %v2005, %v2001
  %v2054 = vpack.c.b16 %v2006, %v2002
  %v2055 = vpack.c.b16 %v2011, %v2007
  %v2056 = vpack.c.b16 %v2012, %v2008
  %v2057 = vpack.c.b16 %v2013, %v2009
  %v2058 = vpack.c.b16 %v2014, %v2010
  %v2059 = vpack.c.b16 %v2019, %v2015
  %v2060 = vpack.c.b16 %v2020, %v2016
  %v2061 = vpack.c.b16 %v2021, %v2017
  %v2062 = vpack.c.b16 %v2022, %v2018
  %v2063 = vpack.c.b16 %v2027, %v2023
  %v2064 = vpack.c.b16 %v2028, %v2024
  %v2065 = vpack.c.b16 %v2029, %v2025
  %v2066 = vpack.c.b16 %v2030, %v2026
  %v2067 = vpack.c.b16 %v2035, %v2031
  %v2068 = vpack.c.b16 %v2036, %v2032
  %v2069 = vpack.c.b16 %v2037, %v2033
  %v2070 = vpack.c.b16 %v2038, %v2034
  %2103 = vmatprep.subr.bf16.mxu0 %v2040
  %2104 = vmatpush1.bf16.msra.mxu0 %v2039
  %2105 = vmatprep.subr.bf16.mxu0 %v2044
  %2106 = vmatpush1.bf16.msra.mxu0 %v2043
  %2107 = vmatprep.subr.bf16.mxu0 %v2048
  %2108 = vmatpush1.bf16.msra.mxu0 %v2047
  %2109 = vmatprep.subr.bf16.mxu0 %v2052
  %2110 = vmatpush1.bf16.msra.mxu0 %v2051
  %2111 = vmatprep.subr.bf16.mxu0 %v2056
  %2112 = vmatpush1.bf16.msra.mxu0 %v2055
  %2113 = vmatprep.subr.bf16.mxu0 %v2060
  %2114 = vmatpush1.bf16.msra.mxu0 %v2059
  %2115 = vmatprep.subr.bf16.mxu0 %v2064
  %2116 = vmatpush1.bf16.msra.mxu0 %v2063
  %2117 = vmatprep.subr.bf16.mxu0 %v2068
  %2118 = vmatpush1.bf16.msra.mxu0 %v2067
  %2119 = vmatprep.subr.bf16.mxu0 0
  %2120 = vmatpush1.bf16.msra.mxu0 0
  %2121 = vmatprep.subr.bf16.mxu0 0
  %2122 = vmatpush1.bf16.msra.mxu0 0
  %2123 = vmatprep.subr.bf16.mxu0 0
  %2124 = vmatpush1.bf16.msra.mxu0 0
  %2125 = vmatprep.subr.bf16.mxu0 0
  %2126 = vmatpush1.bf16.msra.mxu0 0
  %2127 = vmatprep.subr.bf16.mxu0 0
  %2128 = vmatpush1.bf16.msra.mxu0 0
  %2129 = vmatprep.subr.bf16.mxu0 0
  %2130 = vmatpush1.bf16.msra.mxu0 0
  %2131 = vmatprep.subr.bf16.mxu0 0
  %2132 = vmatpush1.bf16.msra.mxu0 0
  %2133 = vmatprep.subr.bf16.mxu0 0
  %2134 = vmatpush1.bf16.msra.mxu0 0
  %2135 = vmatprep.mubr.bf16.mxu0 0
  %2136 = vmatmul.mubr.bf16.gmra.mrb[0].mxu0 %v1476
  %v2137 = vpop.f32.mrb[0].mxu0
  %v2138 = vadd.f32 %v1752, %v2137
  %v2139 = vpop.f32.mrb[0].mxu0
  %v2140 = vadd.f32 %v1754, %v2139
  %v2141 = vpop.f32.mrb[0].mxu0
  %v2142 = vadd.f32 %v1756, %v2141
  %v2143 = vpop.f32.mrb[0].mxu0
  %v2144 = vadd.f32 %v1758, %v2143
  %2145 = vmatprep.mubr.bf16.mxu0 0
  %2146 = vmatmul.mubr.bf16.gmra.mrb[0].mxu0 %v1477
  %v2147 = vpop.f32.mrb[0].mxu0
  %v2148 = vadd.f32 %v1762, %v2147
  %v2149 = vpop.f32.mrb[0].mxu0
  %v2150 = vadd.f32 %v1764, %v2149
  %v2151 = vpop.f32.mrb[0].mxu0
  %v2152 = vadd.f32 %v1766, %v2151
  %v2153 = vpop.f32.mrb[0].mxu0
  %v2154 = vadd.f32 %v1768, %v2153
  %2155 = vmatprep.mubr.bf16.mxu0 0
  %2156 = vmatmul.mubr.bf16.gmra.mrb[0].mxu0 %v1478
  %v2157 = vpop.f32.mrb[0].mxu0
  %v2158 = vadd.f32 %v1772, %v2157
  %v2159 = vpop.f32.mrb[0].mxu0
  %v2160 = vadd.f32 %v1774, %v2159
  %v2161 = vpop.f32.mrb[0].mxu0
  %v2162 = vadd.f32 %v1776, %v2161
  %v2163 = vpop.f32.mrb[0].mxu0
  %v2164 = vadd.f32 %v1778, %v2163
  %2165 = vmatprep.mubr.bf16.mxu0 0
  %2166 = vmatmul.mubr.bf16.gmra.mrb[0].mxu0 %v1479
  %v2167 = vpop.f32.mrb[0].mxu0
  %v2168 = vadd.f32 %v1782, %v2167
  %v2169 = vpop.f32.mrb[0].mxu0
  %v2170 = vadd.f32 %v1784, %v2169
  %v2171 = vpop.f32.mrb[0].mxu0
  %v2172 = vadd.f32 %v1786, %v2171
  %v2173 = vpop.f32.mrb[0].mxu0
  %v2174 = vadd.f32 %v1788, %v2173
  %2175 = vmatprep.mubr.bf16.mxu0 0
  %2176 = vmatmul.mubr.bf16.gmra.mrb[0].mxu0 %v1480
  %v2177 = vpop.f32.mrb[0].mxu0
  %v2178 = vadd.f32 %v1792, %v2177
  %v2179 = vpop.f32.mrb[0].mxu0
  %v2180 = vadd.f32 %v1794, %v2179
  %v2181 = vpop.f32.mrb[0].mxu0
  %v2182 = vadd.f32 %v1796, %v2181
  %v2183 = vpop.f32.mrb[0].mxu0
  %v2184 = vadd.f32 %v1798, %v2183
  %2185 = vmatprep.mubr.bf16.mxu0 0
  %2186 = vmatmul.mubr.bf16.gmra.mrb[0].mxu0 %v1481
  %v2187 = vpop.f32.mrb[0].mxu0
  %v2188 = vadd.f32 %v1802, %v2187
  %v2189 = vpop.f32.mrb[0].mxu0
  %v2190 = vadd.f32 %v1804, %v2189
  %v2191 = vpop.f32.mrb[0].mxu0
  %v2192 = vadd.f32 %v1806, %v2191
  %v2193 = vpop.f32.mrb[0].mxu0
  %v2194 = vadd.f32 %v1808, %v2193
  %2195 = vmatprep.mubr.bf16.mxu0 0
  %2196 = vmatmul.mubr.bf16.gmra.mrb[0].mxu0 %v1482
  %v2197 = vpop.f32.mrb[0].mxu0
  %v2198 = vadd.f32 %v1812, %v2197
  %v2199 = vpop.f32.mrb[0].mxu0
  %v2200 = vadd.f32 %v1814, %v2199
  %v2201 = vpop.f32.mrb[0].mxu0
  %v2202 = vadd.f32 %v1816, %v2201
  %v2203 = vpop.f32.mrb[0].mxu0
  %v2204 = vadd.f32 %v1818, %v2203
  %2205 = vmatprep.mubr.bf16.mxu0 0
  %2206 = vmatmul.mubr.bf16.gmra.mrb[0].mxu0 %v1483
  %v2207 = vpop.f32.mrb[0].mxu0
  %v2208 = vadd.f32 %v1822, %v2207
  %v2209 = vpop.f32.mrb[0].mxu0
  %v2210 = vadd.f32 %v1824, %v2209
  %v2211 = vpop.f32.mrb[0].mxu0
  %v2212 = vadd.f32 %v1826, %v2211
  %v2213 = vpop.f32.mrb[0].mxu0
  %v2214 = vadd.f32 %v1828, %v2213
  %2215 = vdwg.mxu0
  %2216 = vmatprep.subr.bf16.mxu0 %v2042
  %2217 = vmatpush1.bf16.msra.mxu0 %v2041
  %2218 = vmatprep.subr.bf16.mxu0 %v2046
  %2219 = vmatpush1.bf16.msra.mxu0 %v2045
  %2220 = vmatprep.subr.bf16.mxu0 %v2050
  %2221 = vmatpush1.bf16.msra.mxu0 %v2049
  %2222 = vmatprep.subr.bf16.mxu0 %v2054
  %2223 = vmatpush1.bf16.msra.mxu0 %v2053
  %2224 = vmatprep.subr.bf16.mxu0 %v2058
  %2225 = vmatpush1.bf16.msra.mxu0 %v2057
  %2226 = vmatprep.subr.bf16.mxu0 %v2062
  %2227 = vmatpush1.bf16.msra.mxu0 %v2061
  %2228 = vmatprep.subr.bf16.mxu0 %v2066
  %2229 = vmatpush1.bf16.msra.mxu0 %v2065
  %2230 = vmatprep.subr.bf16.mxu0 %v2070
  %2231 = vmatpush1.bf16.msra.mxu0 %v2069
  %2232 = vmatprep.subr.bf16.mxu0 0
  %2233 = vmatpush1.bf16.msra.mxu0 0
  %2234 = vmatprep.subr.bf16.mxu0 0
  %2235 = vmatpush1.bf16.msra.mxu0 0
  %2236 = vmatprep.subr.bf16.mxu0 0
  %2237 = vmatpush1.bf16.msra.mxu0 0
  %2238 = vmatprep.subr.bf16.mxu0 0
  %2239 = vmatpush1.bf16.msra.mxu0 0
  %2240 = vmatprep.subr.bf16.mxu0 0
  %2241 = vmatpush1.bf16.msra.mxu0 0
  %2242 = vmatprep.subr.bf16.mxu0 0
  %2243 = vmatpush1.bf16.msra.mxu0 0
  %2244 = vmatprep.subr.bf16.mxu0 0
  %2245 = vmatpush1.bf16.msra.mxu0 0
  %2246 = vmatprep.subr.bf16.mxu0 0
  %2247 = vmatpush1.bf16.msra.mxu0 0
  %2248 = vmatprep.mubr.bf16.mxu0 0
  %2249 = vmatmul.mubr.bf16.gmra.mrb[0].mxu0 %v1476
  %v2250 = vpop.f32.mrb[0].mxu0
  %v2251 = vadd.f32 %v1865, %v2250
  %v2252 = vpop.f32.mrb[0].mxu0
  %v2253 = vadd.f32 %v1867, %v2252
  %v2254 = vpop.f32.mrb[0].mxu0
  %v2255 = vadd.f32 %v1869, %v2254
  %v2256 = vpop.f32.mrb[0].mxu0
  %v2257 = vadd.f32 %v1871, %v2256
  %2258 = vmatprep.mubr.bf16.mxu0 0
  %2259 = vmatmul.mubr.bf16.gmra.mrb[0].mxu0 %v1477
  %v2260 = vpop.f32.mrb[0].mxu0
  %v2261 = vadd.f32 %v1875, %v2260
  %v2262 = vpop.f32.mrb[0].mxu0
  %v2263 = vadd.f32 %v1877, %v2262
  %v2264 = vpop.f32.mrb[0].mxu0
  %v2265 = vadd.f32 %v1879, %v2264
  %v2266 = vpop.f32.mrb[0].mxu0
  %v2267 = vadd.f32 %v1881, %v2266
  %2268 = vmatprep.mubr.bf16.mxu0 0
  %2269 = vmatmul.mubr.bf16.gmra.mrb[0].mxu0 %v1478
  %v2270 = vpop.f32.mrb[0].mxu0
  %v2271 = vadd.f32 %v1885, %v2270
  %v2272 = vpop.f32.mrb[0].mxu0
  %v2273 = vadd.f32 %v1887, %v2272
  %v2274 = vpop.f32.mrb[0].mxu0
  %v2275 = vadd.f32 %v1889, %v2274
  %v2276 = vpop.f32.mrb[0].mxu0
  %v2277 = vadd.f32 %v1891, %v2276
  %2278 = vmatprep.mubr.bf16.mxu0 0
  %2279 = vmatmul.mubr.bf16.gmra.mrb[0].mxu0 %v1479
  %v2280 = vpop.f32.mrb[0].mxu0
  %v2281 = vadd.f32 %v1895, %v2280
  %v2282 = vpop.f32.mrb[0].mxu0
  %v2283 = vadd.f32 %v1897, %v2282
  %v2284 = vpop.f32.mrb[0].mxu0
  %v2285 = vadd.f32 %v1899, %v2284
  %v2286 = vpop.f32.mrb[0].mxu0
  %v2287 = vadd.f32 %v1901, %v2286
  %2288 = vmatprep.mubr.bf16.mxu0 0
  %2289 = vmatmul.mubr.bf16.gmra.mrb[0].mxu0 %v1480
  %v2290 = vpop.f32.mrb[0].mxu0
  %v2291 = vadd.f32 %v1905, %v2290
  %v2292 = vpop.f32.mrb[0].mxu0
  %v2293 = vadd.f32 %v1907, %v2292
  %v2294 = vpop.f32.mrb[0].mxu0
  %v2295 = vadd.f32 %v1909, %v2294
  %v2296 = vpop.f32.mrb[0].mxu0
  %v2297 = vadd.f32 %v1911, %v2296
  %2298 = vmatprep.mubr.bf16.mxu0 0
  %2299 = vmatmul.mubr.bf16.gmra.mrb[0].mxu0 %v1481
  %v2300 = vpop.f32.mrb[0].mxu0
  %v2301 = vadd.f32 %v1915, %v2300
  %v2302 = vpop.f32.mrb[0].mxu0
  %v2303 = vadd.f32 %v1917, %v2302
  %v2304 = vpop.f32.mrb[0].mxu0
  %v2305 = vadd.f32 %v1919, %v2304
  %v2306 = vpop.f32.mrb[0].mxu0
  %v2307 = vadd.f32 %v1921, %v2306
  %2308 = vmatprep.mubr.bf16.mxu0 0
  %2309 = vmatmul.mubr.bf16.gmra.mrb[0].mxu0 %v1482
  %v2310 = vpop.f32.mrb[0].mxu0
  %v2311 = vadd.f32 %v1925, %v2310
  %v2312 = vpop.f32.mrb[0].mxu0
  %v2313 = vadd.f32 %v1927, %v2312
  %v2314 = vpop.f32.mrb[0].mxu0
  %v2315 = vadd.f32 %v1929, %v2314
  %v2316 = vpop.f32.mrb[0].mxu0
  %v2317 = vadd.f32 %v1931, %v2316
  %2318 = vmatprep.mubr.bf16.mxu0 0
  %2319 = vmatmul.mubr.bf16.gmra.mrb[0].mxu0 %v1483
  %v2320 = vpop.f32.mrb[0].mxu0
  %v2321 = vadd.f32 %v1935, %v2320
  %v2322 = vpop.f32.mrb[0].mxu0
  %v2323 = vadd.f32 %v1937, %v2322
  %v2324 = vpop.f32.mrb[0].mxu0
  %v2325 = vadd.f32 %v1939, %v2324
  %v2326 = vpop.f32.mrb[0].mxu0
  %v2327 = vadd.f32 %v1941, %v2326
  %2328 = vdwg.mxu0
  %v2329 = vld [vmem:[#allocation2 + $0x10] sm:$0xff]
  %v2330 = vld [vmem:[#allocation2 + $0x18] sm:$0xff]
  %v2331 = vld [vmem:[#allocation2 + $0x20] sm:$0xff]
  %v2332 = vld [vmem:[#allocation2 + $0x28] sm:$0xff]
  %v2333 = vld [vmem:[#allocation2 + $0x30] sm:$0xff]
  %v2334 = vld [vmem:[#allocation2 + $0x38] sm:$0xff]
  %v2335 = vld [vmem:[#allocation2 + $0x40] sm:$0xff]
  %v2336 = vld [vmem:[#allocation2 + $0x48] sm:$0xff]
  %s2337 = scalar_lea.vmem %s3, 512
  %v2338 = vld [vmem:[%s2337] sm:$0xff]
  %v2339 = vld [vmem:[%s2337 + $0x8] sm:$0xff]
  %v2340 = vld [vmem:[%s2337 + $0x10] sm:$0xff]
  %v2341 = vld [vmem:[%s2337 + $0x18] sm:$0xff]
  %v2342 = vld [vmem:[%s2337 + $0x20] sm:$0xff]
  %v2343 = vld [vmem:[%s2337 + $0x28] sm:$0xff]
  %v2344 = vld [vmem:[%s2337 + $0x30] sm:$0xff]
  %v2345 = vld [vmem:[%s2337 + $0x38] sm:$0xff]
  %v2346 = vld [vmem:[%s2337 + $0x40] sm:$0xff]
  %v2347 = vld [vmem:[%s2337 + $0x48] sm:$0xff]
  %v2348 = vld [vmem:[%s2337 + $0x50] sm:$0xff]
  %v2349 = vld [vmem:[%s2337 + $0x58] sm:$0xff]
  %v2350 = vld [vmem:[%s2337 + $0x60] sm:$0xff]
  %v2351 = vld [vmem:[%s2337 + $0x68] sm:$0xff]
  %v2352 = vld [vmem:[%s2337 + $0x70] sm:$0xff]
  %v2353 = vld [vmem:[%s2337 + $0x78] sm:$0xff]
  %v2354 = vld [vmem:[%s2337 + $0x80] sm:$0xff]
  %v2355 = vld [vmem:[%s2337 + $0x88] sm:$0xff]
  %v2356 = vld [vmem:[%s2337 + $0x90] sm:$0xff]
  %v2357 = vld [vmem:[%s2337 + $0x98] sm:$0xff]
  %v2358 = vld [vmem:[%s2337 + $0xa0] sm:$0xff]
  %v2359 = vld [vmem:[%s2337 + $0xa8] sm:$0xff]
  %v2360 = vld [vmem:[%s2337 + $0xb0] sm:$0xff]
  %v2361 = vld [vmem:[%s2337 + $0xb8] sm:$0xff]
  %v2362 = vld [vmem:[%s2337 + $0xc0] sm:$0xff]
  %v2363 = vld [vmem:[%s2337 + $0xc8] sm:$0xff]
  %v2364 = vld [vmem:[%s2337 + $0xd0] sm:$0xff]
  %v2365 = vld [vmem:[%s2337 + $0xd8] sm:$0xff]
  %v2366 = vld [vmem:[%s2337 + $0xe0] sm:$0xff]
  %v2367 = vld [vmem:[%s2337 + $0xe8] sm:$0xff]
  %v2368 = vld [vmem:[%s2337 + $0xf0] sm:$0xff]
  %v2369 = vld [vmem:[%s2337 + $0xf8] sm:$0xff]
  %v2402 = vunpack.c.l.b16 %v2338
  %v2403 = vunpack.c.h.b16 %v2338
  %v2404 = vunpack.c.l.b16 %v2339
  %v2405 = vunpack.c.h.b16 %v2339
  %v2406 = vunpack.c.l.b16 %v2340
  %v2407 = vunpack.c.h.b16 %v2340
  %v2408 = vunpack.c.l.b16 %v2341
  %v2409 = vunpack.c.h.b16 %v2341
  %v2410 = vunpack.c.l.b16 %v2342
  %v2411 = vunpack.c.h.b16 %v2342
  %v2412 = vunpack.c.l.b16 %v2343
  %v2413 = vunpack.c.h.b16 %v2343
  %v2414 = vunpack.c.l.b16 %v2344
  %v2415 = vunpack.c.h.b16 %v2344
  %v2416 = vunpack.c.l.b16 %v2345
  %v2417 = vunpack.c.h.b16 %v2345
  %v2418 = vunpack.c.l.b16 %v2346
  %v2419 = vunpack.c.h.b16 %v2346
  %v2420 = vunpack.c.l.b16 %v2347
  %v2421 = vunpack.c.h.b16 %v2347
  %v2422 = vunpack.c.l.b16 %v2348
  %v2423 = vunpack.c.h.b16 %v2348
  %v2424 = vunpack.c.l.b16 %v2349
  %v2425 = vunpack.c.h.b16 %v2349
  %v2426 = vunpack.c.l.b16 %v2350
  %v2427 = vunpack.c.h.b16 %v2350
  %v2428 = vunpack.c.l.b16 %v2351
  %v2429 = vunpack.c.h.b16 %v2351
  %v2430 = vunpack.c.l.b16 %v2352
  %v2431 = vunpack.c.h.b16 %v2352
  %v2432 = vunpack.c.l.b16 %v2353
  %v2433 = vunpack.c.h.b16 %v2353
  %v2434 = vunpack.c.l.b16 %v2354
  %v2435 = vunpack.c.h.b16 %v2354
  %v2436 = vunpack.c.l.b16 %v2355
  %v2437 = vunpack.c.h.b16 %v2355
  %v2438 = vunpack.c.l.b16 %v2356
  %v2439 = vunpack.c.h.b16 %v2356
  %v2440 = vunpack.c.l.b16 %v2357
  %v2441 = vunpack.c.h.b16 %v2357
  %v2442 = vunpack.c.l.b16 %v2358
  %v2443 = vunpack.c.h.b16 %v2358
  %v2444 = vunpack.c.l.b16 %v2359
  %v2445 = vunpack.c.h.b16 %v2359
  %v2446 = vunpack.c.l.b16 %v2360
  %v2447 = vunpack.c.h.b16 %v2360
  %v2448 = vunpack.c.l.b16 %v2361
  %v2449 = vunpack.c.h.b16 %v2361
  %v2450 = vunpack.c.l.b16 %v2362
  %v2451 = vunpack.c.h.b16 %v2362
  %v2452 = vunpack.c.l.b16 %v2363
  %v2453 = vunpack.c.h.b16 %v2363
  %v2454 = vunpack.c.l.b16 %v2364
  %v2455 = vunpack.c.h.b16 %v2364
  %v2456 = vunpack.c.l.b16 %v2365
  %v2457 = vunpack.c.h.b16 %v2365
  %v2458 = vunpack.c.l.b16 %v2366
  %v2459 = vunpack.c.h.b16 %v2366
  %v2460 = vunpack.c.l.b16 %v2367
  %v2461 = vunpack.c.h.b16 %v2367
  %v2462 = vunpack.c.l.b16 %v2368
  %v2463 = vunpack.c.h.b16 %v2368
  %v2464 = vunpack.c.l.b16 %v2369
  %v2465 = vunpack.c.h.b16 %v2369
  %v2466 = vpack.c.b16 %v2406, %v2402
  %v2467 = vpack.c.b16 %v2407, %v2403
  %v2468 = vpack.c.b16 %v2408, %v2404
  %v2469 = vpack.c.b16 %v2409, %v2405
  %v2470 = vpack.c.b16 %v2414, %v2410
  %v2471 = vpack.c.b16 %v2415, %v2411
  %v2472 = vpack.c.b16 %v2416, %v2412
  %v2473 = vpack.c.b16 %v2417, %v2413
  %v2474 = vpack.c.b16 %v2422, %v2418
  %v2475 = vpack.c.b16 %v2423, %v2419
  %v2476 = vpack.c.b16 %v2424, %v2420
  %v2477 = vpack.c.b16 %v2425, %v2421
  %v2478 = vpack.c.b16 %v2430, %v2426
  %v2479 = vpack.c.b16 %v2431, %v2427
  %v2480 = vpack.c.b16 %v2432, %v2428
  %v2481 = vpack.c.b16 %v2433, %v2429
  %v2482 = vpack.c.b16 %v2438, %v2434
  %v2483 = vpack.c.b16 %v2439, %v2435
  %v2484 = vpack.c.b16 %v2440, %v2436
  %v2485 = vpack.c.b16 %v2441, %v2437
  %v2486 = vpack.c.b16 %v2446, %v2442
  %v2487 = vpack.c.b16 %v2447, %v2443
  %v2488 = vpack.c.b16 %v2448, %v2444
  %v2489 = vpack.c.b16 %v2449, %v2445
  %v2490 = vpack.c.b16 %v2454, %v2450
  %v2491 = vpack.c.b16 %v2455, %v2451
  %v2492 = vpack.c.b16 %v2456, %v2452
  %v2493 = vpack.c.b16 %v2457, %v2453
  %v2494 = vpack.c.b16 %v2462, %v2458
  %v2495 = vpack.c.b16 %v2463, %v2459
  %v2496 = vpack.c.b16 %v2464, %v2460
  %v2497 = vpack.c.b16 %v2465, %v2461
  %2530 = vmatprep.subr.bf16.mxu0 %v2467
  %2531 = vmatpush1.bf16.msra.mxu0 %v2466
  %2532 = vmatprep.subr.bf16.mxu0 %v2471
  %2533 = vmatpush1.bf16.msra.mxu0 %v2470
  %2534 = vmatprep.subr.bf16.mxu0 %v2475
  %2535 = vmatpush1.bf16.msra.mxu0 %v2474
  %2536 = vmatprep.subr.bf16.mxu0 %v2479
  %2537 = vmatpush1.bf16.msra.mxu0 %v2478
  %2538 = vmatprep.subr.bf16.mxu0 %v2483
  %2539 = vmatpush1.bf16.msra.mxu0 %v2482
  %2540 = vmatprep.subr.bf16.mxu0 %v2487
  %2541 = vmatpush1.bf16.msra.mxu0 %v2486
  %2542 = vmatprep.subr.bf16.mxu0 %v2491
  %2543 = vmatpush1.bf16.msra.mxu0 %v2490
  %2544 = vmatprep.subr.bf16.mxu0 %v2495
  %2545 = vmatpush1.bf16.msra.mxu0 %v2494
  %2546 = vmatprep.subr.bf16.mxu0 0
  %2547 = vmatpush1.bf16.msra.mxu0 0
  %2548 = vmatprep.subr.bf16.mxu0 0
  %2549 = vmatpush1.bf16.msra.mxu0 0
  %2550 = vmatprep.subr.bf16.mxu0 0
  %2551 = vmatpush1.bf16.msra.mxu0 0
  %2552 = vmatprep.subr.bf16.mxu0 0
  %2553 = vmatpush1.bf16.msra.mxu0 0
  %2554 = vmatprep.subr.bf16.mxu0 0
  %2555 = vmatpush1.bf16.msra.mxu0 0
  %2556 = vmatprep.subr.bf16.mxu0 0
  %2557 = vmatpush1.bf16.msra.mxu0 0
  %2558 = vmatprep.subr.bf16.mxu0 0
  %2559 = vmatpush1.bf16.msra.mxu0 0
  %2560 = vmatprep.subr.bf16.mxu0 0
  %2561 = vmatpush1.bf16.msra.mxu0 0
  %2562 = vmatprep.mubr.bf16.mxu0 0
  %2563 = vmatmul.mubr.bf16.gmra.mrb[0].mxu0 %v2329
  %v2564 = vpop.f32.mrb[0].mxu0
  %v2565 = vadd.f32 0.0, %v2564
  %v2566 = vpop.f32.mrb[0].mxu0
  %v2567 = vadd.f32 0.0, %v2566
  %v2568 = vpop.f32.mrb[0].mxu0
  %v2569 = vadd.f32 0.0, %v2568
  %v2570 = vpop.f32.mrb[0].mxu0
  %v2571 = vadd.f32 0.0, %v2570
  %2572 = vmatprep.mubr.bf16.mxu0 0
  %2573 = vmatmul.mubr.bf16.gmra.mrb[0].mxu0 %v2330
  %v2574 = vpop.f32.mrb[0].mxu0
  %v2575 = vadd.f32 0.0, %v2574
  %v2576 = vpop.f32.mrb[0].mxu0
  %v2577 = vadd.f32 0.0, %v2576
  %v2578 = vpop.f32.mrb[0].mxu0
  %v2579 = vadd.f32 0.0, %v2578
  %v2580 = vpop.f32.mrb[0].mxu0
  %v2581 = vadd.f32 0.0, %v2580
  %2582 = vmatprep.mubr.bf16.mxu0 0
  %2583 = vmatmul.mubr.bf16.gmra.mrb[0].mxu0 %v2331
  %v2584 = vpop.f32.mrb[0].mxu0
  %v2585 = vadd.f32 0.0, %v2584
  %v2586 = vpop.f32.mrb[0].mxu0
  %v2587 = vadd.f32 0.0, %v2586
  %v2588 = vpop.f32.mrb[0].mxu0
  %v2589 = vadd.f32 0.0, %v2588
  %v2590 = vpop.f32.mrb[0].mxu0
  %v2591 = vadd.f32 0.0, %v2590
  %2592 = vmatprep.mubr.bf16.mxu0 0
  %2593 = vmatmul.mubr.bf16.gmra.mrb[0].mxu0 %v2332
  %v2594 = vpop.f32.mrb[0].mxu0
  %v2595 = vadd.f32 0.0, %v2594
  %v2596 = vpop.f32.mrb[0].mxu0
  %v2597 = vadd.f32 0.0, %v2596
  %v2598 = vpop.f32.mrb[0].mxu0
  %v2599 = vadd.f32 0.0, %v2598
  %v2600 = vpop.f32.mrb[0].mxu0
  %v2601 = vadd.f32 0.0, %v2600
  %2602 = vmatprep.mubr.bf16.mxu0 0
  %2603 = vmatmul.mubr.bf16.gmra.mrb[0].mxu0 %v2333
  %v2604 = vpop.f32.mrb[0].mxu0
  %v2605 = vadd.f32 0.0, %v2604
  %v2606 = vpop.f32.mrb[0].mxu0
  %v2607 = vadd.f32 0.0, %v2606
  %v2608 = vpop.f32.mrb[0].mxu0
  %v2609 = vadd.f32 0.0, %v2608
  %v2610 = vpop.f32.mrb[0].mxu0
  %v2611 = vadd.f32 0.0, %v2610
  %2612 = vmatprep.mubr.bf16.mxu0 0
  %2613 = vmatmul.mubr.bf16.gmra.mrb[0].mxu0 %v2334
  %v2614 = vpop.f32.mrb[0].mxu0
  %v2615 = vadd.f32 0.0, %v2614
  %v2616 = vpop.f32.mrb[0].mxu0
  %v2617 = vadd.f32 0.0, %v2616
  %v2618 = vpop.f32.mrb[0].mxu0
  %v2619 = vadd.f32 0.0, %v2618
  %v2620 = vpop.f32.mrb[0].mxu0
  %v2621 = vadd.f32 0.0, %v2620
  %2622 = vmatprep.mubr.bf16.mxu0 0
  %2623 = vmatmul.mubr.bf16.gmra.mrb[0].mxu0 %v2335
  %v2624 = vpop.f32.mrb[0].mxu0
  %v2625 = vadd.f32 0.0, %v2624
  %v2626 = vpop.f32.mrb[0].mxu0
  %v2627 = vadd.f32 0.0, %v2626
  %v2628 = vpop.f32.mrb[0].mxu0
  %v2629 = vadd.f32 0.0, %v2628
  %v2630 = vpop.f32.mrb[0].mxu0
  %v2631 = vadd.f32 0.0, %v2630
  %2632 = vmatprep.mubr.bf16.mxu0 0
  %2633 = vmatmul.mubr.bf16.gmra.mrb[0].mxu0 %v2336
  %v2634 = vpop.f32.mrb[0].mxu0
  %v2635 = vadd.f32 0.0, %v2634
  %v2636 = vpop.f32.mrb[0].mxu0
  %v2637 = vadd.f32 0.0, %v2636
  %v2638 = vpop.f32.mrb[0].mxu0
  %v2639 = vadd.f32 0.0, %v2638
  %v2640 = vpop.f32.mrb[0].mxu0
  %v2641 = vadd.f32 0.0, %v2640
  %2642 = vdwg.mxu0
  %2643 = vmatprep.subr.bf16.mxu0 %v2469
  %2644 = vmatpush1.bf16.msra.mxu0 %v2468
  %2645 = vmatprep.subr.bf16.mxu0 %v2473
  %2646 = vmatpush1.bf16.msra.mxu0 %v2472
  %2647 = vmatprep.subr.bf16.mxu0 %v2477
  %2648 = vmatpush1.bf16.msra.mxu0 %v2476
  %2649 = vmatprep.subr.bf16.mxu0 %v2481
  %2650 = vmatpush1.bf16.msra.mxu0 %v2480
  %2651 = vmatprep.subr.bf16.mxu0 %v2485
  %2652 = vmatpush1.bf16.msra.mxu0 %v2484
  %2653 = vmatprep.subr.bf16.mxu0 %v2489
  %2654 = vmatpush1.bf16.msra.mxu0 %v2488
  %2655 = vmatprep.subr.bf16.mxu0 %v2493
  %2656 = vmatpush1.bf16.msra.mxu0 %v2492
  %2657 = vmatprep.subr.bf16.mxu0 %v2497
  %2658 = vmatpush1.bf16.msra.mxu0 %v2496
  %2659 = vmatprep.subr.bf16.mxu0 0
  %2660 = vmatpush1.bf16.msra.mxu0 0
  %2661 = vmatprep.subr.bf16.mxu0 0
  %2662 = vmatpush1.bf16.msra.mxu0 0
  %2663 = vmatprep.subr.bf16.mxu0 0
  %2664 = vmatpush1.bf16.msra.mxu0 0
  %2665 = vmatprep.subr.bf16.mxu0 0
  %2666 = vmatpush1.bf16.msra.mxu0 0
  %2667 = vmatprep.subr.bf16.mxu0 0
  %2668 = vmatpush1.bf16.msra.mxu0 0
  %2669 = vmatprep.subr.bf16.mxu0 0
  %2670 = vmatpush1.bf16.msra.mxu0 0
  %2671 = vmatprep.subr.bf16.mxu0 0
  %2672 = vmatpush1.bf16.msra.mxu0 0
  %2673 = vmatprep.subr.bf16.mxu0 0
  %2674 = vmatpush1.bf16.msra.mxu0 0
  %2675 = vmatprep.mubr.bf16.mxu0 0
  %2676 = vmatmul.mubr.bf16.gmra.mrb[0].mxu0 %v2329
  %v2677 = vpop.f32.mrb[0].mxu0
  %v2678 = vadd.f32 0.0, %v2677
  %v2679 = vpop.f32.mrb[0].mxu0
  %v2680 = vadd.f32 0.0, %v2679
  %v2681 = vpop.f32.mrb[0].mxu0
  %v2682 = vadd.f32 0.0, %v2681
  %v2683 = vpop.f32.mrb[0].mxu0
  %v2684 = vadd.f32 0.0, %v2683
  %2685 = vmatprep.mubr.bf16.mxu0 0
  %2686 = vmatmul.mubr.bf16.gmra.mrb[0].mxu0 %v2330
  %v2687 = vpop.f32.mrb[0].mxu0
  %v2688 = vadd.f32 0.0, %v2687
  %v2689 = vpop.f32.mrb[0].mxu0
  %v2690 = vadd.f32 0.0, %v2689
  %v2691 = vpop.f32.mrb[0].mxu0
  %v2692 = vadd.f32 0.0, %v2691
  %v2693 = vpop.f32.mrb[0].mxu0
  %v2694 = vadd.f32 0.0, %v2693
  %2695 = vmatprep.mubr.bf16.mxu0 0
  %2696 = vmatmul.mubr.bf16.gmra.mrb[0].mxu0 %v2331
  %v2697 = vpop.f32.mrb[0].mxu0
  %v2698 = vadd.f32 0.0, %v2697
  %v2699 = vpop.f32.mrb[0].mxu0
  %v2700 = vadd.f32 0.0, %v2699
  %v2701 = vpop.f32.mrb[0].mxu0
  %v2702 = vadd.f32 0.0, %v2701
  %v2703 = vpop.f32.mrb[0].mxu0
  %v2704 = vadd.f32 0.0, %v2703
  %2705 = vmatprep.mubr.bf16.mxu0 0
  %2706 = vmatmul.mubr.bf16.gmra.mrb[0].mxu0 %v2332
  %v2707 = vpop.f32.mrb[0].mxu0
  %v2708 = vadd.f32 0.0, %v2707
  %v2709 = vpop.f32.mrb[0].mxu0
  %v2710 = vadd.f32 0.0, %v2709
  %v2711 = vpop.f32.mrb[0].mxu0
  %v2712 = vadd.f32 0.0, %v2711
  %v2713 = vpop.f32.mrb[0].mxu0
  %v2714 = vadd.f32 0.0, %v2713
  %2715 = vmatprep.mubr.bf16.mxu0 0
  %2716 = vmatmul.mubr.bf16.gmra.mrb[0].mxu0 %v2333
  %v2717 = vpop.f32.mrb[0].mxu0
  %v2718 = vadd.f32 0.0, %v2717
  %v2719 = vpop.f32.mrb[0].mxu0
  %v2720 = vadd.f32 0.0, %v2719
  %v2721 = vpop.f32.mrb[0].mxu0
  %v2722 = vadd.f32 0.0, %v2721
  %v2723 = vpop.f32.mrb[0].mxu0
  %v2724 = vadd.f32 0.0, %v2723
  %2725 = vmatprep.mubr.bf16.mxu0 0
  %2726 = vmatmul.mubr.bf16.gmra.mrb[0].mxu0 %v2334
  %v2727 = vpop.f32.mrb[0].mxu0
  %v2728 = vadd.f32 0.0, %v2727
  %v2729 = vpop.f32.mrb[0].mxu0
  %v2730 = vadd.f32 0.0, %v2729
  %v2731 = vpop.f32.mrb[0].mxu0
  %v2732 = vadd.f32 0.0, %v2731
  %v2733 = vpop.f32.mrb[0].mxu0
  %v2734 = vadd.f32 0.0, %v2733
  %2735 = vmatprep.mubr.bf16.mxu0 0
  %2736 = vmatmul.mubr.bf16.gmra.mrb[0].mxu0 %v2335
  %v2737 = vpop.f32.mrb[0].mxu0
  %v2738 = vadd.f32 0.0, %v2737
  %v2739 = vpop.f32.mrb[0].mxu0
  %v2740 = vadd.f32 0.0, %v2739
  %v2741 = vpop.f32.mrb[0].mxu0
  %v2742 = vadd.f32 0.0, %v2741
  %v2743 = vpop.f32.mrb[0].mxu0
  %v2744 = vadd.f32 0.0, %v2743
  %2745 = vmatprep.mubr.bf16.mxu0 0
  %2746 = vmatmul.mubr.bf16.gmra.mrb[0].mxu0 %v2336
  %v2747 = vpop.f32.mrb[0].mxu0
  %v2748 = vadd.f32 0.0, %v2747
  %v2749 = vpop.f32.mrb[0].mxu0
  %v2750 = vadd.f32 0.0, %v2749
  %v2751 = vpop.f32.mrb[0].mxu0
  %v2752 = vadd.f32 0.0, %v2751
  %v2753 = vpop.f32.mrb[0].mxu0
  %v2754 = vadd.f32 0.0, %v2753
  %2755 = vdwg.mxu0
  %v2756 = vadd.f32 %v2138, %v2565
  %v2757 = vadd.f32 %v2140, %v2567
  %v2758 = vadd.f32 %v2251, %v2678
  %v2759 = vadd.f32 %v2253, %v2680
  %v2760 = vadd.f32 %v2142, %v2569
  %v2761 = vadd.f32 %v2144, %v2571
  %v2762 = vadd.f32 %v2255, %v2682
  %v2763 = vadd.f32 %v2257, %v2684
  %v2764 = vadd.f32 %v2148, %v2575
  %v2765 = vadd.f32 %v2150, %v2577
  %v2766 = vadd.f32 %v2261, %v2688
  %v2767 = vadd.f32 %v2263, %v2690
  %v2768 = vadd.f32 %v2152, %v2579
  %v2769 = vadd.f32 %v2154, %v2581
  %v2770 = vadd.f32 %v2265, %v2692
  %v2771 = vadd.f32 %v2267, %v2694
  %v2772 = vadd.f32 %v2158, %v2585
  %v2773 = vadd.f32 %v2160, %v2587
  %v2774 = vadd.f32 %v2271, %v2698
  %v2775 = vadd.f32 %v2273, %v2700
  %v2776 = vadd.f32 %v2162, %v2589
  %v2777 = vadd.f32 %v2164, %v2591
  %v2778 = vadd.f32 %v2275, %v2702
  %v2779 = vadd.f32 %v2277, %v2704
  %v2780 = vadd.f32 %v2168, %v2595
  %v2781 = vadd.f32 %v2170, %v2597
  %v2782 = vadd.f32 %v2281, %v2708
  %v2783 = vadd.f32 %v2283, %v2710
  %v2784 = vadd.f32 %v2172, %v2599
  %v2785 = vadd.f32 %v2174, %v2601
  %v2786 = vadd.f32 %v2285, %v2712
  %v2787 = vadd.f32 %v2287, %v2714
  %v2788 = vadd.f32 %v2178, %v2605
  %v2789 = vadd.f32 %v2180, %v2607
  %v2790 = vadd.f32 %v2291, %v2718
  %v2791 = vadd.f32 %v2293, %v2720
  %v2792 = vadd.f32 %v2182, %v2609
  %v2793 = vadd.f32 %v2184, %v2611
  %v2794 = vadd.f32 %v2295, %v2722
  %v2795 = vadd.f32 %v2297, %v2724
  %v2796 = vadd.f32 %v2188, %v2615
  %v2797 = vadd.f32 %v2190, %v2617
  %v2798 = vadd.f32 %v2301, %v2728
  %v2799 = vadd.f32 %v2303, %v2730
  %v2800 = vadd.f32 %v2192, %v2619
  %v2801 = vadd.f32 %v2194, %v2621
  %v2802 = vadd.f32 %v2305, %v2732
  %v2803 = vadd.f32 %v2307, %v2734
  %v2804 = vadd.f32 %v2198, %v2625
  %v2805 = vadd.f32 %v2200, %v2627
  %v2806 = vadd.f32 %v2311, %v2738
  %v2807 = vadd.f32 %v2313, %v2740
  %v2808 = vadd.f32 %v2202, %v2629
  %v2809 = vadd.f32 %v2204, %v2631
  %v2810 = vadd.f32 %v2315, %v2742
  %v2811 = vadd.f32 %v2317, %v2744
  %v2812 = vadd.f32 %v2208, %v2635
  %v2813 = vadd.f32 %v2210, %v2637
  %v2814 = vadd.f32 %v2321, %v2748
  %v2815 = vadd.f32 %v2323, %v2750
  %v2816 = vadd.f32 %v2212, %v2639
  %v2817 = vadd.f32 %v2214, %v2641
  %v2818 = vadd.f32 %v2325, %v2752
  %v2819 = vadd.f32 %v2327, %v2754
  %v2820 = vld [vmem:[#allocation2 + $0x70] sm:$0xff]
  %v2821 = vld [vmem:[#allocation2 + $0x78] sm:$0xff]
  %v2822 = vld [vmem:[#allocation2 + $0x80] sm:$0xff]
  %v2823 = vld [vmem:[#allocation2 + $0x88] sm:$0xff]
  %v2824 = vld [vmem:[#allocation2 + $0x90] sm:$0xff]
  %v2825 = vld [vmem:[#allocation2 + $0x98] sm:$0xff]
  %v2826 = vld [vmem:[#allocation2 + $0xa0] sm:$0xff]
  %v2827 = vld [vmem:[#allocation2 + $0xa8] sm:$0xff]
  %s2828 = scalar_lea.vmem %s3, 768
  %v2829 = vld [vmem:[%s2828] sm:$0xff]
  %v2830 = vld [vmem:[%s2828 + $0x8] sm:$0xff]
  %v2831 = vld [vmem:[%s2828 + $0x10] sm:$0xff]
  %v2832 = vld [vmem:[%s2828 + $0x18] sm:$0xff]
  %v2833 = vld [vmem:[%s2828 + $0x20] sm:$0xff]
  %v2834 = vld [vmem:[%s2828 + $0x28] sm:$0xff]
  %v2835 = vld [vmem:[%s2828 + $0x30] sm:$0xff]
  %v2836 = vld [vmem:[%s2828 + $0x38] sm:$0xff]
  %v2837 = vld [vmem:[%s2828 + $0x40] sm:$0xff]
  %v2838 = vld [vmem:[%s2828 + $0x48] sm:$0xff]
  %v2839 = vld [vmem:[%s2828 + $0x50] sm:$0xff]
  %v2840 = vld [vmem:[%s2828 + $0x58] sm:$0xff]
  %v2841 = vld [vmem:[%s2828 + $0x60] sm:$0xff]
  %v2842 = vld [vmem:[%s2828 + $0x68] sm:$0xff]
  %v2843 = vld [vmem:[%s2828 + $0x70] sm:$0xff]
  %v2844 = vld [vmem:[%s2828 + $0x78] sm:$0xff]
  %v2845 = vld [vmem:[%s2828 + $0x80] sm:$0xff]
  %v2846 = vld [vmem:[%s2828 + $0x88] sm:$0xff]
  %v2847 = vld [vmem:[%s2828 + $0x90] sm:$0xff]
  %v2848 = vld [vmem:[%s2828 + $0x98] sm:$0xff]
  %v2849 = vld [vmem:[%s2828 + $0xa0] sm:$0xff]
  %v2850 = vld [vmem:[%s2828 + $0xa8] sm:$0xff]
  %v2851 = vld [vmem:[%s2828 + $0xb0] sm:$0xff]
  %v2852 = vld [vmem:[%s2828 + $0xb8] sm:$0xff]
  %v2853 = vld [vmem:[%s2828 + $0xc0] sm:$0xff]
  %v2854 = vld [vmem:[%s2828 + $0xc8] sm:$0xff]
  %v2855 = vld [vmem:[%s2828 + $0xd0] sm:$0xff]
  %v2856 = vld [vmem:[%s2828 + $0xd8] sm:$0xff]
  %v2857 = vld [vmem:[%s2828 + $0xe0] sm:$0xff]
  %v2858 = vld [vmem:[%s2828 + $0xe8] sm:$0xff]
  %v2859 = vld [vmem:[%s2828 + $0xf0] sm:$0xff]
  %v2860 = vld [vmem:[%s2828 + $0xf8] sm:$0xff]
  %v2893 = vunpack.c.l.b16 %v2829
  %v2894 = vunpack.c.h.b16 %v2829
  %v2895 = vunpack.c.l.b16 %v2830
  %v2896 = vunpack.c.h.b16 %v2830
  %v2897 = vunpack.c.l.b16 %v2831
  %v2898 = vunpack.c.h.b16 %v2831
  %v2899 = vunpack.c.l.b16 %v2832
  %v2900 = vunpack.c.h.b16 %v2832
  %v2901 = vunpack.c.l.b16 %v2833
  %v2902 = vunpack.c.h.b16 %v2833
  %v2903 = vunpack.c.l.b16 %v2834
  %v2904 = vunpack.c.h.b16 %v2834
  %v2905 = vunpack.c.l.b16 %v2835
  %v2906 = vunpack.c.h.b16 %v2835
  %v2907 = vunpack.c.l.b16 %v2836
  %v2908 = vunpack.c.h.b16 %v2836
  %v2909 = vunpack.c.l.b16 %v2837
  %v2910 = vunpack.c.h.b16 %v2837
  %v2911 = vunpack.c.l.b16 %v2838
  %v2912 = vunpack.c.h.b16 %v2838
  %v2913 = vunpack.c.l.b16 %v2839
  %v2914 = vunpack.c.h.b16 %v2839
  %v2915 = vunpack.c.l.b16 %v2840
  %v2916 = vunpack.c.h.b16 %v2840
  %v2917 = vunpack.c.l.b16 %v2841
  %v2918 = vunpack.c.h.b16 %v2841
  %v2919 = vunpack.c.l.b16 %v2842
  %v2920 = vunpack.c.h.b16 %v2842
  %v2921 = vunpack.c.l.b16 %v2843
  %v2922 = vunpack.c.h.b16 %v2843
  %v2923 = vunpack.c.l.b16 %v2844
  %v2924 = vunpack.c.h.b16 %v2844
  %v2925 = vunpack.c.l.b16 %v2845
  %v2926 = vunpack.c.h.b16 %v2845
  %v2927 = vunpack.c.l.b16 %v2846
  %v2928 = vunpack.c.h.b16 %v2846
  %v2929 = vunpack.c.l.b16 %v2847
  %v2930 = vunpack.c.h.b16 %v2847
  %v2931 = vunpack.c.l.b16 %v2848
  %v2932 = vunpack.c.h.b16 %v2848
  %v2933 = vunpack.c.l.b16 %v2849
  %v2934 = vunpack.c.h.b16 %v2849
  %v2935 = vunpack.c.l.b16 %v2850
  %v2936 = vunpack.c.h.b16 %v2850
  %v2937 = vunpack.c.l.b16 %v2851
  %v2938 = vunpack.c.h.b16 %v2851
  %v2939 = vunpack.c.l.b16 %v2852
  %v2940 = vunpack.c.h.b16 %v2852
  %v2941 = vunpack.c.l.b16 %v2853
  %v2942 = vunpack.c.h.b16 %v2853
  %v2943 = vunpack.c.l.b16 %v2854
  %v2944 = vunpack.c.h.b16 %v2854
  %v2945 = vunpack.c.l.b16 %v2855
  %v2946 = vunpack.c.h.b16 %v2855
  %v2947 = vunpack.c.l.b16 %v2856
  %v2948 = vunpack.c.h.b16 %v2856
  %v2949 = vunpack.c.l.b16 %v2857
  %v2950 = vunpack.c.h.b16 %v2857
  %v2951 = vunpack.c.l.b16 %v2858
  %v2952 = vunpack.c.h.b16 %v2858
  %v2953 = vunpack.c.l.b16 %v2859
  %v2954 = vunpack.c.h.b16 %v2859
  %v2955 = vunpack.c.l.b16 %v2860
  %v2956 = vunpack.c.h.b16 %v2860
  %v2957 = vpack.c.b16 %v2897, %v2893
  %v2958 = vpack.c.b16 %v2898, %v2894
  %v2959 = vpack.c.b16 %v2899, %v2895
  %v2960 = vpack.c.b16 %v2900, %v2896
  %v2961 = vpack.c.b16 %v2905, %v2901
  %v2962 = vpack.c.b16 %v2906, %v2902
  %v2963 = vpack.c.b16 %v2907, %v2903
  %v2964 = vpack.c.b16 %v2908, %v2904
  %v2965 = vpack.c.b16 %v2913, %v2909
  %v2966 = vpack.c.b16 %v2914, %v2910
  %v2967 = vpack.c.b16 %v2915, %v2911
  %v2968 = vpack.c.b16 %v2916, %v2912
  %v2969 = vpack.c.b16 %v2921, %v2917
  %v2970 = vpack.c.b16 %v2922, %v2918
  %v2971 = vpack.c.b16 %v2923, %v2919
  %v2972 = vpack.c.b16 %v2924, %v2920
  %v2973 = vpack.c.b16 %v2929, %v2925
  %v2974 = vpack.c.b16 %v2930, %v2926
  %v2975 = vpack.c.b16 %v2931, %v2927
  %v2976 = vpack.c.b16 %v2932, %v2928
  %v2977 = vpack.c.b16 %v2937, %v2933
  %v2978 = vpack.c.b16 %v2938, %v2934
  %v2979 = vpack.c.b16 %v2939, %v2935
  %v2980 = vpack.c.b16 %v2940, %v2936
  %v2981 = vpack.c.b16 %v2945, %v2941
  %v2982 = vpack.c.b16 %v2946, %v2942
  %v2983 = vpack.c.b16 %v2947, %v2943
  %v2984 = vpack.c.b16 %v2948, %v2944
  %v2985 = vpack.c.b16 %v2953, %v2949
  %v2986 = vpack.c.b16 %v2954, %v2950
  %v2987 = vpack.c.b16 %v2955, %v2951
  %v2988 = vpack.c.b16 %v2956, %v2952
  %3021 = vmatprep.subr.bf16.mxu0 %v2958
  %3022 = vmatpush1.bf16.msra.mxu0 %v2957
  %3023 = vmatprep.subr.bf16.mxu0 %v2962
  %3024 = vmatpush1.bf16.msra.mxu0 %v2961
  %3025 = vmatprep.subr.bf16.mxu0 %v2966
  %3026 = vmatpush1.bf16.msra.mxu0 %v2965
  %3027 = vmatprep.subr.bf16.mxu0 %v2970
  %3028 = vmatpush1.bf16.msra.mxu0 %v2969
  %3029 = vmatprep.subr.bf16.mxu0 %v2974
  %3030 = vmatpush1.bf16.msra.mxu0 %v2973
  %3031 = vmatprep.subr.bf16.mxu0 %v2978
  %3032 = vmatpush1.bf16.msra.mxu0 %v2977
  %3033 = vmatprep.subr.bf16.mxu0 %v2982
  %3034 = vmatpush1.bf16.msra.mxu0 %v2981
  %3035 = vmatprep.subr.bf16.mxu0 %v2986
  %3036 = vmatpush1.bf16.msra.mxu0 %v2985
  %3037 = vmatprep.subr.bf16.mxu0 0
  %3038 = vmatpush1.bf16.msra.mxu0 0
  %3039 = vmatprep.subr.bf16.mxu0 0
  %3040 = vmatpush1.bf16.msra.mxu0 0
  %3041 = vmatprep.subr.bf16.mxu0 0
  %3042 = vmatpush1.bf16.msra.mxu0 0
  %3043 = vmatprep.subr.bf16.mxu0 0
  %3044 = vmatpush1.bf16.msra.mxu0 0
  %3045 = vmatprep.subr.bf16.mxu0 0
  %3046 = vmatpush1.bf16.msra.mxu0 0
  %3047 = vmatprep.subr.bf16.mxu0 0
  %3048 = vmatpush1.bf16.msra.mxu0 0
  %3049 = vmatprep.subr.bf16.mxu0 0
  %3050 = vmatpush1.bf16.msra.mxu0 0
  %3051 = vmatprep.subr.bf16.mxu0 0
  %3052 = vmatpush1.bf16.msra.mxu0 0
  %3053 = vmatprep.mubr.bf16.mxu0 0
  %3054 = vmatmul.mubr.bf16.gmra.mrb[0].mxu0 %v2820
  %v3055 = vpop.f32.mrb[0].mxu0
  %v3056 = vadd.f32 0.0, %v3055
  %v3057 = vpop.f32.mrb[0].mxu0
  %v3058 = vadd.f32 0.0, %v3057
  %v3059 = vpop.f32.mrb[0].mxu0
  %v3060 = vadd.f32 0.0, %v3059
  %v3061 = vpop.f32.mrb[0].mxu0
  %v3062 = vadd.f32 0.0, %v3061
  %3063 = vmatprep.mubr.bf16.mxu0 0
  %3064 = vmatmul.mubr.bf16.gmra.mrb[0].mxu0 %v2821
  %v3065 = vpop.f32.mrb[0].mxu0
  %v3066 = vadd.f32 0.0, %v3065
  %v3067 = vpop.f32.mrb[0].mxu0
  %v3068 = vadd.f32 0.0, %v3067
  %v3069 = vpop.f32.mrb[0].mxu0
  %v3070 = vadd.f32 0.0, %v3069
  %v3071 = vpop.f32.mrb[0].mxu0
  %v3072 = vadd.f32 0.0, %v3071
  %3073 = vmatprep.mubr.bf16.mxu0 0
  %3074 = vmatmul.mubr.bf16.gmra.mrb[0].mxu0 %v2822
  %v3075 = vpop.f32.mrb[0].mxu0
  %v3076 = vadd.f32 0.0, %v3075
  %v3077 = vpop.f32.mrb[0].mxu0
  %v3078 = vadd.f32 0.0, %v3077
  %v3079 = vpop.f32.mrb[0].mxu0
  %v3080 = vadd.f32 0.0, %v3079
  %v3081 = vpop.f32.mrb[0].mxu0
  %v3082 = vadd.f32 0.0, %v3081
  %3083 = vmatprep.mubr.bf16.mxu0 0
  %3084 = vmatmul.mubr.bf16.gmra.mrb[0].mxu0 %v2823
  %v3085 = vpop.f32.mrb[0].mxu0
  %v3086 = vadd.f32 0.0, %v3085
  %v3087 = vpop.f32.mrb[0].mxu0
  %v3088 = vadd.f32 0.0, %v3087
  %v3089 = vpop.f32.mrb[0].mxu0
  %v3090 = vadd.f32 0.0, %v3089
  %v3091 = vpop.f32.mrb[0].mxu0
  %v3092 = vadd.f32 0.0, %v3091
  %3093 = vmatprep.mubr.bf16.mxu0 0
  %3094 = vmatmul.mubr.bf16.gmra.mrb[0].mxu0 %v2824
  %v3095 = vpop.f32.mrb[0].mxu0
  %v3096 = vadd.f32 0.0, %v3095
  %v3097 = vpop.f32.mrb[0].mxu0
  %v3098 = vadd.f32 0.0, %v3097
  %v3099 = vpop.f32.mrb[0].mxu0
  %v3100 = vadd.f32 0.0, %v3099
  %v3101 = vpop.f32.mrb[0].mxu0
  %v3102 = vadd.f32 0.0, %v3101
  %3103 = vmatprep.mubr.bf16.mxu0 0
  %3104 = vmatmul.mubr.bf16.gmra.mrb[0].mxu0 %v2825
  %v3105 = vpop.f32.mrb[0].mxu0
  %v3106 = vadd.f32 0.0, %v3105
  %v3107 = vpop.f32.mrb[0].mxu0
  %v3108 = vadd.f32 0.0, %v3107
  %v3109 = vpop.f32.mrb[0].mxu0
  %v3110 = vadd.f32 0.0, %v3109
  %v3111 = vpop.f32.mrb[0].mxu0
  %v3112 = vadd.f32 0.0, %v3111
  %3113 = vmatprep.mubr.bf16.mxu0 0
  %3114 = vmatmul.mubr.bf16.gmra.mrb[0].mxu0 %v2826
  %v3115 = vpop.f32.mrb[0].mxu0
  %v3116 = vadd.f32 0.0, %v3115
  %v3117 = vpop.f32.mrb[0].mxu0
  %v3118 = vadd.f32 0.0, %v3117
  %v3119 = vpop.f32.mrb[0].mxu0
  %v3120 = vadd.f32 0.0, %v3119
  %v3121 = vpop.f32.mrb[0].mxu0
  %v3122 = vadd.f32 0.0, %v3121
  %3123 = vmatprep.mubr.bf16.mxu0 0
  %3124 = vmatmul.mubr.bf16.gmra.mrb[0].mxu0 %v2827
  %v3125 = vpop.f32.mrb[0].mxu0
  %v3126 = vadd.f32 0.0, %v3125
  %v3127 = vpop.f32.mrb[0].mxu0
  %v3128 = vadd.f32 0.0, %v3127
  %v3129 = vpop.f32.mrb[0].mxu0
  %v3130 = vadd.f32 0.0, %v3129
  %v3131 = vpop.f32.mrb[0].mxu0
  %v3132 = vadd.f32 0.0, %v3131
  %3133 = vdwg.mxu0
  %3134 = vmatprep.subr.bf16.mxu0 %v2960
  %3135 = vmatpush1.bf16.msra.mxu0 %v2959
  %3136 = vmatprep.subr.bf16.mxu0 %v2964
  %3137 = vmatpush1.bf16.msra.mxu0 %v2963
  %3138 = vmatprep.subr.bf16.mxu0 %v2968
  %3139 = vmatpush1.bf16.msra.mxu0 %v2967
  %3140 = vmatprep.subr.bf16.mxu0 %v2972
  %3141 = vmatpush1.bf16.msra.mxu0 %v2971
  %3142 = vmatprep.subr.bf16.mxu0 %v2976
  %3143 = vmatpush1.bf16.msra.mxu0 %v2975
  %3144 = vmatprep.subr.bf16.mxu0 %v2980
  %3145 = vmatpush1.bf16.msra.mxu0 %v2979
  %3146 = vmatprep.subr.bf16.mxu0 %v2984
  %3147 = vmatpush1.bf16.msra.mxu0 %v2983
  %3148 = vmatprep.subr.bf16.mxu0 %v2988
  %3149 = vmatpush1.bf16.msra.mxu0 %v2987
  %3150 = vmatprep.subr.bf16.mxu0 0
  %3151 = vmatpush1.bf16.msra.mxu0 0
  %3152 = vmatprep.subr.bf16.mxu0 0
  %3153 = vmatpush1.bf16.msra.mxu0 0
  %3154 = vmatprep.subr.bf16.mxu0 0
  %3155 = vmatpush1.bf16.msra.mxu0 0
  %3156 = vmatprep.subr.bf16.mxu0 0
  %3157 = vmatpush1.bf16.msra.mxu0 0
  %3158 = vmatprep.subr.bf16.mxu0 0
  %3159 = vmatpush1.bf16.msra.mxu0 0
  %3160 = vmatprep.subr.bf16.mxu0 0
  %3161 = vmatpush1.bf16.msra.mxu0 0
  %3162 = vmatprep.subr.bf16.mxu0 0
  %3163 = vmatpush1.bf16.msra.mxu0 0
  %3164 = vmatprep.subr.bf16.mxu0 0
  %3165 = vmatpush1.bf16.msra.mxu0 0
  %3166 = vmatprep.mubr.bf16.mxu0 0
  %3167 = vmatmul.mubr.bf16.gmra.mrb[0].mxu0 %v2820
  %v3168 = vpop.f32.mrb[0].mxu0
  %v3169 = vadd.f32 0.0, %v3168
  %v3170 = vpop.f32.mrb[0].mxu0
  %v3171 = vadd.f32 0.0, %v3170
  %v3172 = vpop.f32.mrb[0].mxu0
  %v3173 = vadd.f32 0.0, %v3172
  %v3174 = vpop.f32.mrb[0].mxu0
  %v3175 = vadd.f32 0.0, %v3174
  %3176 = vmatprep.mubr.bf16.mxu0 0
  %3177 = vmatmul.mubr.bf16.gmra.mrb[0].mxu0 %v2821
  %v3178 = vpop.f32.mrb[0].mxu0
  %v3179 = vadd.f32 0.0, %v3178
  %v3180 = vpop.f32.mrb[0].mxu0
  %v3181 = vadd.f32 0.0, %v3180
  %v3182 = vpop.f32.mrb[0].mxu0
  %v3183 = vadd.f32 0.0, %v3182
  %v3184 = vpop.f32.mrb[0].mxu0
  %v3185 = vadd.f32 0.0, %v3184
  %3186 = vmatprep.mubr.bf16.mxu0 0
  %3187 = vmatmul.mubr.bf16.gmra.mrb[0].mxu0 %v2822
  %v3188 = vpop.f32.mrb[0].mxu0
  %v3189 = vadd.f32 0.0, %v3188
  %v3190 = vpop.f32.mrb[0].mxu0
  %v3191 = vadd.f32 0.0, %v3190
  %v3192 = vpop.f32.mrb[0].mxu0
  %v3193 = vadd.f32 0.0, %v3192
  %v3194 = vpop.f32.mrb[0].mxu0
  %v3195 = vadd.f32 0.0, %v3194
  %3196 = vmatprep.mubr.bf16.mxu0 0
  %3197 = vmatmul.mubr.bf16.gmra.mrb[0].mxu0 %v2823
  %v3198 = vpop.f32.mrb[0].mxu0
  %v3199 = vadd.f32 0.0, %v3198
  %v3200 = vpop.f32.mrb[0].mxu0
  %v3201 = vadd.f32 0.0, %v3200
  %v3202 = vpop.f32.mrb[0].mxu0
  %v3203 = vadd.f32 0.0, %v3202
  %v3204 = vpop.f32.mrb[0].mxu0
  %v3205 = vadd.f32 0.0, %v3204
  %3206 = vmatprep.mubr.bf16.mxu0 0
  %3207 = vmatmul.mubr.bf16.gmra.mrb[0].mxu0 %v2824
  %v3208 = vpop.f32.mrb[0].mxu0
  %v3209 = vadd.f32 0.0, %v3208
  %v3210 = vpop.f32.mrb[0].mxu0
  %v3211 = vadd.f32 0.0, %v3210
  %v3212 = vpop.f32.mrb[0].mxu0
  %v3213 = vadd.f32 0.0, %v3212
  %v3214 = vpop.f32.mrb[0].mxu0
  %v3215 = vadd.f32 0.0, %v3214
  %3216 = vmatprep.mubr.bf16.mxu0 0
  %3217 = vmatmul.mubr.bf16.gmra.mrb[0].mxu0 %v2825
  %v3218 = vpop.f32.mrb[0].mxu0
  %v3219 = vadd.f32 0.0, %v3218
  %v3220 = vpop.f32.mrb[0].mxu0
  %v3221 = vadd.f32 0.0, %v3220
  %v3222 = vpop.f32.mrb[0].mxu0
  %v3223 = vadd.f32 0.0, %v3222
  %v3224 = vpop.f32.mrb[0].mxu0
  %v3225 = vadd.f32 0.0, %v3224
  %3226 = vmatprep.mubr.bf16.mxu0 0
  %3227 = vmatmul.mubr.bf16.gmra.mrb[0].mxu0 %v2826
  %v3228 = vpop.f32.mrb[0].mxu0
  %v3229 = vadd.f32 0.0, %v3228
  %v3230 = vpop.f32.mrb[0].mxu0
  %v3231 = vadd.f32 0.0, %v3230
  %v3232 = vpop.f32.mrb[0].mxu0
  %v3233 = vadd.f32 0.0, %v3232
  %v3234 = vpop.f32.mrb[0].mxu0
  %v3235 = vadd.f32 0.0, %v3234
  %3236 = vmatprep.mubr.bf16.mxu0 0
  %3237 = vmatmul.mubr.bf16.gmra.mrb[0].mxu0 %v2827
  %v3238 = vpop.f32.mrb[0].mxu0
  %v3239 = vadd.f32 0.0, %v3238
  %v3240 = vpop.f32.mrb[0].mxu0
  %v3241 = vadd.f32 0.0, %v3240
  %v3242 = vpop.f32.mrb[0].mxu0
  %v3243 = vadd.f32 0.0, %v3242
  %v3244 = vpop.f32.mrb[0].mxu0
  %v3245 = vadd.f32 0.0, %v3244
  %3246 = vdwg.mxu0
  %v3247 = vadd.f32 %v2756, %v3056
  %v3248 = vadd.f32 %v2757, %v3058
  %v3249 = vadd.f32 %v2758, %v3169
  %v3250 = vadd.f32 %v2759, %v3171
  %v3251 = vadd.f32 %v2760, %v3060
  %v3252 = vadd.f32 %v2761, %v3062
  %v3253 = vadd.f32 %v2762, %v3173
  %v3254 = vadd.f32 %v2763, %v3175
  %v3255 = vadd.f32 %v2764, %v3066
  %v3256 = vadd.f32 %v2765, %v3068
  %v3257 = vadd.f32 %v2766, %v3179
  %v3258 = vadd.f32 %v2767, %v3181
  %v3259 = vadd.f32 %v2768, %v3070
  %v3260 = vadd.f32 %v2769, %v3072
  %v3261 = vadd.f32 %v2770, %v3183
  %v3262 = vadd.f32 %v2771, %v3185
  %v3263 = vadd.f32 %v2772, %v3076
  %v3264 = vadd.f32 %v2773, %v3078
  %v3265 = vadd.f32 %v2774, %v3189
  %v3266 = vadd.f32 %v2775, %v3191
  %v3267 = vadd.f32 %v2776, %v3080
  %v3268 = vadd.f32 %v2777, %v3082
  %v3269 = vadd.f32 %v2778, %v3193
  %v3270 = vadd.f32 %v2779, %v3195
  %v3271 = vadd.f32 %v2780, %v3086
  %v3272 = vadd.f32 %v2781, %v3088
  %v3273 = vadd.f32 %v2782, %v3199
  %v3274 = vadd.f32 %v2783, %v3201
  %v3275 = vadd.f32 %v2784, %v3090
  %v3276 = vadd.f32 %v2785, %v3092
  %v3277 = vadd.f32 %v2786, %v3203
  %v3278 = vadd.f32 %v2787, %v3205
  %v3279 = vadd.f32 %v2788, %v3096
  %v3280 = vadd.f32 %v2789, %v3098
  %v3281 = vadd.f32 %v2790, %v3209
  %v3282 = vadd.f32 %v2791, %v3211
  %v3283 = vadd.f32 %v2792, %v3100
  %v3284 = vadd.f32 %v2793, %v3102
  %v3285 = vadd.f32 %v2794, %v3213
  %v3286 = vadd.f32 %v2795, %v3215
  %v3287 = vadd.f32 %v2796, %v3106
  %v3288 = vadd.f32 %v2797, %v3108
  %v3289 = vadd.f32 %v2798, %v3219
  %v3290 = vadd.f32 %v2799, %v3221
  %v3291 = vadd.f32 %v2800, %v3110
  %v3292 = vadd.f32 %v2801, %v3112
  %v3293 = vadd.f32 %v2802, %v3223
  %v3294 = vadd.f32 %v2803, %v3225
  %v3295 = vadd.f32 %v2804, %v3116
  %v3296 = vadd.f32 %v2805, %v3118
  %v3297 = vadd.f32 %v2806, %v3229
  %v3298 = vadd.f32 %v2807, %v3231
  %v3299 = vadd.f32 %v2808, %v3120
  %v3300 = vadd.f32 %v2809, %v3122
  %v3301 = vadd.f32 %v2810, %v3233
  %v3302 = vadd.f32 %v2811, %v3235
  %v3303 = vadd.f32 %v2812, %v3126
  %v3304 = vadd.f32 %v2813, %v3128
  %v3305 = vadd.f32 %v2814, %v3239
  %v3306 = vadd.f32 %v2815, %v3241
  %v3307 = vadd.f32 %v2816, %v3130
  %v3308 = vadd.f32 %v2817, %v3132
  %v3309 = vadd.f32 %v2818, %v3243
  %v3310 = vadd.f32 %v2819, %v3245
  %v3311 = vld [vmem:[#allocation2 + $0x20] sm:$0xff]
  %v3312 = vld [vmem:[#allocation2 + $0x28] sm:$0xff]
  %v3313 = vld [vmem:[#allocation2 + $0x30] sm:$0xff]
  %v3314 = vld [vmem:[#allocation2 + $0x38] sm:$0xff]
  %v3315 = vld [vmem:[#allocation2 + $0x40] sm:$0xff]
  %v3316 = vld [vmem:[#allocation2 + $0x48] sm:$0xff]
  %v3317 = vld [vmem:[#allocation2 + $0x50] sm:$0xff]
  %v3318 = vld [vmem:[#allocation2 + $0x58] sm:$0xff]
  %s3319 = scalar_lea.vmem %s3, 1024
  %v3320 = vld [vmem:[%s3319] sm:$0xff]
  %v3321 = vld [vmem:[%s3319 + $0x8] sm:$0xff]
  %v3322 = vld [vmem:[%s3319 + $0x10] sm:$0xff]
  %v3323 = vld [vmem:[%s3319 + $0x18] sm:$0xff]
  %v3324 = vld [vmem:[%s3319 + $0x20] sm:$0xff]
  %v3325 = vld [vmem:[%s3319 + $0x28] sm:$0xff]
  %v3326 = vld [vmem:[%s3319 + $0x30] sm:$0xff]
  %v3327 = vld [vmem:[%s3319 + $0x38] sm:$0xff]
  %v3328 = vld [vmem:[%s3319 + $0x40] sm:$0xff]
  %v3329 = vld [vmem:[%s3319 + $0x48] sm:$0xff]
  %v3330 = vld [vmem:[%s3319 + $0x50] sm:$0xff]
  %v3331 = vld [vmem:[%s3319 + $0x58] sm:$0xff]
  %v3332 = vld [vmem:[%s3319 + $0x60] sm:$0xff]
  %v3333 = vld [vmem:[%s3319 + $0x68] sm:$0xff]
  %v3334 = vld [vmem:[%s3319 + $0x70] sm:$0xff]
  %v3335 = vld [vmem:[%s3319 + $0x78] sm:$0xff]
  %v3336 = vld [vmem:[%s3319 + $0x80] sm:$0xff]
  %v3337 = vld [vmem:[%s3319 + $0x88] sm:$0xff]
  %v3338 = vld [vmem:[%s3319 + $0x90] sm:$0xff]
  %v3339 = vld [vmem:[%s3319 + $0x98] sm:$0xff]
  %v3340 = vld [vmem:[%s3319 + $0xa0] sm:$0xff]
  %v3341 = vld [vmem:[%s3319 + $0xa8] sm:$0xff]
  %v3342 = vld [vmem:[%s3319 + $0xb0] sm:$0xff]
  %v3343 = vld [vmem:[%s3319 + $0xb8] sm:$0xff]
  %v3344 = vld [vmem:[%s3319 + $0xc0] sm:$0xff]
  %v3345 = vld [vmem:[%s3319 + $0xc8] sm:$0xff]
  %v3346 = vld [vmem:[%s3319 + $0xd0] sm:$0xff]
  %v3347 = vld [vmem:[%s3319 + $0xd8] sm:$0xff]
  %v3348 = vld [vmem:[%s3319 + $0xe0] sm:$0xff]
  %v3349 = vld [vmem:[%s3319 + $0xe8] sm:$0xff]
  %v3350 = vld [vmem:[%s3319 + $0xf0] sm:$0xff]
  %v3351 = vld [vmem:[%s3319 + $0xf8] sm:$0xff]
  %v3384 = vunpack.c.l.b16 %v3320
  %v3385 = vunpack.c.h.b16 %v3320
  %v3386 = vunpack.c.l.b16 %v3321
  %v3387 = vunpack.c.h.b16 %v3321
  %v3388 = vunpack.c.l.b16 %v3322
  %v3389 = vunpack.c.h.b16 %v3322
  %v3390 = vunpack.c.l.b16 %v3323
  %v3391 = vunpack.c.h.b16 %v3323
  %v3392 = vunpack.c.l.b16 %v3324
  %v3393 = vunpack.c.h.b16 %v3324
  %v3394 = vunpack.c.l.b16 %v3325
  %v3395 = vunpack.c.h.b16 %v3325
  %v3396 = vunpack.c.l.b16 %v3326
  %v3397 = vunpack.c.h.b16 %v3326
  %v3398 = vunpack.c.l.b16 %v3327
  %v3399 = vunpack.c.h.b16 %v3327
  %v3400 = vunpack.c.l.b16 %v3328
  %v3401 = vunpack.c.h.b16 %v3328
  %v3402 = vunpack.c.l.b16 %v3329
  %v3403 = vunpack.c.h.b16 %v3329
  %v3404 = vunpack.c.l.b16 %v3330
  %v3405 = vunpack.c.h.b16 %v3330
  %v3406 = vunpack.c.l.b16 %v3331
  %v3407 = vunpack.c.h.b16 %v3331
  %v3408 = vunpack.c.l.b16 %v3332
  %v3409 = vunpack.c.h.b16 %v3332
  %v3410 = vunpack.c.l.b16 %v3333
  %v3411 = vunpack.c.h.b16 %v3333
  %v3412 = vunpack.c.l.b16 %v3334
  %v3413 = vunpack.c.h.b16 %v3334
  %v3414 = vunpack.c.l.b16 %v3335
  %v3415 = vunpack.c.h.b16 %v3335
  %v3416 = vunpack.c.l.b16 %v3336
  %v3417 = vunpack.c.h.b16 %v3336
  %v3418 = vunpack.c.l.b16 %v3337
  %v3419 = vunpack.c.h.b16 %v3337
  %v3420 = vunpack.c.l.b16 %v3338
  %v3421 = vunpack.c.h.b16 %v3338
  %v3422 = vunpack.c.l.b16 %v3339
  %v3423 = vunpack.c.h.b16 %v3339
  %v3424 = vunpack.c.l.b16 %v3340
  %v3425 = vunpack.c.h.b16 %v3340
  %v3426 = vunpack.c.l.b16 %v3341
  %v3427 = vunpack.c.h.b16 %v3341
  %v3428 = vunpack.c.l.b16 %v3342
  %v3429 = vunpack.c.h.b16 %v3342
  %v3430 = vunpack.c.l.b16 %v3343
  %v3431 = vunpack.c.h.b16 %v3343
  %v3432 = vunpack.c.l.b16 %v3344
  %v3433 = vunpack.c.h.b16 %v3344
  %v3434 = vunpack.c.l.b16 %v3345
  %v3435 = vunpack.c.h.b16 %v3345
  %v3436 = vunpack.c.l.b16 %v3346
  %v3437 = vunpack.c.h.b16 %v3346
  %v3438 = vunpack.c.l.b16 %v3347
  %v3439 = vunpack.c.h.b16 %v3347
  %v3440 = vunpack.c.l.b16 %v3348
  %v3441 = vunpack.c.h.b16 %v3348
  %v3442 = vunpack.c.l.b16 %v3349
  %v3443 = vunpack.c.h.b16 %v3349
  %v3444 = vunpack.c.l.b16 %v3350
  %v3445 = vunpack.c.h.b16 %v3350
  %v3446 = vunpack.c.l.b16 %v3351
  %v3447 = vunpack.c.h.b16 %v3351
  %v3448 = vpack.c.b16 %v3388, %v3384
  %v3449 = vpack.c.b16 %v3389, %v3385
  %v3450 = vpack.c.b16 %v3390, %v3386
  %v3451 = vpack.c.b16 %v3391, %v3387
  %v3452 = vpack.c.b16 %v3396, %v3392
  %v3453 = vpack.c.b16 %v3397, %v3393
  %v3454 = vpack.c.b16 %v3398, %v3394
  %v3455 = vpack.c.b16 %v3399, %v3395
  %v3456 = vpack.c.b16 %v3404, %v3400
  %v3457 = vpack.c.b16 %v3405, %v3401
  %v3458 = vpack.c.b16 %v3406, %v3402
  %v3459 = vpack.c.b16 %v3407, %v3403
  %v3460 = vpack.c.b16 %v3412, %v3408
  %v3461 = vpack.c.b16 %v3413, %v3409
  %v3462 = vpack.c.b16 %v3414, %v3410
  %v3463 = vpack.c.b16 %v3415, %v3411
  %v3464 = vpack.c.b16 %v3420, %v3416
  %v3465 = vpack.c.b16 %v3421, %v3417
  %v3466 = vpack.c.b16 %v3422, %v3418
  %v3467 = vpack.c.b16 %v3423, %v3419
  %v3468 = vpack.c.b16 %v3428, %v3424
  %v3469 = vpack.c.b16 %v3429, %v3425
  %v3470 = vpack.c.b16 %v3430, %v3426
  %v3471 = vpack.c.b16 %v3431, %v3427
  %v3472 = vpack.c.b16 %v3436, %v3432
  %v3473 = vpack.c.b16 %v3437, %v3433
  %v3474 = vpack.c.b16 %v3438, %v3434
  %v3475 = vpack.c.b16 %v3439, %v3435
  %v3476 = vpack.c.b16 %v3444, %v3440
  %v3477 = vpack.c.b16 %v3445, %v3441
  %v3478 = vpack.c.b16 %v3446, %v3442
  %v3479 = vpack.c.b16 %v3447, %v3443
  %3512 = vmatprep.subr.bf16.mxu0 %v3449
  %3513 = vmatpush1.bf16.msra.mxu0 %v3448
  %3514 = vmatprep.subr.bf16.mxu0 %v3453
  %3515 = vmatpush1.bf16.msra.mxu0 %v3452
  %3516 = vmatprep.subr.bf16.mxu0 %v3457
  %3517 = vmatpush1.bf16.msra.mxu0 %v3456
  %3518 = vmatprep.subr.bf16.mxu0 %v3461
  %3519 = vmatpush1.bf16.msra.mxu0 %v3460
  %3520 = vmatprep.subr.bf16.mxu0 %v3465
  %3521 = vmatpush1.bf16.msra.mxu0 %v3464
  %3522 = vmatprep.subr.bf16.mxu0 %v3469
  %3523 = vmatpush1.bf16.msra.mxu0 %v3468
  %3524 = vmatprep.subr.bf16.mxu0 %v3473
  %3525 = vmatpush1.bf16.msra.mxu0 %v3472
  %3526 = vmatprep.subr.bf16.mxu0 %v3477
  %3527 = vmatpush1.bf16.msra.mxu0 %v3476
  %3528 = vmatprep.subr.bf16.mxu0 0
  %3529 = vmatpush1.bf16.msra.mxu0 0
  %3530 = vmatprep.subr.bf16.mxu0 0
  %3531 = vmatpush1.bf16.msra.mxu0 0
  %3532 = vmatprep.subr.bf16.mxu0 0
  %3533 = vmatpush1.bf16.msra.mxu0 0
  %3534 = vmatprep.subr.bf16.mxu0 0
  %3535 = vmatpush1.bf16.msra.mxu0 0
  %3536 = vmatprep.subr.bf16.mxu0 0
  %3537 = vmatpush1.bf16.msra.mxu0 0
  %3538 = vmatprep.subr.bf16.mxu0 0
  %3539 = vmatpush1.bf16.msra.mxu0 0
  %3540 = vmatprep.subr.bf16.mxu0 0
  %3541 = vmatpush1.bf16.msra.mxu0 0
  %3542 = vmatprep.subr.bf16.mxu0 0
  %3543 = vmatpush1.bf16.msra.mxu0 0
  %3544 = vmatprep.mubr.bf16.mxu0 0
  %3545 = vmatmul.mubr.bf16.gmra.mrb[0].mxu0 %v3311
  %v3546 = vpop.f32.mrb[0].mxu0
  %v3547 = vadd.f32 0.0, %v3546
  %v3548 = vpop.f32.mrb[0].mxu0
  %v3549 = vadd.f32 0.0, %v3548
  %v3550 = vpop.f32.mrb[0].mxu0
  %v3551 = vadd.f32 0.0, %v3550
  %v3552 = vpop.f32.mrb[0].mxu0
  %v3553 = vadd.f32 0.0, %v3552
  %3554 = vmatprep.mubr.bf16.mxu0 0
  %3555 = vmatmul.mubr.bf16.gmra.mrb[0].mxu0 %v3312
  %v3556 = vpop.f32.mrb[0].mxu0
  %v3557 = vadd.f32 0.0, %v3556
  %v3558 = vpop.f32.mrb[0].mxu0
  %v3559 = vadd.f32 0.0, %v3558
  %v3560 = vpop.f32.mrb[0].mxu0
  %v3561 = vadd.f32 0.0, %v3560
  %v3562 = vpop.f32.mrb[0].mxu0
  %v3563 = vadd.f32 0.0, %v3562
  %3564 = vmatprep.mubr.bf16.mxu0 0
  %3565 = vmatmul.mubr.bf16.gmra.mrb[0].mxu0 %v3313
  %v3566 = vpop.f32.mrb[0].mxu0
  %v3567 = vadd.f32 0.0, %v3566
  %v3568 = vpop.f32.mrb[0].mxu0
  %v3569 = vadd.f32 0.0, %v3568
  %v3570 = vpop.f32.mrb[0].mxu0
  %v3571 = vadd.f32 0.0, %v3570
  %v3572 = vpop.f32.mrb[0].mxu0
  %v3573 = vadd.f32 0.0, %v3572
  %3574 = vmatprep.mubr.bf16.mxu0 0
  %3575 = vmatmul.mubr.bf16.gmra.mrb[0].mxu0 %v3314
  %v3576 = vpop.f32.mrb[0].mxu0
  %v3577 = vadd.f32 0.0, %v3576
  %v3578 = vpop.f32.mrb[0].mxu0
  %v3579 = vadd.f32 0.0, %v3578
  %v3580 = vpop.f32.mrb[0].mxu0
  %v3581 = vadd.f32 0.0, %v3580
  %v3582 = vpop.f32.mrb[0].mxu0
  %v3583 = vadd.f32 0.0, %v3582
  %3584 = vmatprep.mubr.bf16.mxu0 0
  %3585 = vmatmul.mubr.bf16.gmra.mrb[0].mxu0 %v3315
  %v3586 = vpop.f32.mrb[0].mxu0
  %v3587 = vadd.f32 0.0, %v3586
  %v3588 = vpop.f32.mrb[0].mxu0
  %v3589 = vadd.f32 0.0, %v3588
  %v3590 = vpop.f32.mrb[0].mxu0
  %v3591 = vadd.f32 0.0, %v3590
  %v3592 = vpop.f32.mrb[0].mxu0
  %v3593 = vadd.f32 0.0, %v3592
  %3594 = vmatprep.mubr.bf16.mxu0 0
  %3595 = vmatmul.mubr.bf16.gmra.mrb[0].mxu0 %v3316
  %v3596 = vpop.f32.mrb[0].mxu0
  %v3597 = vadd.f32 0.0, %v3596
  %v3598 = vpop.f32.mrb[0].mxu0
  %v3599 = vadd.f32 0.0, %v3598
  %v3600 = vpop.f32.mrb[0].mxu0
  %v3601 = vadd.f32 0.0, %v3600
  %v3602 = vpop.f32.mrb[0].mxu0
  %v3603 = vadd.f32 0.0, %v3602
  %3604 = vmatprep.mubr.bf16.mxu0 0
  %3605 = vmatmul.mubr.bf16.gmra.mrb[0].mxu0 %v3317
  %v3606 = vpop.f32.mrb[0].mxu0
  %v3607 = vadd.f32 0.0, %v3606
  %v3608 = vpop.f32.mrb[0].mxu0
  %v3609 = vadd.f32 0.0, %v3608
  %v3610 = vpop.f32.mrb[0].mxu0
  %v3611 = vadd.f32 0.0, %v3610
  %v3612 = vpop.f32.mrb[0].mxu0
  %v3613 = vadd.f32 0.0, %v3612
  %3614 = vmatprep.mubr.bf16.mxu0 0
  %3615 = vmatmul.mubr.bf16.gmra.mrb[0].mxu0 %v3318
  %v3616 = vpop.f32.mrb[0].mxu0
  %v3617 = vadd.f32 0.0, %v3616
  %v3618 = vpop.f32.mrb[0].mxu0
  %v3619 = vadd.f32 0.0, %v3618
  %v3620 = vpop.f32.mrb[0].mxu0
  %v3621 = vadd.f32 0.0, %v3620
  %v3622 = vpop.f32.mrb[0].mxu0
  %v3623 = vadd.f32 0.0, %v3622
  %3624 = vdwg.mxu0
  %3625 = vmatprep.subr.bf16.mxu0 %v3451
  %3626 = vmatpush1.bf16.msra.mxu0 %v3450
  %3627 = vmatprep.subr.bf16.mxu0 %v3455
  %3628 = vmatpush1.bf16.msra.mxu0 %v3454
  %3629 = vmatprep.subr.bf16.mxu0 %v3459
  %3630 = vmatpush1.bf16.msra.mxu0 %v3458
  %3631 = vmatprep.subr.bf16.mxu0 %v3463
  %3632 = vmatpush1.bf16.msra.mxu0 %v3462
  %3633 = vmatprep.subr.bf16.mxu0 %v3467
  %3634 = vmatpush1.bf16.msra.mxu0 %v3466
  %3635 = vmatprep.subr.bf16.mxu0 %v3471
  %3636 = vmatpush1.bf16.msra.mxu0 %v3470
  %3637 = vmatprep.subr.bf16.mxu0 %v3475
  %3638 = vmatpush1.bf16.msra.mxu0 %v3474
  %3639 = vmatprep.subr.bf16.mxu0 %v3479
  %3640 = vmatpush1.bf16.msra.mxu0 %v3478
  %3641 = vmatprep.subr.bf16.mxu0 0
  %3642 = vmatpush1.bf16.msra.mxu0 0
  %3643 = vmatprep.subr.bf16.mxu0 0
  %3644 = vmatpush1.bf16.msra.mxu0 0
  %3645 = vmatprep.subr.bf16.mxu0 0
  %3646 = vmatpush1.bf16.msra.mxu0 0
  %3647 = vmatprep.subr.bf16.mxu0 0
  %3648 = vmatpush1.bf16.msra.mxu0 0
  %3649 = vmatprep.subr.bf16.mxu0 0
  %3650 = vmatpush1.bf16.msra.mxu0 0
  %3651 = vmatprep.subr.bf16.mxu0 0
  %3652 = vmatpush1.bf16.msra.mxu0 0
  %3653 = vmatprep.subr.bf16.mxu0 0
  %3654 = vmatpush1.bf16.msra.mxu0 0
  %3655 = vmatprep.subr.bf16.mxu0 0
  %3656 = vmatpush1.bf16.msra.mxu0 0
  %3657 = vmatprep.mubr.bf16.mxu0 0
  %3658 = vmatmul.mubr.bf16.gmra.mrb[0].mxu0 %v3311
  %v3659 = vpop.f32.mrb[0].mxu0
  %v3660 = vadd.f32 0.0, %v3659
  %v3661 = vpop.f32.mrb[0].mxu0
  %v3662 = vadd.f32 0.0, %v3661
  %v3663 = vpop.f32.mrb[0].mxu0
  %v3664 = vadd.f32 0.0, %v3663
  %v3665 = vpop.f32.mrb[0].mxu0
  %v3666 = vadd.f32 0.0, %v3665
  %3667 = vmatprep.mubr.bf16.mxu0 0
  %3668 = vmatmul.mubr.bf16.gmra.mrb[0].mxu0 %v3312
  %v3669 = vpop.f32.mrb[0].mxu0
  %v3670 = vadd.f32 0.0, %v3669
  %v3671 = vpop.f32.mrb[0].mxu0
  %v3672 = vadd.f32 0.0, %v3671
  %v3673 = vpop.f32.mrb[0].mxu0
  %v3674 = vadd.f32 0.0, %v3673
  %v3675 = vpop.f32.mrb[0].mxu0
  %v3676 = vadd.f32 0.0, %v3675
  %3677 = vmatprep.mubr.bf16.mxu0 0
  %3678 = vmatmul.mubr.bf16.gmra.mrb[0].mxu0 %v3313
  %v3679 = vpop.f32.mrb[0].mxu0
  %v3680 = vadd.f32 0.0, %v3679
  %v3681 = vpop.f32.mrb[0].mxu0
  %v3682 = vadd.f32 0.0, %v3681
  %v3683 = vpop.f32.mrb[0].mxu0
  %v3684 = vadd.f32 0.0, %v3683
  %v3685 = vpop.f32.mrb[0].mxu0
  %v3686 = vadd.f32 0.0, %v3685
  %3687 = vmatprep.mubr.bf16.mxu0 0
  %3688 = vmatmul.mubr.bf16.gmra.mrb[0].mxu0 %v3314
  %v3689 = vpop.f32.mrb[0].mxu0
  %v3690 = vadd.f32 0.0, %v3689
  %v3691 = vpop.f32.mrb[0].mxu0
  %v3692 = vadd.f32 0.0, %v3691
  %v3693 = vpop.f32.mrb[0].mxu0
  %v3694 = vadd.f32 0.0, %v3693
  %v3695 = vpop.f32.mrb[0].mxu0
  %v3696 = vadd.f32 0.0, %v3695
  %3697 = vmatprep.mubr.bf16.mxu0 0
  %3698 = vmatmul.mubr.bf16.gmra.mrb[0].mxu0 %v3315
  %v3699 = vpop.f32.mrb[0].mxu0
  %v3700 = vadd.f32 0.0, %v3699
  %v3701 = vpop.f32.mrb[0].mxu0
  %v3702 = vadd.f32 0.0, %v3701
  %v3703 = vpop.f32.mrb[0].mxu0
  %v3704 = vadd.f32 0.0, %v3703
  %v3705 = vpop.f32.mrb[0].mxu0
  %v3706 = vadd.f32 0.0, %v3705
  %3707 = vmatprep.mubr.bf16.mxu0 0
  %3708 = vmatmul.mubr.bf16.gmra.mrb[0].mxu0 %v3316
  %v3709 = vpop.f32.mrb[0].mxu0
  %v3710 = vadd.f32 0.0, %v3709
  %v3711 = vpop.f32.mrb[0].mxu0
  %v3712 = vadd.f32 0.0, %v3711
  %v3713 = vpop.f32.mrb[0].mxu0
  %v3714 = vadd.f32 0.0, %v3713
  %v3715 = vpop.f32.mrb[0].mxu0
  %v3716 = vadd.f32 0.0, %v3715
  %3717 = vmatprep.mubr.bf16.mxu0 0
  %3718 = vmatmul.mubr.bf16.gmra.mrb[0].mxu0 %v3317
  %v3719 = vpop.f32.mrb[0].mxu0
  %v3720 = vadd.f32 0.0, %v3719
  %v3721 = vpop.f32.mrb[0].mxu0
  %v3722 = vadd.f32 0.0, %v3721
  %v3723 = vpop.f32.mrb[0].mxu0
  %v3724 = vadd.f32 0.0, %v3723
  %v3725 = vpop.f32.mrb[0].mxu0
  %v3726 = vadd.f32 0.0, %v3725
  %3727 = vmatprep.mubr.bf16.mxu0 0
  %3728 = vmatmul.mubr.bf16.gmra.mrb[0].mxu0 %v3318
  %v3729 = vpop.f32.mrb[0].mxu0
  %v3730 = vadd.f32 0.0, %v3729
  %v3731 = vpop.f32.mrb[0].mxu0
  %v3732 = vadd.f32 0.0, %v3731
  %v3733 = vpop.f32.mrb[0].mxu0
  %v3734 = vadd.f32 0.0, %v3733
  %v3735 = vpop.f32.mrb[0].mxu0
  %v3736 = vadd.f32 0.0, %v3735
  %3737 = vdwg.mxu0
  %v3738 = vadd.f32 %v3247, %v3547
  %v3739 = vadd.f32 %v3248, %v3549
  %v3740 = vadd.f32 %v3249, %v3660
  %v3741 = vadd.f32 %v3250, %v3662
  %v3742 = vadd.f32 %v3251, %v3551
  %v3743 = vadd.f32 %v3252, %v3553
  %v3744 = vadd.f32 %v3253, %v3664
  %v3745 = vadd.f32 %v3254, %v3666
  %v3746 = vadd.f32 %v3255, %v3557
  %v3747 = vadd.f32 %v3256, %v3559
  %v3748 = vadd.f32 %v3257, %v3670
  %v3749 = vadd.f32 %v3258, %v3672
  %v3750 = vadd.f32 %v3259, %v3561
  %v3751 = vadd.f32 %v3260, %v3563
  %v3752 = vadd.f32 %v3261, %v3674
  %v3753 = vadd.f32 %v3262, %v3676
  %v3754 = vadd.f32 %v3263, %v3567
  %v3755 = vadd.f32 %v3264, %v3569
  %v3756 = vadd.f32 %v3265, %v3680
  %v3757 = vadd.f32 %v3266, %v3682
  %v3758 = vadd.f32 %v3267, %v3571
  %v3759 = vadd.f32 %v3268, %v3573
  %v3760 = vadd.f32 %v3269, %v3684
  %v3761 = vadd.f32 %v3270, %v3686
  %v3762 = vadd.f32 %v3271, %v3577
  %v3763 = vadd.f32 %v3272, %v3579
  %v3764 = vadd.f32 %v3273, %v3690
  %v3765 = vadd.f32 %v3274, %v3692
  %v3766 = vadd.f32 %v3275, %v3581
  %v3767 = vadd.f32 %v3276, %v3583
  %v3768 = vadd.f32 %v3277, %v3694
  %v3769 = vadd.f32 %v3278, %v3696
  %v3770 = vadd.f32 %v3279, %v3587
  %v3771 = vadd.f32 %v3280, %v3589
  %v3772 = vadd.f32 %v3281, %v3700
  %v3773 = vadd.f32 %v3282, %v3702
  %v3774 = vadd.f32 %v3283, %v3591
  %v3775 = vadd.f32 %v3284, %v3593
  %v3776 = vadd.f32 %v3285, %v3704
  %v3777 = vadd.f32 %v3286, %v3706
  %v3778 = vadd.f32 %v3287, %v3597
  %v3779 = vadd.f32 %v3288, %v3599
  %v3780 = vadd.f32 %v3289, %v3710
  %v3781 = vadd.f32 %v3290, %v3712
  %v3782 = vadd.f32 %v3291, %v3601
  %v3783 = vadd.f32 %v3292, %v3603
  %v3784 = vadd.f32 %v3293, %v3714
  %v3785 = vadd.f32 %v3294, %v3716
  %v3786 = vadd.f32 %v3295, %v3607
  %v3787 = vadd.f32 %v3296, %v3609
  %v3788 = vadd.f32 %v3297, %v3720
  %v3789 = vadd.f32 %v3298, %v3722
  %v3790 = vadd.f32 %v3299, %v3611
  %v3791 = vadd.f32 %v3300, %v3613
  %v3792 = vadd.f32 %v3301, %v3724
  %v3793 = vadd.f32 %v3302, %v3726
  %v3794 = vadd.f32 %v3303, %v3617
  %v3795 = vadd.f32 %v3304, %v3619
  %v3796 = vadd.f32 %v3305, %v3730
  %v3797 = vadd.f32 %v3306, %v3732
  %v3798 = vadd.f32 %v3307, %v3621
  %v3799 = vadd.f32 %v3308, %v3623
  %v3800 = vadd.f32 %v3309, %v3734
  %v3801 = vadd.f32 %v3310, %v3736
  %v3802 = vld [vmem:[#allocation2 + $0x80] sm:$0xff]
  %v3803 = vld [vmem:[#allocation2 + $0x88] sm:$0xff]
  %v3804 = vld [vmem:[#allocation2 + $0x90] sm:$0xff]
  %v3805 = vld [vmem:[#allocation2 + $0x98] sm:$0xff]
  %v3806 = vld [vmem:[#allocation2 + $0xa0] sm:$0xff]
  %v3807 = vld [vmem:[#allocation2 + $0xa8] sm:$0xff]
  %v3808 = vld [vmem:[#allocation2 + $0xb0] sm:$0xff]
  %v3809 = vld [vmem:[#allocation2 + $0xb8] sm:$0xff]
  %s3810 = scalar_lea.vmem %s3, 1280
  %v3811 = vld [vmem:[%s3810] sm:$0xff]
  %v3812 = vld [vmem:[%s3810 + $0x8] sm:$0xff]
  %v3813 = vld [vmem:[%s3810 + $0x10] sm:$0xff]
  %v3814 = vld [vmem:[%s3810 + $0x18] sm:$0xff]
  %v3815 = vld [vmem:[%s3810 + $0x20] sm:$0xff]
  %v3816 = vld [vmem:[%s3810 + $0x28] sm:$0xff]
  %v3817 = vld [vmem:[%s3810 + $0x30] sm:$0xff]
  %v3818 = vld [vmem:[%s3810 + $0x38] sm:$0xff]
  %v3819 = vld [vmem:[%s3810 + $0x40] sm:$0xff]
  %v3820 = vld [vmem:[%s3810 + $0x48] sm:$0xff]
  %v3821 = vld [vmem:[%s3810 + $0x50] sm:$0xff]
  %v3822 = vld [vmem:[%s3810 + $0x58] sm:$0xff]
  %v3823 = vld [vmem:[%s3810 + $0x60] sm:$0xff]
  %v3824 = vld [vmem:[%s3810 + $0x68] sm:$0xff]
  %v3825 = vld [vmem:[%s3810 + $0x70] sm:$0xff]
  %v3826 = vld [vmem:[%s3810 + $0x78] sm:$0xff]
  %v3827 = vld [vmem:[%s3810 + $0x80] sm:$0xff]
  %v3828 = vld [vmem:[%s3810 + $0x88] sm:$0xff]
  %v3829 = vld [vmem:[%s3810 + $0x90] sm:$0xff]
  %v3830 = vld [vmem:[%s3810 + $0x98] sm:$0xff]
  %v3831 = vld [vmem:[%s3810 + $0xa0] sm:$0xff]
  %v3832 = vld [vmem:[%s3810 + $0xa8] sm:$0xff]
  %v3833 = vld [vmem:[%s3810 + $0xb0] sm:$0xff]
  %v3834 = vld [vmem:[%s3810 + $0xb8] sm:$0xff]
  %v3835 = vld [vmem:[%s3810 + $0xc0] sm:$0xff]
  %v3836 = vld [vmem:[%s3810 + $0xc8] sm:$0xff]
  %v3837 = vld [vmem:[%s3810 + $0xd0] sm:$0xff]
  %v3838 = vld [vmem:[%s3810 + $0xd8] sm:$0xff]
  %v3839 = vld [vmem:[%s3810 + $0xe0] sm:$0xff]
  %v3840 = vld [vmem:[%s3810 + $0xe8] sm:$0xff]
  %v3841 = vld [vmem:[%s3810 + $0xf0] sm:$0xff]
  %v3842 = vld [vmem:[%s3810 + $0xf8] sm:$0xff]
  %v3875 = vunpack.c.l.b16 %v3811
  %v3876 = vunpack.c.h.b16 %v3811
  %v3877 = vunpack.c.l.b16 %v3812
  %v3878 = vunpack.c.h.b16 %v3812
  %v3879 = vunpack.c.l.b16 %v3813
  %v3880 = vunpack.c.h.b16 %v3813
  %v3881 = vunpack.c.l.b16 %v3814
  %v3882 = vunpack.c.h.b16 %v3814
  %v3883 = vunpack.c.l.b16 %v3815
  %v3884 = vunpack.c.h.b16 %v3815
  %v3885 = vunpack.c.l.b16 %v3816
  %v3886 = vunpack.c.h.b16 %v3816
  %v3887 = vunpack.c.l.b16 %v3817
  %v3888 = vunpack.c.h.b16 %v3817
  %v3889 = vunpack.c.l.b16 %v3818
  %v3890 = vunpack.c.h.b16 %v3818
  %v3891 = vunpack.c.l.b16 %v3819
  %v3892 = vunpack.c.h.b16 %v3819
  %v3893 = vunpack.c.l.b16 %v3820
  %v3894 = vunpack.c.h.b16 %v3820
  %v3895 = vunpack.c.l.b16 %v3821
  %v3896 = vunpack.c.h.b16 %v3821
  %v3897 = vunpack.c.l.b16 %v3822
  %v3898 = vunpack.c.h.b16 %v3822
  %v3899 = vunpack.c.l.b16 %v3823
  %v3900 = vunpack.c.h.b16 %v3823
  %v3901 = vunpack.c.l.b16 %v3824
  %v3902 = vunpack.c.h.b16 %v3824
  %v3903 = vunpack.c.l.b16 %v3825
  %v3904 = vunpack.c.h.b16 %v3825
  %v3905 = vunpack.c.l.b16 %v3826
  %v3906 = vunpack.c.h.b16 %v3826
  %v3907 = vunpack.c.l.b16 %v3827
  %v3908 = vunpack.c.h.b16 %v3827
  %v3909 = vunpack.c.l.b16 %v3828
  %v3910 = vunpack.c.h.b16 %v3828
  %v3911 = vunpack.c.l.b16 %v3829
  %v3912 = vunpack.c.h.b16 %v3829
  %v3913 = vunpack.c.l.b16 %v3830
  %v3914 = vunpack.c.h.b16 %v3830
  %v3915 = vunpack.c.l.b16 %v3831
  %v3916 = vunpack.c.h.b16 %v3831
  %v3917 = vunpack.c.l.b16 %v3832
  %v3918 = vunpack.c.h.b16 %v3832
  %v3919 = vunpack.c.l.b16 %v3833
  %v3920 = vunpack.c.h.b16 %v3833
  %v3921 = vunpack.c.l.b16 %v3834
  %v3922 = vunpack.c.h.b16 %v3834
  %v3923 = vunpack.c.l.b16 %v3835
  %v3924 = vunpack.c.h.b16 %v3835
  %v3925 = vunpack.c.l.b16 %v3836
  %v3926 = vunpack.c.h.b16 %v3836
  %v3927 = vunpack.c.l.b16 %v3837
  %v3928 = vunpack.c.h.b16 %v3837
  %v3929 = vunpack.c.l.b16 %v3838
  %v3930 = vunpack.c.h.b16 %v3838
  %v3931 = vunpack.c.l.b16 %v3839
  %v3932 = vunpack.c.h.b16 %v3839
  %v3933 = vunpack.c.l.b16 %v3840
  %v3934 = vunpack.c.h.b16 %v3840
  %v3935 = vunpack.c.l.b16 %v3841
  %v3936 = vunpack.c.h.b16 %v3841
  %v3937 = vunpack.c.l.b16 %v3842
  %v3938 = vunpack.c.h.b16 %v3842
  %v3939 = vpack.c.b16 %v3879, %v3875
  %v3940 = vpack.c.b16 %v3880, %v3876
  %v3941 = vpack.c.b16 %v3881, %v3877
  %v3942 = vpack.c.b16 %v3882, %v3878
  %v3943 = vpack.c.b16 %v3887, %v3883
  %v3944 = vpack.c.b16 %v3888, %v3884
  %v3945 = vpack.c.b16 %v3889, %v3885
  %v3946 = vpack.c.b16 %v3890, %v3886
  %v3947 = vpack.c.b16 %v3895, %v3891
  %v3948 = vpack.c.b16 %v3896, %v3892
  %v3949 = vpack.c.b16 %v3897, %v3893
  %v3950 = vpack.c.b16 %v3898, %v3894
  %v3951 = vpack.c.b16 %v3903, %v3899
  %v3952 = vpack.c.b16 %v3904, %v3900
  %v3953 = vpack.c.b16 %v3905, %v3901
  %v3954 = vpack.c.b16 %v3906, %v3902
  %v3955 = vpack.c.b16 %v3911, %v3907
  %v3956 = vpack.c.b16 %v3912, %v3908
  %v3957 = vpack.c.b16 %v3913, %v3909
  %v3958 = vpack.c.b16 %v3914, %v3910
  %v3959 = vpack.c.b16 %v3919, %v3915
  %v3960 = vpack.c.b16 %v3920, %v3916
  %v3961 = vpack.c.b16 %v3921, %v3917
  %v3962 = vpack.c.b16 %v3922, %v3918
  %v3963 = vpack.c.b16 %v3927, %v3923
  %v3964 = vpack.c.b16 %v3928, %v3924
  %v3965 = vpack.c.b16 %v3929, %v3925
  %v3966 = vpack.c.b16 %v3930, %v3926
  %v3967 = vpack.c.b16 %v3935, %v3931
  %v3968 = vpack.c.b16 %v3936, %v3932
  %v3969 = vpack.c.b16 %v3937, %v3933
  %v3970 = vpack.c.b16 %v3938, %v3934
  %4003 = vmatprep.subr.bf16.mxu0 %v3940
  %4004 = vmatpush1.bf16.msra.mxu0 %v3939
  %4005 = vmatprep.subr.bf16.mxu0 %v3944
  %4006 = vmatpush1.bf16.msra.mxu0 %v3943
  %4007 = vmatprep.subr.bf16.mxu0 %v3948
  %4008 = vmatpush1.bf16.msra.mxu0 %v3947
  %4009 = vmatprep.subr.bf16.mxu0 %v3952
  %4010 = vmatpush1.bf16.msra.mxu0 %v3951
  %4011 = vmatprep.subr.bf16.mxu0 %v3956
  %4012 = vmatpush1.bf16.msra.mxu0 %v3955
  %4013 = vmatprep.subr.bf16.mxu0 %v3960
  %4014 = vmatpush1.bf16.msra.mxu0 %v3959
  %4015 = vmatprep.subr.bf16.mxu0 %v3964
  %4016 = vmatpush1.bf16.msra.mxu0 %v3963
  %4017 = vmatprep.subr.bf16.mxu0 %v3968
  %4018 = vmatpush1.bf16.msra.mxu0 %v3967
  %4019 = vmatprep.subr.bf16.mxu0 0
  %4020 = vmatpush1.bf16.msra.mxu0 0
  %4021 = vmatprep.subr.bf16.mxu0 0
  %4022 = vmatpush1.bf16.msra.mxu0 0
  %4023 = vmatprep.subr.bf16.mxu0 0
  %4024 = vmatpush1.bf16.msra.mxu0 0
  %4025 = vmatprep.subr.bf16.mxu0 0
  %4026 = vmatpush1.bf16.msra.mxu0 0
  %4027 = vmatprep.subr.bf16.mxu0 0
  %4028 = vmatpush1.bf16.msra.mxu0 0
  %4029 = vmatprep.subr.bf16.mxu0 0
  %4030 = vmatpush1.bf16.msra.mxu0 0
  %4031 = vmatprep.subr.bf16.mxu0 0
  %4032 = vmatpush1.bf16.msra.mxu0 0
  %4033 = vmatprep.subr.bf16.mxu0 0
  %4034 = vmatpush1.bf16.msra.mxu0 0
  %4035 = vmatprep.mubr.bf16.mxu0 0
  %4036 = vmatmul.mubr.bf16.gmra.mrb[0].mxu0 %v3802
  %v4037 = vpop.f32.mrb[0].mxu0
  %v4038 = vadd.f32 0.0, %v4037
  %v4039 = vpop.f32.mrb[0].mxu0
  %v4040 = vadd.f32 0.0, %v4039
  %v4041 = vpop.f32.mrb[0].mxu0
  %v4042 = vadd.f32 0.0, %v4041
  %v4043 = vpop.f32.mrb[0].mxu0
  %v4044 = vadd.f32 0.0, %v4043
  %4045 = vmatprep.mubr.bf16.mxu0 0
  %4046 = vmatmul.mubr.bf16.gmra.mrb[0].mxu0 %v3803
  %v4047 = vpop.f32.mrb[0].mxu0
  %v4048 = vadd.f32 0.0, %v4047
  %v4049 = vpop.f32.mrb[0].mxu0
  %v4050 = vadd.f32 0.0, %v4049
  %v4051 = vpop.f32.mrb[0].mxu0
  %v4052 = vadd.f32 0.0, %v4051
  %v4053 = vpop.f32.mrb[0].mxu0
  %v4054 = vadd.f32 0.0, %v4053
  %4055 = vmatprep.mubr.bf16.mxu0 0
  %4056 = vmatmul.mubr.bf16.gmra.mrb[0].mxu0 %v3804
  %v4057 = vpop.f32.mrb[0].mxu0
  %v4058 = vadd.f32 0.0, %v4057
  %v4059 = vpop.f32.mrb[0].mxu0
  %v4060 = vadd.f32 0.0, %v4059
  %v4061 = vpop.f32.mrb[0].mxu0
  %v4062 = vadd.f32 0.0, %v4061
  %v4063 = vpop.f32.mrb[0].mxu0
  %v4064 = vadd.f32 0.0, %v4063
  %4065 = vmatprep.mubr.bf16.mxu0 0
  %4066 = vmatmul.mubr.bf16.gmra.mrb[0].mxu0 %v3805
  %v4067 = vpop.f32.mrb[0].mxu0
  %v4068 = vadd.f32 0.0, %v4067
  %v4069 = vpop.f32.mrb[0].mxu0
  %v4070 = vadd.f32 0.0, %v4069
  %v4071 = vpop.f32.mrb[0].mxu0
  %v4072 = vadd.f32 0.0, %v4071
  %v4073 = vpop.f32.mrb[0].mxu0
  %v4074 = vadd.f32 0.0, %v4073
  %4075 = vmatprep.mubr.bf16.mxu0 0
  %4076 = vmatmul.mubr.bf16.gmra.mrb[0].mxu0 %v3806
  %v4077 = vpop.f32.mrb[0].mxu0
  %v4078 = vadd.f32 0.0, %v4077
  %v4079 = vpop.f32.mrb[0].mxu0
  %v4080 = vadd.f32 0.0, %v4079
  %v4081 = vpop.f32.mrb[0].mxu0
  %v4082 = vadd.f32 0.0, %v4081
  %v4083 = vpop.f32.mrb[0].mxu0
  %v4084 = vadd.f32 0.0, %v4083
  %4085 = vmatprep.mubr.bf16.mxu0 0
  %4086 = vmatmul.mubr.bf16.gmra.mrb[0].mxu0 %v3807
  %v4087 = vpop.f32.mrb[0].mxu0
  %v4088 = vadd.f32 0.0, %v4087
  %v4089 = vpop.f32.mrb[0].mxu0
  %v4090 = vadd.f32 0.0, %v4089
  %v4091 = vpop.f32.mrb[0].mxu0
  %v4092 = vadd.f32 0.0, %v4091
  %v4093 = vpop.f32.mrb[0].mxu0
  %v4094 = vadd.f32 0.0, %v4093
  %4095 = vmatprep.mubr.bf16.mxu0 0
  %4096 = vmatmul.mubr.bf16.gmra.mrb[0].mxu0 %v3808
  %v4097 = vpop.f32.mrb[0].mxu0
  %v4098 = vadd.f32 0.0, %v4097
  %v4099 = vpop.f32.mrb[0].mxu0
  %v4100 = vadd.f32 0.0, %v4099
  %v4101 = vpop.f32.mrb[0].mxu0
  %v4102 = vadd.f32 0.0, %v4101
  %v4103 = vpop.f32.mrb[0].mxu0
  %v4104 = vadd.f32 0.0, %v4103
  %4105 = vmatprep.mubr.bf16.mxu0 0
  %4106 = vmatmul.mubr.bf16.gmra.mrb[0].mxu0 %v3809
  %v4107 = vpop.f32.mrb[0].mxu0
  %v4108 = vadd.f32 0.0, %v4107
  %v4109 = vpop.f32.mrb[0].mxu0
  %v4110 = vadd.f32 0.0, %v4109
  %v4111 = vpop.f32.mrb[0].mxu0
  %v4112 = vadd.f32 0.0, %v4111
  %v4113 = vpop.f32.mrb[0].mxu0
  %v4114 = vadd.f32 0.0, %v4113
  %4115 = vdwg.mxu0
  %4116 = vmatprep.subr.bf16.mxu0 %v3942
  %4117 = vmatpush1.bf16.msra.mxu0 %v3941
  %4118 = vmatprep.subr.bf16.mxu0 %v3946
  %4119 = vmatpush1.bf16.msra.mxu0 %v3945
  %4120 = vmatprep.subr.bf16.mxu0 %v3950
  %4121 = vmatpush1.bf16.msra.mxu0 %v3949
  %4122 = vmatprep.subr.bf16.mxu0 %v3954
  %4123 = vmatpush1.bf16.msra.mxu0 %v3953
  %4124 = vmatprep.subr.bf16.mxu0 %v3958
  %4125 = vmatpush1.bf16.msra.mxu0 %v3957
  %4126 = vmatprep.subr.bf16.mxu0 %v3962
  %4127 = vmatpush1.bf16.msra.mxu0 %v3961
  %4128 = vmatprep.subr.bf16.mxu0 %v3966
  %4129 = vmatpush1.bf16.msra.mxu0 %v3965
  %4130 = vmatprep.subr.bf16.mxu0 %v3970
  %4131 = vmatpush1.bf16.msra.mxu0 %v3969
  %4132 = vmatprep.subr.bf16.mxu0 0
  %4133 = vmatpush1.bf16.msra.mxu0 0
  %4134 = vmatprep.subr.bf16.mxu0 0
  %4135 = vmatpush1.bf16.msra.mxu0 0
  %4136 = vmatprep.subr.bf16.mxu0 0
  %4137 = vmatpush1.bf16.msra.mxu0 0
  %4138 = vmatprep.subr.bf16.mxu0 0
  %4139 = vmatpush1.bf16.msra.mxu0 0
  %4140 = vmatprep.subr.bf16.mxu0 0
  %4141 = vmatpush1.bf16.msra.mxu0 0
  %4142 = vmatprep.subr.bf16.mxu0 0
  %4143 = vmatpush1.bf16.msra.mxu0 0
  %4144 = vmatprep.subr.bf16.mxu0 0
  %4145 = vmatpush1.bf16.msra.mxu0 0
  %4146 = vmatprep.subr.bf16.mxu0 0
  %4147 = vmatpush1.bf16.msra.mxu0 0
  %4148 = vmatprep.mubr.bf16.mxu0 0
  %4149 = vmatmul.mubr.bf16.gmra.mrb[0].mxu0 %v3802
  %v4150 = vpop.f32.mrb[0].mxu0
  %v4151 = vadd.f32 0.0, %v4150
  %v4152 = vpop.f32.mrb[0].mxu0
  %v4153 = vadd.f32 0.0, %v4152
  %v4154 = vpop.f32.mrb[0].mxu0
  %v4155 = vadd.f32 0.0, %v4154
  %v4156 = vpop.f32.mrb[0].mxu0
  %v4157 = vadd.f32 0.0, %v4156
  %4158 = vmatprep.mubr.bf16.mxu0 0
  %4159 = vmatmul.mubr.bf16.gmra.mrb[0].mxu0 %v3803
  %v4160 = vpop.f32.mrb[0].mxu0
  %v4161 = vadd.f32 0.0, %v4160
  %v4162 = vpop.f32.mrb[0].mxu0
  %v4163 = vadd.f32 0.0, %v4162
  %v4164 = vpop.f32.mrb[0].mxu0
  %v4165 = vadd.f32 0.0, %v4164
  %v4166 = vpop.f32.mrb[0].mxu0
  %v4167 = vadd.f32 0.0, %v4166
  %4168 = vmatprep.mubr.bf16.mxu0 0
  %4169 = vmatmul.mubr.bf16.gmra.mrb[0].mxu0 %v3804
  %v4170 = vpop.f32.mrb[0].mxu0
  %v4171 = vadd.f32 0.0, %v4170
  %v4172 = vpop.f32.mrb[0].mxu0
  %v4173 = vadd.f32 0.0, %v4172
  %v4174 = vpop.f32.mrb[0].mxu0
  %v4175 = vadd.f32 0.0, %v4174
  %v4176 = vpop.f32.mrb[0].mxu0
  %v4177 = vadd.f32 0.0, %v4176
  %4178 = vmatprep.mubr.bf16.mxu0 0
  %4179 = vmatmul.mubr.bf16.gmra.mrb[0].mxu0 %v3805
  %v4180 = vpop.f32.mrb[0].mxu0
  %v4181 = vadd.f32 0.0, %v4180
  %v4182 = vpop.f32.mrb[0].mxu0
  %v4183 = vadd.f32 0.0, %v4182
  %v4184 = vpop.f32.mrb[0].mxu0
  %v4185 = vadd.f32 0.0, %v4184
  %v4186 = vpop.f32.mrb[0].mxu0
  %v4187 = vadd.f32 0.0, %v4186
  %4188 = vmatprep.mubr.bf16.mxu0 0
  %4189 = vmatmul.mubr.bf16.gmra.mrb[0].mxu0 %v3806
  %v4190 = vpop.f32.mrb[0].mxu0
  %v4191 = vadd.f32 0.0, %v4190
  %v4192 = vpop.f32.mrb[0].mxu0
  %v4193 = vadd.f32 0.0, %v4192
  %v4194 = vpop.f32.mrb[0].mxu0
  %v4195 = vadd.f32 0.0, %v4194
  %v4196 = vpop.f32.mrb[0].mxu0
  %v4197 = vadd.f32 0.0, %v4196
  %4198 = vmatprep.mubr.bf16.mxu0 0
  %4199 = vmatmul.mubr.bf16.gmra.mrb[0].mxu0 %v3807
  %v4200 = vpop.f32.mrb[0].mxu0
  %v4201 = vadd.f32 0.0, %v4200
  %v4202 = vpop.f32.mrb[0].mxu0
  %v4203 = vadd.f32 0.0, %v4202
  %v4204 = vpop.f32.mrb[0].mxu0
  %v4205 = vadd.f32 0.0, %v4204
  %v4206 = vpop.f32.mrb[0].mxu0
  %v4207 = vadd.f32 0.0, %v4206
  %4208 = vmatprep.mubr.bf16.mxu0 0
  %4209 = vmatmul.mubr.bf16.gmra.mrb[0].mxu0 %v3808
  %v4210 = vpop.f32.mrb[0].mxu0
  %v4211 = vadd.f32 0.0, %v4210
  %v4212 = vpop.f32.mrb[0].mxu0
  %v4213 = vadd.f32 0.0, %v4212
  %v4214 = vpop.f32.mrb[0].mxu0
  %v4215 = vadd.f32 0.0, %v4214
  %v4216 = vpop.f32.mrb[0].mxu0
  %v4217 = vadd.f32 0.0, %v4216
  %4218 = vmatprep.mubr.bf16.mxu0 0
  %4219 = vmatmul.mubr.bf16.gmra.mrb[0].mxu0 %v3809
  %v4220 = vpop.f32.mrb[0].mxu0
  %v4221 = vadd.f32 0.0, %v4220
  %v4222 = vpop.f32.mrb[0].mxu0
  %v4223 = vadd.f32 0.0, %v4222
  %v4224 = vpop.f32.mrb[0].mxu0
  %v4225 = vadd.f32 0.0, %v4224
  %v4226 = vpop.f32.mrb[0].mxu0
  %v4227 = vadd.f32 0.0, %v4226
  %4228 = vdwg.mxu0
  %v4229 = vadd.f32 %v3738, %v4038
  %v4230 = vadd.f32 %v3739, %v4040
  %v4231 = vadd.f32 %v3740, %v4151
  %v4232 = vadd.f32 %v3741, %v4153
  %v4233 = vadd.f32 %v3742, %v4042
  %v4234 = vadd.f32 %v3743, %v4044
  %v4235 = vadd.f32 %v3744, %v4155
  %v4236 = vadd.f32 %v3745, %v4157
  %v4237 = vadd.f32 %v3746, %v4048
  %v4238 = vadd.f32 %v3747, %v4050
  %v4239 = vadd.f32 %v3748, %v4161
  %v4240 = vadd.f32 %v3749, %v4163
  %v4241 = vadd.f32 %v3750, %v4052
  %v4242 = vadd.f32 %v3751, %v4054
  %v4243 = vadd.f32 %v3752, %v4165
  %v4244 = vadd.f32 %v3753, %v4167
  %v4245 = vadd.f32 %v3754, %v4058
  %v4246 = vadd.f32 %v3755, %v4060
  %v4247 = vadd.f32 %v3756, %v4171
  %v4248 = vadd.f32 %v3757, %v4173
  %v4249 = vadd.f32 %v3758, %v4062
  %v4250 = vadd.f32 %v3759, %v4064
  %v4251 = vadd.f32 %v3760, %v4175
  %v4252 = vadd.f32 %v3761, %v4177
  %v4253 = vadd.f32 %v3762, %v4068
  %v4254 = vadd.f32 %v3763, %v4070
  %v4255 = vadd.f32 %v3764, %v4181
  %v4256 = vadd.f32 %v3765, %v4183
  %v4257 = vadd.f32 %v3766, %v4072
  %v4258 = vadd.f32 %v3767, %v4074
  %v4259 = vadd.f32 %v3768, %v4185
  %v4260 = vadd.f32 %v3769, %v4187
  %v4261 = vadd.f32 %v3770, %v4078
  %v4262 = vadd.f32 %v3771, %v4080
  %v4263 = vadd.f32 %v3772, %v4191
  %v4264 = vadd.f32 %v3773, %v4193
  %v4265 = vadd.f32 %v3774, %v4082
  %v4266 = vadd.f32 %v3775, %v4084
  %v4267 = vadd.f32 %v3776, %v4195
  %v4268 = vadd.f32 %v3777, %v4197
  %v4269 = vadd.f32 %v3778, %v4088
  %v4270 = vadd.f32 %v3779, %v4090
  %v4271 = vadd.f32 %v3780, %v4201
  %v4272 = vadd.f32 %v3781, %v4203
  %v4273 = vadd.f32 %v3782, %v4092
  %v4274 = vadd.f32 %v3783, %v4094
  %v4275 = vadd.f32 %v3784, %v4205
  %v4276 = vadd.f32 %v3785, %v4207
  %v4277 = vadd.f32 %v3786, %v4098
  %v4278 = vadd.f32 %v3787, %v4100
  %v4279 = vadd.f32 %v3788, %v4211
  %v4280 = vadd.f32 %v3789, %v4213
  %v4281 = vadd.f32 %v3790, %v4102
  %v4282 = vadd.f32 %v3791, %v4104
  %v4283 = vadd.f32 %v3792, %v4215
  %v4284 = vadd.f32 %v3793, %v4217
  %v4285 = vadd.f32 %v3794, %v4108
  %v4286 = vadd.f32 %v3795, %v4110
  %v4287 = vadd.f32 %v3796, %v4221
  %v4288 = vadd.f32 %v3797, %v4223
  %v4289 = vadd.f32 %v3798, %v4112
  %v4290 = vadd.f32 %v3799, %v4114
  %v4291 = vadd.f32 %v3800, %v4225
  %v4292 = vadd.f32 %v3801, %v4227
  %v4293 = vmax.f32 %v4229, %v4230
  %v4294 = vmax.f32 %v4233, %v4234
  %v4295 = vmax.f32 %v4237, %v4238
  %v4296 = vmax.f32 %v4241, %v4242
  %v4297 = vmax.f32 %v4245, %v4246
  %v4298 = vmax.f32 %v4249, %v4250
  %v4299 = vmax.f32 %v4253, %v4254
  %v4300 = vmax.f32 %v4257, %v4258
  %v4301 = vmax.f32 %v4261, %v4262
  %v4302 = vmax.f32 %v4265, %v4266
  %v4303 = vmax.f32 %v4269, %v4270
  %v4304 = vmax.f32 %v4273, %v4274
  %v4305 = vmax.f32 %v4277, %v4278
  %v4306 = vmax.f32 %v4281, %v4282
  %v4307 = vmax.f32 %v4285, %v4286
  %v4308 = vmax.f32 %v4289, %v4290
  %v4309 = vmax.f32 %v4231, %v4232
  %v4310 = vmax.f32 %v4235, %v4236
  %v4311 = vmax.f32 %v4239, %v4240
  %v4312 = vmax.f32 %v4243, %v4244
  %v4313 = vmax.f32 %v4247, %v4248
  %v4314 = vmax.f32 %v4251, %v4252
  %v4315 = vmax.f32 %v4255, %v4256
  %v4316 = vmax.f32 %v4259, %v4260
  %v4317 = vmax.f32 %v4263, %v4264
  %v4318 = vmax.f32 %v4267, %v4268
  %v4319 = vmax.f32 %v4271, %v4272
  %v4320 = vmax.f32 %v4275, %v4276
  %v4321 = vmax.f32 %v4279, %v4280
  %v4322 = vmax.f32 %v4283, %v4284
  %v4323 = vmax.f32 %v4287, %v4288
  %v4324 = vmax.f32 %v4291, %v4292
  %v4325 = vmax.f32 %v4293, %v4309
  %v4326 = vmax.f32 %v4294, %v4310
  %v4327 = vmax.f32 %v4295, %v4311
  %v4328 = vmax.f32 %v4296, %v4312
  %v4329 = vmax.f32 %v4297, %v4313
  %v4330 = vmax.f32 %v4298, %v4314
  %v4331 = vmax.f32 %v4299, %v4315
  %v4332 = vmax.f32 %v4300, %v4316
  %v4333 = vmax.f32 %v4301, %v4317
  %v4334 = vmax.f32 %v4302, %v4318
  %v4335 = vmax.f32 %v4303, %v4319
  %v4336 = vmax.f32 %v4304, %v4320
  %v4337 = vmax.f32 %v4305, %v4321
  %v4338 = vmax.f32 %v4306, %v4322
  %v4339 = vmax.f32 %v4307, %v4323
  %v4340 = vmax.f32 %v4308, %v4324
  %v4341 = vld [vmem:[%s4] sm:$0x1]
  %v4343 = vlaneseq
  %v4344 = vshrl.u32 %v4343, 7
  %v4345 = vsub.s32 0, %v4344
  %v4346 = vrot.slane %v4341, %v4345
  %v4348 = vadd.f32 %v4325, %v4346
  %v4349 = vadd.f32 %v4326, %v4346
  %v4350 = vadd.f32 %v4327, %v4346
  %v4351 = vadd.f32 %v4328, %v4346
  %v4352 = vadd.f32 %v4329, %v4346
  %v4353 = vadd.f32 %v4330, %v4346
  %v4354 = vadd.f32 %v4331, %v4346
  %v4355 = vadd.f32 %v4332, %v4346
  %v4356 = vadd.f32 %v4333, %v4346
  %v4357 = vadd.f32 %v4334, %v4346
  %v4358 = vadd.f32 %v4335, %v4346
  %v4359 = vadd.f32 %v4336, %v4346
  %v4360 = vadd.f32 %v4337, %v4346
  %v4361 = vadd.f32 %v4338, %v4346
  %v4362 = vadd.f32 %v4339, %v4346
  %v4363 = vadd.f32 %v4340, %v4346
  %v4364 = vmax.f32 %v4348, 0.0
  %v4365 = vmax.f32 %v4349, 0.0
  %v4366 = vmax.f32 %v4350, 0.0
  %v4367 = vmax.f32 %v4351, 0.0
  %v4368 = vmax.f32 %v4352, 0.0
  %v4369 = vmax.f32 %v4353, 0.0
  %v4370 = vmax.f32 %v4354, 0.0
  %v4371 = vmax.f32 %v4355, 0.0
  %v4372 = vmax.f32 %v4356, 0.0
  %v4373 = vmax.f32 %v4357, 0.0
  %v4374 = vmax.f32 %v4358, 0.0
  %v4375 = vmax.f32 %v4359, 0.0
  %v4376 = vmax.f32 %v4360, 0.0
  %v4377 = vmax.f32 %v4361, 0.0
  %v4378 = vmax.f32 %v4362, 0.0
  %v4379 = vmax.f32 %v4363, 0.0
  %v4380 = vpack.c.bf16 %v4365, %v4364
  %v4381 = vpack.c.bf16 %v4367, %v4366
  %v4382 = vld [vmem:[%s5] sm:$0xf]
  %v4383 = vld [vmem:[%s5 + $0x4] sm:$0xf]
  %v4384 = vld [vmem:[%s5 + $0x8] sm:$0xf]
  %v4385 = vld [vmem:[%s5 + $0xc] sm:$0xf]
  %v4386 = vld [vmem:[%s5 + $0x10] sm:$0xf]
  %v4387 = vld [vmem:[%s5 + $0x14] sm:$0xf]
  %v4388 = vld [vmem:[%s5 + $0x18] sm:$0xf]
  %v4389 = vld [vmem:[%s5 + $0x1c] sm:$0xf]
  %v4390 = vld [vmem:[%s5 + $0x20] sm:$0xf]
  %v4391 = vld [vmem:[%s5 + $0x24] sm:$0xf]
  %v4392 = vld [vmem:[%s5 + $0x28] sm:$0xf]
  %v4393 = vld [vmem:[%s5 + $0x2c] sm:$0xf]
  %v4394 = vld [vmem:[%s5 + $0x30] sm:$0xf]
  %v4395 = vld [vmem:[%s5 + $0x34] sm:$0xf]
  %v4396 = vld [vmem:[%s5 + $0x38] sm:$0xf]
  %v4397 = vld [vmem:[%s5 + $0x3c] sm:$0xf]
  %v4398 = vpack.c.bf16 %v4369, %v4368
  %v4399 = vpack.c.bf16 %v4371, %v4370
  %s4400 = scalar_lea.vmem %s5, 64
  %v4401 = vld [vmem:[%s4400] sm:$0xf]
  %v4402 = vld [vmem:[%s4400 + $0x4] sm:$0xf]
  %v4403 = vld [vmem:[%s4400 + $0x8] sm:$0xf]
  %v4404 = vld [vmem:[%s4400 + $0xc] sm:$0xf]
  %v4405 = vld [vmem:[%s4400 + $0x10] sm:$0xf]
  %v4406 = vld [vmem:[%s4400 + $0x14] sm:$0xf]
  %v4407 = vld [vmem:[%s4400 + $0x18] sm:$0xf]
  %v4408 = vld [vmem:[%s4400 + $0x1c] sm:$0xf]
  %v4409 = vld [vmem:[%s4400 + $0x20] sm:$0xf]
  %v4410 = vld [vmem:[%s4400 + $0x24] sm:$0xf]
  %v4411 = vld [vmem:[%s4400 + $0x28] sm:$0xf]
  %v4412 = vld [vmem:[%s4400 + $0x2c] sm:$0xf]
  %v4413 = vld [vmem:[%s4400 + $0x30] sm:$0xf]
  %v4414 = vld [vmem:[%s4400 + $0x34] sm:$0xf]
  %v4415 = vld [vmem:[%s4400 + $0x38] sm:$0xf]
  %v4416 = vld [vmem:[%s4400 + $0x3c] sm:$0xf]
  %v4433 = vunpack.c.l.b16 %v4401
  %v4434 = vunpack.c.l.b16 %v4402
  %v4435 = vunpack.c.l.b16 %v4403
  %v4436 = vunpack.c.l.b16 %v4404
  %v4437 = vunpack.c.l.b16 %v4405
  %v4438 = vunpack.c.l.b16 %v4406
  %v4439 = vunpack.c.l.b16 %v4407
  %v4440 = vunpack.c.l.b16 %v4408
  %v4441 = vunpack.c.l.b16 %v4409
  %v4442 = vunpack.c.l.b16 %v4410
  %v4443 = vunpack.c.l.b16 %v4411
  %v4444 = vunpack.c.l.b16 %v4412
  %v4445 = vunpack.c.l.b16 %v4413
  %v4446 = vunpack.c.l.b16 %v4414
  %v4447 = vunpack.c.l.b16 %v4415
  %v4448 = vunpack.c.l.b16 %v4416
  %v4449 = vpack.c.b16 %v4434, %v4433
  %v4450 = vpack.c.b16 %v4436, %v4435
  %v4451 = vpack.c.b16 %v4438, %v4437
  %v4452 = vpack.c.b16 %v4440, %v4439
  %v4453 = vpack.c.b16 %v4442, %v4441
  %v4454 = vpack.c.b16 %v4444, %v4443
  %v4455 = vpack.c.b16 %v4446, %v4445
  %v4456 = vpack.c.b16 %v4448, %v4447
  %4465 = vmatprep.subr.bf16.mxu0 0
  %4466 = vmatpush1.bf16.msra.mxu0 %v4449
  %4467 = vmatprep.subr.bf16.mxu0 0
  %4468 = vmatpush1.bf16.msra.mxu0 %v4450
  %4469 = vmatprep.subr.bf16.mxu0 0
  %4470 = vmatpush1.bf16.msra.mxu0 %v4451
  %4471 = vmatprep.subr.bf16.mxu0 0
  %4472 = vmatpush1.bf16.msra.mxu0 %v4452
  %4473 = vmatprep.subr.bf16.mxu0 0
  %4474 = vmatpush1.bf16.msra.mxu0 %v4453
  %4475 = vmatprep.subr.bf16.mxu0 0
  %4476 = vmatpush1.bf16.msra.mxu0 %v4454
  %4477 = vmatprep.subr.bf16.mxu0 0
  %4478 = vmatpush1.bf16.msra.mxu0 %v4455
  %4479 = vmatprep.subr.bf16.mxu0 0
  %4480 = vmatpush1.bf16.msra.mxu0 %v4456
  %4481 = vmatprep.subr.bf16.mxu0 0
  %4482 = vmatpush1.bf16.msra.mxu0 0
  %4483 = vmatprep.subr.bf16.mxu0 0
  %4484 = vmatpush1.bf16.msra.mxu0 0
  %4485 = vmatprep.subr.bf16.mxu0 0
  %4486 = vmatpush1.bf16.msra.mxu0 0
  %4487 = vmatprep.subr.bf16.mxu0 0
  %4488 = vmatpush1.bf16.msra.mxu0 0
  %4489 = vmatprep.subr.bf16.mxu0 0
  %4490 = vmatpush1.bf16.msra.mxu0 0
  %4491 = vmatprep.subr.bf16.mxu0 0
  %4492 = vmatpush1.bf16.msra.mxu0 0
  %4493 = vmatprep.subr.bf16.mxu0 0
  %4494 = vmatpush1.bf16.msra.mxu0 0
  %4495 = vmatprep.subr.bf16.mxu0 0
  %4496 = vmatpush1.bf16.msra.mxu0 0
  %4497 = vmatprep.mubr.bf16.mxu0 0
  %4498 = vmatmul.mubr.bf16.gmra.mrb[0].mxu0 %v4398
  %v4499 = vpop.f32.mrb[0].mxu0
  %v4500 = vadd.f32 0.0, %v4499
  %v4501 = vpop.f32.mrb[0].mxu0
  %v4502 = vpop.f32.mrb[0].mxu0
  %v4503 = vadd.f32 0.0, %v4502
  %v4504 = vpop.f32.mrb[0].mxu0
  %4505 = vmatprep.mubr.bf16.mxu0 0
  %4506 = vmatmul.mubr.bf16.gmra.mrb[0].mxu0 %v4399
  %v4507 = vpop.f32.mrb[0].mxu0
  %v4508 = vadd.f32 0.0, %v4507
  %v4509 = vpop.f32.mrb[0].mxu0
  %v4510 = vpop.f32.mrb[0].mxu0
  %v4511 = vadd.f32 0.0, %v4510
  %v4512 = vpop.f32.mrb[0].mxu0
  %4513 = vdwg.mxu0
  %v4530 = vunpack.c.l.b16 %v4382
  %v4531 = vunpack.c.l.b16 %v4383
  %v4532 = vunpack.c.l.b16 %v4384
  %v4533 = vunpack.c.l.b16 %v4385
  %v4534 = vunpack.c.l.b16 %v4386
  %v4535 = vunpack.c.l.b16 %v4387
  %v4536 = vunpack.c.l.b16 %v4388
  %v4537 = vunpack.c.l.b16 %v4389
  %v4538 = vunpack.c.l.b16 %v4390
  %v4539 = vunpack.c.l.b16 %v4391
  %v4540 = vunpack.c.l.b16 %v4392
  %v4541 = vunpack.c.l.b16 %v4393
  %v4542 = vunpack.c.l.b16 %v4394
  %v4543 = vunpack.c.l.b16 %v4395
  %v4544 = vunpack.c.l.b16 %v4396
  %v4545 = vunpack.c.l.b16 %v4397
  %v4546 = vpack.c.b16 %v4531, %v4530
  %v4547 = vpack.c.b16 %v4533, %v4532
  %v4548 = vpack.c.b16 %v4535, %v4534
  %v4549 = vpack.c.b16 %v4537, %v4536
  %v4550 = vpack.c.b16 %v4539, %v4538
  %v4551 = vpack.c.b16 %v4541, %v4540
  %v4552 = vpack.c.b16 %v4543, %v4542
  %v4553 = vpack.c.b16 %v4545, %v4544
  %4562 = vmatprep.subr.bf16.mxu0 0
  %4563 = vmatpush1.bf16.msra.mxu0 %v4546
  %4564 = vmatprep.subr.bf16.mxu0 0
  %4565 = vmatpush1.bf16.msra.mxu0 %v4547
  %4566 = vmatprep.subr.bf16.mxu0 0
  %4567 = vmatpush1.bf16.msra.mxu0 %v4548
  %4568 = vmatprep.subr.bf16.mxu0 0
  %4569 = vmatpush1.bf16.msra.mxu0 %v4549
  %4570 = vmatprep.subr.bf16.mxu0 0
  %4571 = vmatpush1.bf16.msra.mxu0 %v4550
  %4572 = vmatprep.subr.bf16.mxu0 0
  %4573 = vmatpush1.bf16.msra.mxu0 %v4551
  %4574 = vmatprep.subr.bf16.mxu0 0
  %4575 = vmatpush1.bf16.msra.mxu0 %v4552
  %4576 = vmatprep.subr.bf16.mxu0 0
  %4577 = vmatpush1.bf16.msra.mxu0 %v4553
  %4578 = vmatprep.subr.bf16.mxu0 0
  %4579 = vmatpush1.bf16.msra.mxu0 0
  %4580 = vmatprep.subr.bf16.mxu0 0
  %4581 = vmatpush1.bf16.msra.mxu0 0
  %4582 = vmatprep.subr.bf16.mxu0 0
  %4583 = vmatpush1.bf16.msra.mxu0 0
  %4584 = vmatprep.subr.bf16.mxu0 0
  %4585 = vmatpush1.bf16.msra.mxu0 0
  %4586 = vmatprep.subr.bf16.mxu0 0
  %4587 = vmatpush1.bf16.msra.mxu0 0
  %4588 = vmatprep.subr.bf16.mxu0 0
  %4589 = vmatpush1.bf16.msra.mxu0 0
  %4590 = vmatprep.subr.bf16.mxu0 0
  %4591 = vmatpush1.bf16.msra.mxu0 0
  %4592 = vmatprep.subr.bf16.mxu0 0
  %4593 = vmatpush1.bf16.msra.mxu0 0
  %4594 = vmatprep.mubr.bf16.mxu0 0
  %4595 = vmatmul.mubr.bf16.gmra.mrb[0].mxu0 %v4380
  %v4596 = vpop.f32.mrb[0].mxu0
  %v4597 = vadd.f32 %v4500, %v4596
  %v4598 = vpop.f32.mrb[0].mxu0
  %v4599 = vpop.f32.mrb[0].mxu0
  %v4600 = vadd.f32 %v4503, %v4599
  %v4601 = vpop.f32.mrb[0].mxu0
  %4602 = vmatprep.mubr.bf16.mxu0 0
  %4603 = vmatmul.mubr.bf16.gmra.mrb[0].mxu0 %v4381
  %v4604 = vpop.f32.mrb[0].mxu0
  %v4605 = vadd.f32 %v4508, %v4604
  %v4606 = vpop.f32.mrb[0].mxu0
  %v4607 = vpop.f32.mrb[0].mxu0
  %v4608 = vadd.f32 %v4511, %v4607
  %v4609 = vpop.f32.mrb[0].mxu0
  %4610 = vdwg.mxu0
  %v4611 = vpack.c.bf16 %v4373, %v4372
  %v4612 = vpack.c.bf16 %v4375, %v4374
  %s4613 = scalar_lea.vmem %s5, 128
  %v4614 = vld [vmem:[%s4613] sm:$0xf]
  %v4615 = vld [vmem:[%s4613 + $0x4] sm:$0xf]
  %v4616 = vld [vmem:[%s4613 + $0x8] sm:$0xf]
  %v4617 = vld [vmem:[%s4613 + $0xc] sm:$0xf]
  %v4618 = vld [vmem:[%s4613 + $0x10] sm:$0xf]
  %v4619 = vld [vmem:[%s4613 + $0x14] sm:$0xf]
  %v4620 = vld [vmem:[%s4613 + $0x18] sm:$0xf]
  %v4621 = vld [vmem:[%s4613 + $0x1c] sm:$0xf]
  %v4622 = vld [vmem:[%s4613 + $0x20] sm:$0xf]
  %v4623 = vld [vmem:[%s4613 + $0x24] sm:$0xf]
  %v4624 = vld [vmem:[%s4613 + $0x28] sm:$0xf]
  %v4625 = vld [vmem:[%s4613 + $0x2c] sm:$0xf]
  %v4626 = vld [vmem:[%s4613 + $0x30] sm:$0xf]
  %v4627 = vld [vmem:[%s4613 + $0x34] sm:$0xf]
  %v4628 = vld [vmem:[%s4613 + $0x38] sm:$0xf]
  %v4629 = vld [vmem:[%s4613 + $0x3c] sm:$0xf]
  %v4646 = vunpack.c.l.b16 %v4614
  %v4647 = vunpack.c.l.b16 %v4615
  %v4648 = vunpack.c.l.b16 %v4616
  %v4649 = vunpack.c.l.b16 %v4617
  %v4650 = vunpack.c.l.b16 %v4618
  %v4651 = vunpack.c.l.b16 %v4619
  %v4652 = vunpack.c.l.b16 %v4620
  %v4653 = vunpack.c.l.b16 %v4621
  %v4654 = vunpack.c.l.b16 %v4622
  %v4655 = vunpack.c.l.b16 %v4623
  %v4656 = vunpack.c.l.b16 %v4624
  %v4657 = vunpack.c.l.b16 %v4625
  %v4658 = vunpack.c.l.b16 %v4626
  %v4659 = vunpack.c.l.b16 %v4627
  %v4660 = vunpack.c.l.b16 %v4628
  %v4661 = vunpack.c.l.b16 %v4629
  %v4662 = vpack.c.b16 %v4647, %v4646
  %v4663 = vpack.c.b16 %v4649, %v4648
  %v4664 = vpack.c.b16 %v4651, %v4650
  %v4665 = vpack.c.b16 %v4653, %v4652
  %v4666 = vpack.c.b16 %v4655, %v4654
  %v4667 = vpack.c.b16 %v4657, %v4656
  %v4668 = vpack.c.b16 %v4659, %v4658
  %v4669 = vpack.c.b16 %v4661, %v4660
  %4678 = vmatprep.subr.bf16.mxu0 0
  %4679 = vmatpush1.bf16.msra.mxu0 %v4662
  %4680 = vmatprep.subr.bf16.mxu0 0
  %4681 = vmatpush1.bf16.msra.mxu0 %v4663
  %4682 = vmatprep.subr.bf16.mxu0 0
  %4683 = vmatpush1.bf16.msra.mxu0 %v4664
  %4684 = vmatprep.subr.bf16.mxu0 0
  %4685 = vmatpush1.bf16.msra.mxu0 %v4665
  %4686 = vmatprep.subr.bf16.mxu0 0
  %4687 = vmatpush1.bf16.msra.mxu0 %v4666
  %4688 = vmatprep.subr.bf16.mxu0 0
  %4689 = vmatpush1.bf16.msra.mxu0 %v4667
  %4690 = vmatprep.subr.bf16.mxu0 0
  %4691 = vmatpush1.bf16.msra.mxu0 %v4668
  %4692 = vmatprep.subr.bf16.mxu0 0
  %4693 = vmatpush1.bf16.msra.mxu0 %v4669
  %4694 = vmatprep.subr.bf16.mxu0 0
  %4695 = vmatpush1.bf16.msra.mxu0 0
  %4696 = vmatprep.subr.bf16.mxu0 0
  %4697 = vmatpush1.bf16.msra.mxu0 0
  %4698 = vmatprep.subr.bf16.mxu0 0
  %4699 = vmatpush1.bf16.msra.mxu0 0
  %4700 = vmatprep.subr.bf16.mxu0 0
  %4701 = vmatpush1.bf16.msra.mxu0 0
  %4702 = vmatprep.subr.bf16.mxu0 0
  %4703 = vmatpush1.bf16.msra.mxu0 0
  %4704 = vmatprep.subr.bf16.mxu0 0
  %4705 = vmatpush1.bf16.msra.mxu0 0
  %4706 = vmatprep.subr.bf16.mxu0 0
  %4707 = vmatpush1.bf16.msra.mxu0 0
  %4708 = vmatprep.subr.bf16.mxu0 0
  %4709 = vmatpush1.bf16.msra.mxu0 0
  %4710 = vmatprep.mubr.bf16.mxu0 0
  %4711 = vmatmul.mubr.bf16.gmra.mrb[0].mxu0 %v4611
  %v4712 = vpop.f32.mrb[0].mxu0
  %v4713 = vadd.f32 0.0, %v4712
  %v4714 = vpop.f32.mrb[0].mxu0
  %v4715 = vpop.f32.mrb[0].mxu0
  %v4716 = vadd.f32 0.0, %v4715
  %v4717 = vpop.f32.mrb[0].mxu0
  %4718 = vmatprep.mubr.bf16.mxu0 0
  %4719 = vmatmul.mubr.bf16.gmra.mrb[0].mxu0 %v4612
  %v4720 = vpop.f32.mrb[0].mxu0
  %v4721 = vadd.f32 0.0, %v4720
  %v4722 = vpop.f32.mrb[0].mxu0
  %v4723 = vpop.f32.mrb[0].mxu0
  %v4724 = vadd.f32 0.0, %v4723
  %v4725 = vpop.f32.mrb[0].mxu0
  %4726 = vdwg.mxu0
  %v4727 = vadd.f32 %v4597, %v4713
  %v4728 = vadd.f32 %v4600, %v4716
  %v4729 = vadd.f32 %v4605, %v4721
  %v4730 = vadd.f32 %v4608, %v4724
  %v4731 = vpack.c.bf16 %v4377, %v4376
  %v4732 = vpack.c.bf16 %v4379, %v4378
  %s4733 = scalar_lea.vmem %s5, 192
  %v4734 = vld [vmem:[%s4733] sm:$0xf]
  %v4735 = vld [vmem:[%s4733 + $0x4] sm:$0xf]
  %v4736 = vld [vmem:[%s4733 + $0x8] sm:$0xf]
  %v4737 = vld [vmem:[%s4733 + $0xc] sm:$0xf]
  %v4738 = vld [vmem:[%s4733 + $0x10] sm:$0xf]
  %v4739 = vld [vmem:[%s4733 + $0x14] sm:$0xf]
  %v4740 = vld [vmem:[%s4733 + $0x18] sm:$0xf]
  %v4741 = vld [vmem:[%s4733 + $0x1c] sm:$0xf]
  %v4742 = vld [vmem:[%s4733 + $0x20] sm:$0xf]
  %v4743 = vld [vmem:[%s4733 + $0x24] sm:$0xf]
  %v4744 = vld [vmem:[%s4733 + $0x28] sm:$0xf]
  %v4745 = vld [vmem:[%s4733 + $0x2c] sm:$0xf]
  %v4746 = vld [vmem:[%s4733 + $0x30] sm:$0xf]
  %v4747 = vld [vmem:[%s4733 + $0x34] sm:$0xf]
  %v4748 = vld [vmem:[%s4733 + $0x38] sm:$0xf]
  %v4749 = vld [vmem:[%s4733 + $0x3c] sm:$0xf]
  %v4766 = vunpack.c.l.b16 %v4734
  %v4767 = vunpack.c.l.b16 %v4735
  %v4768 = vunpack.c.l.b16 %v4736
  %v4769 = vunpack.c.l.b16 %v4737
  %v4770 = vunpack.c.l.b16 %v4738
  %v4771 = vunpack.c.l.b16 %v4739
  %v4772 = vunpack.c.l.b16 %v4740
  %v4773 = vunpack.c.l.b16 %v4741
  %v4774 = vunpack.c.l.b16 %v4742
  %v4775 = vunpack.c.l.b16 %v4743
  %v4776 = vunpack.c.l.b16 %v4744
  %v4777 = vunpack.c.l.b16 %v4745
  %v4778 = vunpack.c.l.b16 %v4746
  %v4779 = vunpack.c.l.b16 %v4747
  %v4780 = vunpack.c.l.b16 %v4748
  %v4781 = vunpack.c.l.b16 %v4749
  %v4782 = vpack.c.b16 %v4767, %v4766
  %v4783 = vpack.c.b16 %v4769, %v4768
  %v4784 = vpack.c.b16 %v4771, %v4770
  %v4785 = vpack.c.b16 %v4773, %v4772
  %v4786 = vpack.c.b16 %v4775, %v4774
  %v4787 = vpack.c.b16 %v4777, %v4776
  %v4788 = vpack.c.b16 %v4779, %v4778
  %v4789 = vpack.c.b16 %v4781, %v4780
  %4798 = vmatprep.subr.bf16.mxu0 0
  %4799 = vmatpush1.bf16.msra.mxu0 %v4782
  %4800 = vmatprep.subr.bf16.mxu0 0
  %4801 = vmatpush1.bf16.msra.mxu0 %v4783
  %4802 = vmatprep.subr.bf16.mxu0 0
  %4803 = vmatpush1.bf16.msra.mxu0 %v4784
  %4804 = vmatprep.subr.bf16.mxu0 0
  %4805 = vmatpush1.bf16.msra.mxu0 %v4785
  %4806 = vmatprep.subr.bf16.mxu0 0
  %4807 = vmatpush1.bf16.msra.mxu0 %v4786
  %4808 = vmatprep.subr.bf16.mxu0 0
  %4809 = vmatpush1.bf16.msra.mxu0 %v4787
  %4810 = vmatprep.subr.bf16.mxu0 0
  %4811 = vmatpush1.bf16.msra.mxu0 %v4788
  %4812 = vmatprep.subr.bf16.mxu0 0
  %4813 = vmatpush1.bf16.msra.mxu0 %v4789
  %4814 = vmatprep.subr.bf16.mxu0 0
  %4815 = vmatpush1.bf16.msra.mxu0 0
  %4816 = vmatprep.subr.bf16.mxu0 0
  %4817 = vmatpush1.bf16.msra.mxu0 0
  %4818 = vmatprep.subr.bf16.mxu0 0
  %4819 = vmatpush1.bf16.msra.mxu0 0
  %4820 = vmatprep.subr.bf16.mxu0 0
  %4821 = vmatpush1.bf16.msra.mxu0 0
  %4822 = vmatprep.subr.bf16.mxu0 0
  %4823 = vmatpush1.bf16.msra.mxu0 0
  %4824 = vmatprep.subr.bf16.mxu0 0
  %4825 = vmatpush1.bf16.msra.mxu0 0
  %4826 = vmatprep.subr.bf16.mxu0 0
  %4827 = vmatpush1.bf16.msra.mxu0 0
  %4828 = vmatprep.subr.bf16.mxu0 0
  %4829 = vmatpush1.bf16.msra.mxu0 0
  %4830 = vmatprep.mubr.bf16.mxu0 0
  %4831 = vmatmul.mubr.bf16.gmra.mrb[0].mxu0 %v4731
  %v4832 = vpop.f32.mrb[0].mxu0
  %v4833 = vadd.f32 0.0, %v4832
  %v4834 = vpop.f32.mrb[0].mxu0
  %v4835 = vpop.f32.mrb[0].mxu0
  %v4836 = vadd.f32 0.0, %v4835
  %v4837 = vpop.f32.mrb[0].mxu0
  %4838 = vmatprep.mubr.bf16.mxu0 0
  %4839 = vmatmul.mubr.bf16.gmra.mrb[0].mxu0 %v4732
  %v4840 = vpop.f32.mrb[0].mxu0
  %v4841 = vadd.f32 0.0, %v4840
  %v4842 = vpop.f32.mrb[0].mxu0
  %v4843 = vpop.f32.mrb[0].mxu0
  %v4844 = vadd.f32 0.0, %v4843
  %v4845 = vpop.f32.mrb[0].mxu0
  %4846 = vdwg.mxu0
  %v4847 = vadd.f32 %v4727, %v4833
  %v4848 = vadd.f32 %v4728, %v4836
  %v4849 = vadd.f32 %v4729, %v4841
  %v4850 = vadd.f32 %v4730, %v4844
  %v4851 = vld [vmem:[%s6] sm:$0x1]
  %v4853 = vlaneseq
  %v4854 = vshrl.u32 %v4853, 7
  %v4855 = vsub.s32 0, %v4854
  %v4856 = vrot.slane %v4851, %v4855
  %v4858 = vadd.f32 %v4847, %v4856
  %v4859 = vadd.f32 %v4848, %v4856
  %v4860 = vadd.f32 %v4849, %v4856
  %v4861 = vadd.f32 %v4850, %v4856
  %v4862 = vmax.f32 %v4858, 0.0
  %v4863 = vmax.f32 %v4859, 0.0
  %v4864 = vmax.f32 %v4860, 0.0
  %v4865 = vmax.f32 %v4861, 0.0
  %v4866 = vpack.c.bf16 %v4863, %v4862
  %v4867 = vpack.c.bf16 %v4865, %v4864
  %v4868 = vld [vmem:[%s7] sm:$0xf]
  %v4869 = vld [vmem:[%s7 + $0x4] sm:$0xf]
  %v4870 = vld [vmem:[%s7 + $0x8] sm:$0xf]
  %v4871 = vld [vmem:[%s7 + $0xc] sm:$0xf]
  %v4872 = vld [vmem:[%s7 + $0x10] sm:$0xf]
  %v4873 = vld [vmem:[%s7 + $0x14] sm:$0xf]
  %v4874 = vld [vmem:[%s7 + $0x18] sm:$0xf]
  %v4875 = vld [vmem:[%s7 + $0x1c] sm:$0xf]
  %v4876 = vld [vmem:[%s7 + $0x20] sm:$0xf]
  %v4877 = vld [vmem:[%s7 + $0x24] sm:$0xf]
  %v4878 = vld [vmem:[%s7 + $0x28] sm:$0xf]
  %v4879 = vld [vmem:[%s7 + $0x2c] sm:$0xf]
  %v4880 = vld [vmem:[%s7 + $0x30] sm:$0xf]
  %v4881 = vld [vmem:[%s7 + $0x34] sm:$0xf]
  %v4882 = vld [vmem:[%s7 + $0x38] sm:$0xf]
  %v4883 = vld [vmem:[%s7 + $0x3c] sm:$0xf]
  %v4884 = vld [vmem:[%s8] sm:$0x1]
  %v4886 = vlaneseq
  %v4887 = vshrl.u32 %v4886, 7
  %v4888 = vsub.s32 0, %v4887
  %v4889 = vrot.slane %v4884, %v4888
  %v4907 = vunpack.c.l.b16 %v4868
  %v4908 = vunpack.c.l.b16 %v4869
  %v4909 = vunpack.c.l.b16 %v4870
  %v4910 = vunpack.c.l.b16 %v4871
  %v4911 = vunpack.c.l.b16 %v4872
  %v4912 = vunpack.c.l.b16 %v4873
  %v4913 = vunpack.c.l.b16 %v4874
  %v4914 = vunpack.c.l.b16 %v4875
  %v4915 = vunpack.c.l.b16 %v4876
  %v4916 = vunpack.c.l.b16 %v4877
  %v4917 = vunpack.c.l.b16 %v4878
  %v4918 = vunpack.c.l.b16 %v4879
  %v4919 = vunpack.c.l.b16 %v4880
  %v4920 = vunpack.c.l.b16 %v4881
  %v4921 = vunpack.c.l.b16 %v4882
  %v4922 = vunpack.c.l.b16 %v4883
  %v4923 = vpack.c.b16 %v4908, %v4907
  %v4924 = vpack.c.b16 %v4910, %v4909
  %v4925 = vpack.c.b16 %v4912, %v4911
  %v4926 = vpack.c.b16 %v4914, %v4913
  %v4927 = vpack.c.b16 %v4916, %v4915
  %v4928 = vpack.c.b16 %v4918, %v4917
  %v4929 = vpack.c.b16 %v4920, %v4919
  %v4930 = vpack.c.b16 %v4922, %v4921
  %4939 = vmatprep.subr.bf16.mxu0 0
  %4940 = vmatpush1.bf16.msra.mxu0 %v4923
  %4941 = vmatprep.subr.bf16.mxu0 0
  %4942 = vmatpush1.bf16.msra.mxu0 %v4924
  %4943 = vmatprep.subr.bf16.mxu0 0
  %4944 = vmatpush1.bf16.msra.mxu0 %v4925
  %4945 = vmatprep.subr.bf16.mxu0 0
  %4946 = vmatpush1.bf16.msra.mxu0 %v4926
  %4947 = vmatprep.subr.bf16.mxu0 0
  %4948 = vmatpush1.bf16.msra.mxu0 %v4927
  %4949 = vmatprep.subr.bf16.mxu0 0
  %4950 = vmatpush1.bf16.msra.mxu0 %v4928
  %4951 = vmatprep.subr.bf16.mxu0 0
  %4952 = vmatpush1.bf16.msra.mxu0 %v4929
  %4953 = vmatprep.subr.bf16.mxu0 0
  %4954 = vmatpush1.bf16.msra.mxu0 %v4930
  %4955 = vmatprep.subr.bf16.mxu0 0
  %4956 = vmatpush1.bf16.msra.mxu0 0
  %4957 = vmatprep.subr.bf16.mxu0 0
  %4958 = vmatpush1.bf16.msra.mxu0 0
  %4959 = vmatprep.subr.bf16.mxu0 0
  %4960 = vmatpush1.bf16.msra.mxu0 0
  %4961 = vmatprep.subr.bf16.mxu0 0
  %4962 = vmatpush1.bf16.msra.mxu0 0
  %4963 = vmatprep.subr.bf16.mxu0 0
  %4964 = vmatpush1.bf16.msra.mxu0 0
  %4965 = vmatprep.subr.bf16.mxu0 0
  %4966 = vmatpush1.bf16.msra.mxu0 0
  %4967 = vmatprep.subr.bf16.mxu0 0
  %4968 = vmatpush1.bf16.msra.mxu0 0
  %4969 = vmatprep.subr.bf16.mxu0 0
  %4970 = vmatpush1.bf16.msra.mxu0 0
  %4971 = vmatprep.mubr.bf16.mxu0 0
  %4972 = vmatmul.mubr.bf16.gmra.mrb[0].mxu0 %v4866
  %v4973 = vpop.f32.mrb[0].mxu0
  %v4974 = vadd.f32 %v4889, %v4973
  %v4975 = vpop.f32.mrb[0].mxu0
  %v4976 = vpop.f32.mrb[0].mxu0
  %v4977 = vadd.f32 %v4889, %v4976
  %v4978 = vpop.f32.mrb[0].mxu0
  %4979 = vmatprep.mubr.bf16.mxu0 0
  %4980 = vmatmul.mubr.bf16.gmra.mrb[0].mxu0 %v4867
  %v4981 = vpop.f32.mrb[0].mxu0
  %v4982 = vadd.f32 %v4889, %v4981
  %v4983 = vpop.f32.mrb[0].mxu0
  %v4984 = vpop.f32.mrb[0].mxu0
  %v4985 = vadd.f32 %v4889, %v4984
  %v4986 = vpop.f32.mrb[0].mxu0
  %4987 = vdwg.mxu0
  %v4988 = vlaneseq
  %v4989 = vand.u32 %v4988, 127
  %vm4990 = vcmp.lt.s32.totalorder %v4989, 10
  %v4991 = vsel %vm4990, %v4974, -1e+30
  %v4992 = vsel %vm4990, %v4977, -1e+30
  %v4993 = vsel %vm4990, %v4982, -1e+30
  %v4994 = vsel %vm4990, %v4985, -1e+30
  %4995 = vmax.xlane.f32.xlu0 %v4991
  %v4996 = vpop.xlane.xlu0 %4995
  %4997 = vmax.xlane.f32.xlu0 %v4992
  %v4998 = vpop.xlane.xlu0 %4997
  %4999 = vmax.xlane.f32.xlu0 %v4993
  %v5000 = vpop.xlane.xlu0 %4999
  %5001 = vmax.xlane.f32.xlu0 %v4994
  %v5002 = vpop.xlane.xlu0 %5001
  %v5003 = vsub.f32 %v4991, %v4996
  %v5004 = vsub.f32 %v4992, %v4998
  %v5005 = vsub.f32 %v4993, %v5000
  %v5006 = vsub.f32 %v4994, %v5002
  %v5007 = vmul.f32 %v5003, 1.442695
  %v5008 = vpow.pop %v5007
  %v5009 = vmul.f32 %v5004, 1.442695
  %v5010 = vpow.pop %v5009
  %v5011 = vmul.f32 %v5005, 1.442695
  %v5012 = vpow.pop %v5011
  %v5013 = vmul.f32 %v5006, 1.442695
  %v5014 = vpow.pop %v5013
  %5015 = vadd.xlane.f32.xlu0 %v5008
  %v5016 = vpop.xlane.xlu0 %5015
  %5017 = vadd.xlane.f32.xlu0 %v5010
  %v5018 = vpop.xlane.xlu0 %5017
  %5019 = vadd.xlane.f32.xlu0 %v5012
  %v5020 = vpop.xlane.xlu0 %5019
  %5021 = vadd.xlane.f32.xlu0 %v5014
  %v5022 = vpop.xlane.xlu0 %5021
  %v5023 = vrcp.pop %v5016
  %v5024 = vmul.f32 %v5008, %v5023
  %v5025 = vrcp.pop %v5018
  %v5026 = vmul.f32 %v5010, %v5025
  %v5027 = vrcp.pop %v5020
  %v5028 = vmul.f32 %v5012, %v5027
  %v5029 = vrcp.pop %v5022
  %v5030 = vmul.f32 %v5014, %v5029
  %5031 = vst [vmem:[%s9] sm:$0xff] %v5024
  %5032 = vst [vmem:[%s9 + $0x8] sm:$0xff] %v5026
  %5033 = vst [vmem:[%s9 + $0x10] sm:$0xff] %v5028
  %5034 = vst [vmem:[%s9 + $0x18] sm:$0xff] %v5030
  // Predicated region
  $region38: #{net1_forward.1} parent=0 // pred_check
    _
  $region39: #{net1_forward.1} parent=0 // pred_check_branch
    %5036 = sbr.rel (0) target = $region41
  $region40: #{net1_forward.1} parent=0 // pred_region
    _
  $region41: #{net1_forward.1} parent=0 // pred_fallthru
    _
  // Predicated region
  $region42: #{net1_forward.1} parent=0 // pred_check
    _
  $region43: #{net1_forward.1} parent=0 // pred_check_branch
    %5038 = sbr.rel (0) target = $region45
  $region44: #{net1_forward.1} parent=0 // pred_region
    _
  $region45: #{net1_forward.1} parent=0 // pred_fallthru
    _

</llo_original>
